<compile_context>
chip_gen: v5e
topology: v5e:2x2
jax: 0.10.0
libtpu: 0.0.40
codegen_flags: <defaults>
</compile_context>

<pallas_src>
import functools

import jax
import jax.numpy as jnp
import numpy as np
from jax import lax
from jax.experimental import pallas as pl
from jax.experimental.pallas import tpu as pltpu


# ----------------------------------------------------------------------------
# Helpers
# ----------------------------------------------------------------------------
def _round_up(x, m):
    return ((x + m - 1) // m) * m


def _vmem_limit_bytes():
    """~75% of this generation's physical VMEM (v5e/v6e: 96 MiB, v7x: 48 MiB)."""
    try:
        info = pltpu.get_tpu_info()
        cap = int(getattr(info, "vmem_capacity_bytes", 0))
        if cap > 0:
            return (cap * 3) // 4
    except Exception:
        pass
    return 32 * 1024 * 1024


def _choose_row_tile(total_rows, target=2048):
    """Largest multiple of 8 that divides total_rows and is <= target."""
    t = min(total_rows, target)
    t -= t % 8
    while t >= 8:
        if total_rows % t == 0:
            return t
        t -= 8
    return 8


# ----------------------------------------------------------------------------
# Pallas kernels
# ----------------------------------------------------------------------------
def _fused_upconv_stats_kernel(x_ref, w_ref, mask_ref, o_ref, sum_ref, ssq_ref, *, w2):
    """One halo row-tile: fused nearest-x2 upsample + 3x3 conv via the 4-parity
    (subpixel) decomposition.  16 shifted bf16 tap matmuls with f32 accumulation,
    bf16 store per parity, plus masked per-tile BatchNorm partial sums."""
    L = o_ref.shape[1]                 # th * (W + 2) matmul rows per parity
    mask = mask_ref[...]               # (L, 1) f32 in {0,1}: junk cols / padded rows -> 0
    s_tot = None
    ss_tot = None
    for a in range(2):                 # output-row parity
        for b in range(2):             # output-col parity
            k = 2 * a + b
            acc = None
            for r in range(2):         # 2x2 receptive field on original resolution
                for c in range(2):
                    m = 2 * r + c
                    off = (a + r) * w2 + (b + c)          # static tap offset
                    lhs = x_ref[off:off + L, :]           # (L, cin) bf16
                    d = jnp.dot(lhs, w_ref[k, m],
                                preferred_element_type=jnp.float32)
                    acc = d if acc is None else acc + d
            ym = acc * mask                               # zero invalid positions
            o_ref[k] = ym.astype(o_ref.dtype)             # bf16 intermediate
            psum = jnp.sum(ym, axis=0, keepdims=True)
            psumsq = jnp.sum(ym * ym, axis=0, keepdims=True)
            s_tot = psum if s_tot is None else s_tot + psum
            ss_tot = psumsq if ss_tot is None else ss_tot + psumsq
    sum_ref[0] = s_tot
    ssq_ref[0] = ss_tot


def _bn_lrelu_kernel(y_ref, scale_ref, shift_ref, o_ref, *, neg_slope):
    """Elementwise: y * scale + shift (per-channel, precomputed) + LeakyReLU."""
    y = y_ref[...].astype(jnp.float32)
    out = y * scale_ref[...] + shift_ref[...]
    o_ref[...] = jnp.where(out >= 0, out, neg_slope * out).astype(o_ref.dtype)


# ----------------------------------------------------------------------------
# Wrapper
# ----------------------------------------------------------------------------
def up_conv_pallas(x_nchw, w_oihw, bias, gamma, beta,
                   *, eps=1e-5, neg_slope=0.2, row_target=512, apply_target=2048):
    """Forward of up_conv: nearest-upsample x2 -> 3x3 conv -> BatchNorm -> LeakyReLU."""
    # Bias added before training-mode BatchNorm is cancelled by mean subtraction.
    del bias

    N, cin, H, W = x_nchw.shape
    cout = w_oihw.shape[0]
    w2 = W + 2
    C_pad = _round_up(max(cout, 128), 128)        # lane-dense channel dim

    # Row-tile size (multiple of 8): ~row_target matmul rows per parity per grid step.
    th = max(8, min(_round_up(H, 8), _round_up(max(1, row_target // w2), 8)))
    Hp = _round_up(H, th)
    n_rt = Hp // th
    n_tiles = N * n_rt
    L = th * w2                                   # rows per parity per tile (2 junk cols/row)
    Lh = (th + 3) * w2                            # halo tile length (+2 halo rows + overhang)
    M_flat = n_tiles * L                          # == N * Hp * (W + 2)

    # ---- NCHW -> NHWC, zero-pad (1 top/left, bottom up to Hp+2), flatten rows, bf16.
    x = jnp.transpose(x_nchw, (0, 2, 3, 1)).astype(jnp.bfloat16)
    xp = jnp.pad(x, ((0, 0), (1, Hp - H + 2), (1, 1), (0, 0)))       # (N, Hp+3, W+2, cin)
    xf = xp.reshape(N, (Hp + 3) * w2, cin)
    # Overlapping halo row-tiles (cheap: duplicates the small input by ~(th+3)/th).
    x_tiles = jnp.stack(
        [lax.slice_in_dim(xf, rt * th * w2, rt * th * w2 + Lh, axis=1)
         for rt in range(n_rt)],
        axis=1).reshape(n_tiles, Lh, cin)

    # ---- Parity-combined 2x2 weights: (4 parities, 4 taps, cin, C_pad), bf16.
    # R[a, r, kh]: which 3x3 kernel rows fold onto row-tap r for output-row parity a.
    R = jnp.array([[[1., 0., 0.], [0., 1., 1.]],
                   [[1., 1., 0.], [0., 0., 1.]]], jnp.float32)
    wp = jnp.einsum('arh,bsw,oihw->abrsio', R, R, w_oihw.astype(jnp.float32))
    wp = wp.reshape(4, 4, cin, cout)
    wp = jnp.pad(wp, ((0, 0), (0, 0), (0, 0), (0, C_pad - cout))).astype(jnp.bfloat16)

    # ---- Validity mask over flat positions (right junk columns + padded bottom rows).
    valid = (jnp.arange(Hp)[:, None] < H) & (jnp.arange(w2)[None, :] < W)
    mask = jnp.broadcast_to(valid[None], (N, Hp, w2)).reshape(M_flat, 1).astype(jnp.float32)

    vmem_lim = _vmem_limit_bytes()

    # ---- Pass 1: fused upsample+conv + per-tile BN partial sums (parallel grid).
    conv_out, ch_sum, ch_ssq = pl.pallas_call(
        functools.partial(_fused_upconv_stats_kernel, w2=w2),
        out_shape=(
            jax.ShapeDtypeStruct((4, M_flat, C_pad), jnp.bfloat16),
            jax.ShapeDtypeStruct((n_tiles, 1, C_pad), jnp.float32),
            jax.ShapeDtypeStruct((n_tiles, 1, C_pad), jnp.float32),
        ),
        grid=(n_tiles,),
        in_specs=[
            pl.BlockSpec((None, Lh, cin), lambda t: (t, 0, 0)),
            pl.BlockSpec((4, 4, cin, C_pad), lambda t: (0, 0, 0, 0)),
            pl.BlockSpec((L, 1), lambda t: (t, 0)),
        ],
        out_specs=(
            pl.BlockSpec((4, L, C_pad), lambda t: (0, t, 0)),
            pl.BlockSpec((1, 1, C_pad), lambda t: (t, 0, 0)),
            pl.BlockSpec((1, 1, C_pad), lambda t: (t, 0, 0)),
        ),
        compiler_params=pltpu.CompilerParams(
            dimension_semantics=("parallel",), vmem_limit_bytes=vmem_lim),
    )(x_tiles, wp, mask)

    # ---- Per-channel BN scale/shift (training-mode batch stats, biased variance).
    count = jnp.float32(N * (2 * H) * (2 * W))
    ssum = jnp.sum(ch_sum, axis=(0, 1))
    sssq = jnp.sum(ch_ssq, axis=(0, 1))
    mean = ssum / count
    var = jnp.maximum(sssq / count - mean * mean, 0.0)
    inv = lax.rsqrt(var + eps)
    gamma_p = jnp.pad(gamma.astype(jnp.float32), (0, C_pad - cout))
    beta_p = jnp.pad(beta.astype(jnp.float32), (0, C_pad - cout))
    scale = (gamma_p * inv).reshape(1, C_pad)
    shift = (beta_p - mean * gamma_p * inv).reshape(1, C_pad)

    # ---- Pass 2: normalize + LeakyReLU, large row tiles, parallel grid.
    M2 = 4 * M_flat
    tile_m2 = _choose_row_tile(M2, apply_target)
    out2 = pl.pallas_call(
        functools.partial(_bn_lrelu_kernel, neg_slope=neg_slope),
        out_shape=jax.ShapeDtypeStruct((M2, C_pad), jnp.float32),
        grid=(M2 // tile_m2,),
        in_specs=[
            pl.BlockSpec((tile_m2, C_pad), lambda i: (i, 0)),
            pl.BlockSpec((1, C_pad), lambda i: (0, 0)),
            pl.BlockSpec((1, C_pad), lambda i: (0, 0)),
        ],
        out_specs=pl.BlockSpec((tile_m2, C_pad), lambda i: (i, 0)),
        compiler_params=pltpu.CompilerParams(
            dimension_semantics=("parallel",), vmem_limit_bytes=vmem_lim),
    )(conv_out.reshape(M2, C_pad), scale, shift)

    # ---- Re-interleave the 4 parities and relayout to NCHW (single XLA transpose).
    y = out2.reshape(2, 2, N, Hp, w2, C_pad)[:, :, :, :H, :W, :cout]
    y = jnp.transpose(y, (2, 5, 3, 0, 4, 1)).reshape(N, cout, 2 * H, 2 * W)
    return y


# ----------------------------------------------------------------------------
# Pure-JAX reference (for correctness check) — keeps the conv bias.
# ----------------------------------------------------------------------------
def up_conv_reference(x_nchw, w, b, gamma, beta, eps=1e-5, neg_slope=0.2):
    x = x_nchw.astype(jnp.float32)
    x = jnp.repeat(jnp.repeat(x, 2, axis=2), 2, axis=3)    # nearest upsample x2
    y = lax.conv_general_dilated(
        x, w, (1, 1), ((1, 1), (1, 1)),
        dimension_numbers=("NCHW", "OIHW", "NCHW"))
    y = y + b.reshape(1, -1, 1, 1)
    mean = jnp.mean(y, axis=(0, 2, 3), keepdims=True)
    var = jnp.mean((y - mean) ** 2, axis=(0, 2, 3), keepdims=True)
    y = (y - mean) * lax.rsqrt(var + eps)
    y = y * gamma.reshape(1, -1, 1, 1) + beta.reshape(1, -1, 1, 1)
    return jnp.where(y >= 0, y, neg_slope * y)


# ----------------------------------------------------------------------------
if __name__ == "__main__":
    # Small shapes consistent with the module: batch=2, ch_in=4, ch_out=8, 16x16.
    ch_in, ch_out = 4, 8
    N, H, W = 2, 16, 16

    key = jax.random.PRNGKey(0)
    kx, kw, kb, kg, kbt = jax.random.split(key, 5)
    x = jax.random.normal(kx, (N, ch_in, H, W), jnp.float32)            # NCHW
    w = 0.02 * jax.random.normal(kw, (ch_out, ch_in, 3, 3), jnp.float32)
    b = 0.01 * jax.random.normal(kb, (ch_out,), jnp.float32)
    gamma = 1.0 + 0.02 * jax.random.normal(kg, (ch_out,), jnp.float32)
    beta = 0.01 * jax.random.normal(kbt, (ch_out,), jnp.float32)

    out = jax.block_until_ready(up_conv_pallas(x, w, b, gamma, beta))
    ref = jax.block_until_ready(up_conv_reference(x, w, b, gamma, beta))

    assert out.shape == ref.shape == (N, ch_out, 2 * H, 2 * W), (out.shape, ref.shape)
    np.testing.assert_allclose(np.asarray(out), np.asarray(ref),
                               rtol=5e-2, atol=5e-2)
    print("KERNEL_OK")
</pallas_src>

<mosaic_0001>
module attributes {stable_mosaic.version = 11 : i64} {
  func.func @_fused_upconv_stats_kernel(%arg0: i32, %arg1: memref<1x342x4xbf16, #tpu.memory_space<vmem>>, %arg2: memref<4x4x4x128xbf16, #tpu.memory_space<vmem>>, %arg3: memref<288x1xf32, #tpu.memory_space<vmem>>, %arg4: memref<4x288x128xbf16, #tpu.memory_space<vmem>>, %arg5: memref<1x1x128xf32, #tpu.memory_space<vmem>>, %arg6: memref<1x1x128xf32, #tpu.memory_space<vmem>>) attributes {dimension_semantics = [#tpu.dimension_semantics<parallel>], iteration_bounds = array<i64: 2>, scalar_prefetch = 0 : i64, scratch_operands = 0 : i64, tpu.core_type = #tpu.core_type<tc>, window_params = [{transform_indices = @transform_0, window_bounds = array<i64: 1, 342, 4>}, {pipeline_mode = #tpu.pipeline_mode<synchronous>, transform_indices = @transform_1, window_bounds = array<i64: 4, 4, 4, 128>}, {transform_indices = @transform_2, window_bounds = array<i64: 288, 1>}, {transform_indices = @transform_3, window_bounds = array<i64: 4, 288, 128>}, {transform_indices = @transform_4, window_bounds = array<i64: 1, 1, 128>}, {transform_indices = @transform_5, window_bounds = array<i64: 1, 1, 128>}]} {
    %c0 = arith.constant 0 : index
    %c0_0 = arith.constant 0 : index
    %0 = vector.load %arg3[%c0, %c0_0] : memref<288x1xf32, #tpu.memory_space<vmem>>, vector<288x1xf32>
    %c0_1 = arith.constant 0 : index
    %c0_2 = arith.constant 0 : index
    %c0_3 = arith.constant 0 : index
    %1 = vector.load %arg1[%c0_1, %c0_2, %c0_3] : memref<1x342x4xbf16, #tpu.memory_space<vmem>>, vector<1x288x4xbf16>
    %2 = vector.shape_cast %1 : vector<1x288x4xbf16> to vector<288x4xbf16>
    %c0_4 = arith.constant 0 : index
    %c0_5 = arith.constant 0 : index
    %c0_6 = arith.constant 0 : index
    %c0_7 = arith.constant 0 : index
    %3 = vector.load %arg2[%c0_4, %c0_5, %c0_6, %c0_7] : memref<4x4x4x128xbf16, #tpu.memory_space<vmem>>, vector<1x1x4x128xbf16>
    %4 = vector.shape_cast %3 : vector<1x1x4x128xbf16> to vector<4x128xbf16>
    %cst = arith.constant dense<0.000000e+00> : vector<288x128xf32>
    %5 = tpu.matmul %2, %4, %cst {dimension_numbers = #tpu.dot_dimension_numbers<[1], [0], [0], [1], [0, 0, 1, 1], [], []>} : vector<288x4xbf16>, vector<4x128xbf16>, vector<288x128xf32> -> vector<288x128xf32>
    %c0_8 = arith.constant 0 : index
    %c1 = arith.constant 1 : index
    %c0_9 = arith.constant 0 : index
    %6 = vector.load %arg1[%c0_8, %c1, %c0_9] : memref<1x342x4xbf16, #tpu.memory_space<vmem>>, vector<1x288x4xbf16>
    %7 = vector.shape_cast %6 : vector<1x288x4xbf16> to vector<288x4xbf16>
    %c0_10 = arith.constant 0 : index
    %c1_11 = arith.constant 1 : index
    %c0_12 = arith.constant 0 : index
    %c0_13 = arith.constant 0 : index
    %8 = vector.load %arg2[%c0_10, %c1_11, %c0_12, %c0_13] : memref<4x4x4x128xbf16, #tpu.memory_space<vmem>>, vector<1x1x4x128xbf16>
    %9 = vector.shape_cast %8 : vector<1x1x4x128xbf16> to vector<4x128xbf16>
    %cst_14 = arith.constant dense<0.000000e+00> : vector<288x128xf32>
    %10 = tpu.matmul %7, %9, %cst_14 {dimension_numbers = #tpu.dot_dimension_numbers<[1], [0], [0], [1], [0, 0, 1, 1], [], []>} : vector<288x4xbf16>, vector<4x128xbf16>, vector<288x128xf32> -> vector<288x128xf32>
    %11 = arith.addf %5, %10 : vector<288x128xf32>
    %c0_15 = arith.constant 0 : index
    %c18 = arith.constant 18 : index
    %c0_16 = arith.constant 0 : index
    %12 = vector.load %arg1[%c0_15, %c18, %c0_16] : memref<1x342x4xbf16, #tpu.memory_space<vmem>>, vector<1x288x4xbf16>
    %13 = vector.shape_cast %12 : vector<1x288x4xbf16> to vector<288x4xbf16>
    %c0_17 = arith.constant 0 : index
    %c2 = arith.constant 2 : index
    %c0_18 = arith.constant 0 : index
    %c0_19 = arith.constant 0 : index
    %14 = vector.load %arg2[%c0_17, %c2, %c0_18, %c0_19] : memref<4x4x4x128xbf16, #tpu.memory_space<vmem>>, vector<1x1x4x128xbf16>
    %15 = vector.shape_cast %14 : vector<1x1x4x128xbf16> to vector<4x128xbf16>
    %cst_20 = arith.constant dense<0.000000e+00> : vector<288x128xf32>
    %16 = tpu.matmul %13, %15, %cst_20 {dimension_numbers = #tpu.dot_dimension_numbers<[1], [0], [0], [1], [0, 0, 1, 1], [], []>} : vector<288x4xbf16>, vector<4x128xbf16>, vector<288x128xf32> -> vector<288x128xf32>
    %17 = arith.addf %11, %16 : vector<288x128xf32>
    %c0_21 = arith.constant 0 : index
    %c19 = arith.constant 19 : index
    %c0_22 = arith.constant 0 : index
    %18 = vector.load %arg1[%c0_21, %c19, %c0_22] : memref<1x342x4xbf16, #tpu.memory_space<vmem>>, vector<1x288x4xbf16>
    %19 = vector.shape_cast %18 : vector<1x288x4xbf16> to vector<288x4xbf16>
    %c0_23 = arith.constant 0 : index
    %c3 = arith.constant 3 : index
    %c0_24 = arith.constant 0 : index
    %c0_25 = arith.constant 0 : index
    %20 = vector.load %arg2[%c0_23, %c3, %c0_24, %c0_25] : memref<4x4x4x128xbf16, #tpu.memory_space<vmem>>, vector<1x1x4x128xbf16>
    %21 = vector.shape_cast %20 : vector<1x1x4x128xbf16> to vector<4x128xbf16>
    %cst_26 = arith.constant dense<0.000000e+00> : vector<288x128xf32>
    %22 = tpu.matmul %19, %21, %cst_26 {dimension_numbers = #tpu.dot_dimension_numbers<[1], [0], [0], [1], [0, 0, 1, 1], [], []>} : vector<288x4xbf16>, vector<4x128xbf16>, vector<288x128xf32> -> vector<288x128xf32>
    %23 = arith.addf %17, %22 : vector<288x128xf32>
    %24 = vector.broadcast %0 : vector<288x1xf32> to vector<288x128xf32>
    %25 = arith.mulf %23, %24 : vector<288x128xf32>
    %26 = arith.truncf %25 : vector<288x128xf32> to vector<288x128xbf16>
    %c0_27 = arith.constant 0 : index
    %c0_28 = arith.constant 0 : index
    %c0_29 = arith.constant 0 : index
    %27 = vector.load %arg4[%c0_27, %c0_28, %c0_29] : memref<4x288x128xbf16, #tpu.memory_space<vmem>>, vector<1x288x128xbf16>
    %28 = vector.shape_cast %27 : vector<1x288x128xbf16> to vector<288x128xbf16>
    %29 = vector.shape_cast %26 : vector<288x128xbf16> to vector<1x288x128xbf16>
    tpu.vector_store %arg4[%c0_27, %c0_28, %c0_29], %29 {strides = array<i32>} : memref<4x288x128xbf16, #tpu.memory_space<vmem>>, vector<1x288x128xbf16>,
    %cst_30 = arith.constant dense<0.000000e+00> : vector<128xf32>
    %30 = vector.multi_reduction <add>, %25, %cst_30 [0] : vector<288x128xf32> to vector<128xf32>
    %31 = vector.shape_cast %30 : vector<128xf32> to vector<1x128xf32>
    %32 = arith.mulf %25, %25 : vector<288x128xf32>
    %cst_31 = arith.constant dense<0.000000e+00> : vector<128xf32>
    %33 = vector.multi_reduction <add>, %32, %cst_31 [0] : vector<288x128xf32> to vector<128xf32>
    %34 = vector.shape_cast %33 : vector<128xf32> to vector<1x128xf32>
    %c0_32 = arith.constant 0 : index
    %c1_33 = arith.constant 1 : index
    %c0_34 = arith.constant 0 : index
    %35 = vector.load %arg1[%c0_32, %c1_33, %c0_34] : memref<1x342x4xbf16, #tpu.memory_space<vmem>>, vector<1x288x4xbf16>
    %36 = vector.shape_cast %35 : vector<1x288x4xbf16> to vector<288x4xbf16>
    %c1_35 = arith.constant 1 : index
    %c0_36 = arith.constant 0 : index
    %c0_37 = arith.constant 0 : index
    %c0_38 = arith.constant 0 : index
    %37 = vector.load %arg2[%c1_35, %c0_36, %c0_37, %c0_38] : memref<4x4x4x128xbf16, #tpu.memory_space<vmem>>, vector<1x1x4x128xbf16>
    %38 = vector.shape_cast %37 : vector<1x1x4x128xbf16> to vector<4x128xbf16>
    %cst_39 = arith.constant dense<0.000000e+00> : vector<288x128xf32>
    %39 = tpu.matmul %36, %38, %cst_39 {dimension_numbers = #tpu.dot_dimension_numbers<[1], [0], [0], [1], [0, 0, 1, 1], [], []>} : vector<288x4xbf16>, vector<4x128xbf16>, vector<288x128xf32> -> vector<288x128xf32>
    %c0_40 = arith.constant 0 : index
    %c2_41 = arith.constant 2 : index
    %c0_42 = arith.constant 0 : index
    %40 = vector.load %arg1[%c0_40, %c2_41, %c0_42] : memref<1x342x4xbf16, #tpu.memory_space<vmem>>, vector<1x288x4xbf16>
    %41 = vector.shape_cast %40 : vector<1x288x4xbf16> to vector<288x4xbf16>
    %c1_43 = arith.constant 1 : index
    %c1_44 = arith.constant 1 : index
    %c0_45 = arith.constant 0 : index
    %c0_46 = arith.constant 0 : index
    %42 = vector.load %arg2[%c1_43, %c1_44, %c0_45, %c0_46] : memref<4x4x4x128xbf16, #tpu.memory_space<vmem>>, vector<1x1x4x128xbf16>
    %43 = vector.shape_cast %42 : vector<1x1x4x128xbf16> to vector<4x128xbf16>
    %cst_47 = arith.constant dense<0.000000e+00> : vector<288x128xf32>
    %44 = tpu.matmul %41, %43, %cst_47 {dimension_numbers = #tpu.dot_dimension_numbers<[1], [0], [0], [1], [0, 0, 1, 1], [], []>} : vector<288x4xbf16>, vector<4x128xbf16>, vector<288x128xf32> -> vector<288x128xf32>
    %45 = arith.addf %39, %44 : vector<288x128xf32>
    %c0_48 = arith.constant 0 : index
    %c19_49 = arith.constant 19 : index
    %c0_50 = arith.constant 0 : index
    %46 = vector.load %arg1[%c0_48, %c19_49, %c0_50] : memref<1x342x4xbf16, #tpu.memory_space<vmem>>, vector<1x288x4xbf16>
    %47 = vector.shape_cast %46 : vector<1x288x4xbf16> to vector<288x4xbf16>
    %c1_51 = arith.constant 1 : index
    %c2_52 = arith.constant 2 : index
    %c0_53 = arith.constant 0 : index
    %c0_54 = arith.constant 0 : index
    %48 = vector.load %arg2[%c1_51, %c2_52, %c0_53, %c0_54] : memref<4x4x4x128xbf16, #tpu.memory_space<vmem>>, vector<1x1x4x128xbf16>
    %49 = vector.shape_cast %48 : vector<1x1x4x128xbf16> to vector<4x128xbf16>
    %cst_55 = arith.constant dense<0.000000e+00> : vector<288x128xf32>
    %50 = tpu.matmul %47, %49, %cst_55 {dimension_numbers = #tpu.dot_dimension_numbers<[1], [0], [0], [1], [0, 0, 1, 1], [], []>} : vector<288x4xbf16>, vector<4x128xbf16>, vector<288x128xf32> -> vector<288x128xf32>
    %51 = arith.addf %45, %50 : vector<288x128xf32>
    %c0_56 = arith.constant 0 : index
    %c20 = arith.constant 20 : index
    %c0_57 = arith.constant 0 : index
    %52 = vector.load %arg1[%c0_56, %c20, %c0_57] : memref<1x342x4xbf16, #tpu.memory_space<vmem>>, vector<1x288x4xbf16>
    %53 = vector.shape_cast %52 : vector<1x288x4xbf16> to vector<288x4xbf16>
    %c1_58 = arith.constant 1 : index
    %c3_59 = arith.constant 3 : index
    %c0_60 = arith.constant 0 : index
    %c0_61 = arith.constant 0 : index
    %54 = vector.load %arg2[%c1_58, %c3_59, %c0_60, %c0_61] : memref<4x4x4x128xbf16, #tpu.memory_space<vmem>>, vector<1x1x4x128xbf16>
    %55 = vector.shape_cast %54 : vector<1x1x4x128xbf16> to vector<4x128xbf16>
    %cst_62 = arith.constant dense<0.000000e+00> : vector<288x128xf32>
    %56 = tpu.matmul %53, %55, %cst_62 {dimension_numbers = #tpu.dot_dimension_numbers<[1], [0], [0], [1], [0, 0, 1, 1], [], []>} : vector<288x4xbf16>, vector<4x128xbf16>, vector<288x128xf32> -> vector<288x128xf32>
    %57 = arith.addf %51, %56 : vector<288x128xf32>
    %58 = vector.broadcast %0 : vector<288x1xf32> to vector<288x128xf32>
    %59 = arith.mulf %57, %58 : vector<288x128xf32>
    %60 = arith.truncf %59 : vector<288x128xf32> to vector<288x128xbf16>
    %c1_63 = arith.constant 1 : index
    %c0_64 = arith.constant 0 : index
    %c0_65 = arith.constant 0 : index
    %61 = vector.load %arg4[%c1_63, %c0_64, %c0_65] : memref<4x288x128xbf16, #tpu.memory_space<vmem>>, vector<1x288x128xbf16>
    %62 = vector.shape_cast %61 : vector<1x288x128xbf16> to vector<288x128xbf16>
    %63 = vector.shape_cast %60 : vector<288x128xbf16> to vector<1x288x128xbf16>
    tpu.vector_store %arg4[%c1_63, %c0_64, %c0_65], %63 {strides = array<i32>} : memref<4x288x128xbf16, #tpu.memory_space<vmem>>, vector<1x288x128xbf16>,
    %cst_66 = arith.constant dense<0.000000e+00> : vector<128xf32>
    %64 = vector.multi_reduction <add>, %59, %cst_66 [0] : vector<288x128xf32> to vector<128xf32>
    %65 = vector.shape_cast %64 : vector<128xf32> to vector<1x128xf32>
    %66 = arith.mulf %59, %59 : vector<288x128xf32>
    %cst_67 = arith.constant dense<0.000000e+00> : vector<128xf32>
    %67 = vector.multi_reduction <add>, %66, %cst_67 [0] : vector<288x128xf32> to vector<128xf32>
    %68 = vector.shape_cast %67 : vector<128xf32> to vector<1x128xf32>
    %69 = arith.addf %31, %65 : vector<1x128xf32>
    %70 = arith.addf %34, %68 : vector<1x128xf32>
    %c0_68 = arith.constant 0 : index
    %c18_69 = arith.constant 18 : index
    %c0_70 = arith.constant 0 : index
    %71 = vector.load %arg1[%c0_68, %c18_69, %c0_70] : memref<1x342x4xbf16, #tpu.memory_space<vmem>>, vector<1x288x4xbf16>
    %72 = vector.shape_cast %71 : vector<1x288x4xbf16> to vector<288x4xbf16>
    %c2_71 = arith.constant 2 : index
    %c0_72 = arith.constant 0 : index
    %c0_73 = arith.constant 0 : index
    %c0_74 = arith.constant 0 : index
    %73 = vector.load %arg2[%c2_71, %c0_72, %c0_73, %c0_74] : memref<4x4x4x128xbf16, #tpu.memory_space<vmem>>, vector<1x1x4x128xbf16>
    %74 = vector.shape_cast %73 : vector<1x1x4x128xbf16> to vector<4x128xbf16>
    %cst_75 = arith.constant dense<0.000000e+00> : vector<288x128xf32>
    %75 = tpu.matmul %72, %74, %cst_75 {dimension_numbers = #tpu.dot_dimension_numbers<[1], [0], [0], [1], [0, 0, 1, 1], [], []>} : vector<288x4xbf16>, vector<4x128xbf16>, vector<288x128xf32> -> vector<288x128xf32>
    %c0_76 = arith.constant 0 : index
    %c19_77 = arith.constant 19 : index
    %c0_78 = arith.constant 0 : index
    %76 = vector.load %arg1[%c0_76, %c19_77, %c0_78] : memref<1x342x4xbf16, #tpu.memory_space<vmem>>, vector<1x288x4xbf16>
    %77 = vector.shape_cast %76 : vector<1x288x4xbf16> to vector<288x4xbf16>
    %c2_79 = arith.constant 2 : index
    %c1_80 = arith.constant 1 : index
    %c0_81 = arith.constant 0 : index
    %c0_82 = arith.constant 0 : index
    %78 = vector.load %arg2[%c2_79, %c1_80, %c0_81, %c0_82] : memref<4x4x4x128xbf16, #tpu.memory_space<vmem>>, vector<1x1x4x128xbf16>
    %79 = vector.shape_cast %78 : vector<1x1x4x128xbf16> to vector<4x128xbf16>
    %cst_83 = arith.constant dense<0.000000e+00> : vector<288x128xf32>
    %80 = tpu.matmul %77, %79, %cst_83 {dimension_numbers = #tpu.dot_dimension_numbers<[1], [0], [0], [1], [0, 0, 1, 1], [], []>} : vector<288x4xbf16>, vector<4x128xbf16>, vector<288x128xf32> -> vector<288x128xf32>
    %81 = arith.addf %75, %80 : vector<288x128xf32>
    %c0_84 = arith.constant 0 : index
    %c36 = arith.constant 36 : index
    %c0_85 = arith.constant 0 : index
    %82 = vector.load %arg1[%c0_84, %c36, %c0_85] : memref<1x342x4xbf16, #tpu.memory_space<vmem>>, vector<1x288x4xbf16>
    %83 = vector.shape_cast %82 : vector<1x288x4xbf16> to vector<288x4xbf16>
    %c2_86 = arith.constant 2 : index
    %c2_87 = arith.constant 2 : index
    %c0_88 = arith.constant 0 : index
    %c0_89 = arith.constant 0 : index
    %84 = vector.load %arg2[%c2_86, %c2_87, %c0_88, %c0_89] : memref<4x4x4x128xbf16, #tpu.memory_space<vmem>>, vector<1x1x4x128xbf16>
    %85 = vector.shape_cast %84 : vector<1x1x4x128xbf16> to vector<4x128xbf16>
    %cst_90 = arith.constant dense<0.000000e+00> : vector<288x128xf32>
    %86 = tpu.matmul %83, %85, %cst_90 {dimension_numbers = #tpu.dot_dimension_numbers<[1], [0], [0], [1], [0, 0, 1, 1], [], []>} : vector<288x4xbf16>, vector<4x128xbf16>, vector<288x128xf32> -> vector<288x128xf32>
    %87 = arith.addf %81, %86 : vector<288x128xf32>
    %c0_91 = arith.constant 0 : index
    %c37 = arith.constant 37 : index
    %c0_92 = arith.constant 0 : index
    %88 = vector.load %arg1[%c0_91, %c37, %c0_92] : memref<1x342x4xbf16, #tpu.memory_space<vmem>>, vector<1x288x4xbf16>
    %89 = vector.shape_cast %88 : vector<1x288x4xbf16> to vector<288x4xbf16>
    %c2_93 = arith.constant 2 : index
    %c3_94 = arith.constant 3 : index
    %c0_95 = arith.constant 0 : index
    %c0_96 = arith.constant 0 : index
    %90 = vector.load %arg2[%c2_93, %c3_94, %c0_95, %c0_96] : memref<4x4x4x128xbf16, #tpu.memory_space<vmem>>, vector<1x1x4x128xbf16>
    %91 = vector.shape_cast %90 : vector<1x1x4x128xbf16> to vector<4x128xbf16>
    %cst_97 = arith.constant dense<0.000000e+00> : vector<288x128xf32>
    %92 = tpu.matmul %89, %91, %cst_97 {dimension_numbers = #tpu.dot_dimension_numbers<[1], [0], [0], [1], [0, 0, 1, 1], [], []>} : vector<288x4xbf16>, vector<4x128xbf16>, vector<288x128xf32> -> vector<288x128xf32>
    %93 = arith.addf %87, %92 : vector<288x128xf32>
    %94 = vector.broadcast %0 : vector<288x1xf32> to vector<288x128xf32>
    %95 = arith.mulf %93, %94 : vector<288x128xf32>
    %96 = arith.truncf %95 : vector<288x128xf32> to vector<288x128xbf16>
    %c2_98 = arith.constant 2 : index
    %c0_99 = arith.constant 0 : index
    %c0_100 = arith.constant 0 : index
    %97 = vector.load %arg4[%c2_98, %c0_99, %c0_100] : memref<4x288x128xbf16, #tpu.memory_space<vmem>>, vector<1x288x128xbf16>
    %98 = vector.shape_cast %97 : vector<1x288x128xbf16> to vector<288x128xbf16>
    %99 = vector.shape_cast %96 : vector<288x128xbf16> to vector<1x288x128xbf16>
    tpu.vector_store %arg4[%c2_98, %c0_99, %c0_100], %99 {strides = array<i32>} : memref<4x288x128xbf16, #tpu.memory_space<vmem>>, vector<1x288x128xbf16>,
    %cst_101 = arith.constant dense<0.000000e+00> : vector<128xf32>
    %100 = vector.multi_reduction <add>, %95, %cst_101 [0] : vector<288x128xf32> to vector<128xf32>
    %101 = vector.shape_cast %100 : vector<128xf32> to vector<1x128xf32>
    %102 = arith.mulf %95, %95 : vector<288x128xf32>
    %cst_102 = arith.constant dense<0.000000e+00> : vector<128xf32>
    %103 = vector.multi_reduction <add>, %102, %cst_102 [0] : vector<288x128xf32> to vector<128xf32>
    %104 = vector.shape_cast %103 : vector<128xf32> to vector<1x128xf32>
    %105 = arith.addf %69, %101 : vector<1x128xf32>
    %106 = arith.addf %70, %104 : vector<1x128xf32>
    %c0_103 = arith.constant 0 : index
    %c19_104 = arith.constant 19 : index
    %c0_105 = arith.constant 0 : index
    %107 = vector.load %arg1[%c0_103, %c19_104, %c0_105] : memref<1x342x4xbf16, #tpu.memory_space<vmem>>, vector<1x288x4xbf16>
    %108 = vector.shape_cast %107 : vector<1x288x4xbf16> to vector<288x4xbf16>
    %c3_106 = arith.constant 3 : index
    %c0_107 = arith.constant 0 : index
    %c0_108 = arith.constant 0 : index
    %c0_109 = arith.constant 0 : index
    %109 = vector.load %arg2[%c3_106, %c0_107, %c0_108, %c0_109] : memref<4x4x4x128xbf16, #tpu.memory_space<vmem>>, vector<1x1x4x128xbf16>
    %110 = vector.shape_cast %109 : vector<1x1x4x128xbf16> to vector<4x128xbf16>
    %cst_110 = arith.constant dense<0.000000e+00> : vector<288x128xf32>
    %111 = tpu.matmul %108, %110, %cst_110 {dimension_numbers = #tpu.dot_dimension_numbers<[1], [0], [0], [1], [0, 0, 1, 1], [], []>} : vector<288x4xbf16>, vector<4x128xbf16>, vector<288x128xf32> -> vector<288x128xf32>
    %c0_111 = arith.constant 0 : index
    %c20_112 = arith.constant 20 : index
    %c0_113 = arith.constant 0 : index
    %112 = vector.load %arg1[%c0_111, %c20_112, %c0_113] : memref<1x342x4xbf16, #tpu.memory_space<vmem>>, vector<1x288x4xbf16>
    %113 = vector.shape_cast %112 : vector<1x288x4xbf16> to vector<288x4xbf16>
    %c3_114 = arith.constant 3 : index
    %c1_115 = arith.constant 1 : index
    %c0_116 = arith.constant 0 : index
    %c0_117 = arith.constant 0 : index
    %114 = vector.load %arg2[%c3_114, %c1_115, %c0_116, %c0_117] : memref<4x4x4x128xbf16, #tpu.memory_space<vmem>>, vector<1x1x4x128xbf16>
    %115 = vector.shape_cast %114 : vector<1x1x4x128xbf16> to vector<4x128xbf16>
    %cst_118 = arith.constant dense<0.000000e+00> : vector<288x128xf32>
    %116 = tpu.matmul %113, %115, %cst_118 {dimension_numbers = #tpu.dot_dimension_numbers<[1], [0], [0], [1], [0, 0, 1, 1], [], []>} : vector<288x4xbf16>, vector<4x128xbf16>, vector<288x128xf32> -> vector<288x128xf32>
    %117 = arith.addf %111, %116 : vector<288x128xf32>
    %c0_119 = arith.constant 0 : index
    %c37_120 = arith.constant 37 : index
    %c0_121 = arith.constant 0 : index
    %118 = vector.load %arg1[%c0_119, %c37_120, %c0_121] : memref<1x342x4xbf16, #tpu.memory_space<vmem>>, vector<1x288x4xbf16>
    %119 = vector.shape_cast %118 : vector<1x288x4xbf16> to vector<288x4xbf16>
    %c3_122 = arith.constant 3 : index
    %c2_123 = arith.constant 2 : index
    %c0_124 = arith.constant 0 : index
    %c0_125 = arith.constant 0 : index
    %120 = vector.load %arg2[%c3_122, %c2_123, %c0_124, %c0_125] : memref<4x4x4x128xbf16, #tpu.memory_space<vmem>>, vector<1x1x4x128xbf16>
    %121 = vector.shape_cast %120 : vector<1x1x4x128xbf16> to vector<4x128xbf16>
    %cst_126 = arith.constant dense<0.000000e+00> : vector<288x128xf32>
    %122 = tpu.matmul %119, %121, %cst_126 {dimension_numbers = #tpu.dot_dimension_numbers<[1], [0], [0], [1], [0, 0, 1, 1], [], []>} : vector<288x4xbf16>, vector<4x128xbf16>, vector<288x128xf32> -> vector<288x128xf32>
    %123 = arith.addf %117, %122 : vector<288x128xf32>
    %c0_127 = arith.constant 0 : index
    %c38 = arith.constant 38 : index
    %c0_128 = arith.constant 0 : index
    %124 = vector.load %arg1[%c0_127, %c38, %c0_128] : memref<1x342x4xbf16, #tpu.memory_space<vmem>>, vector<1x288x4xbf16>
    %125 = vector.shape_cast %124 : vector<1x288x4xbf16> to vector<288x4xbf16>
    %c3_129 = arith.constant 3 : index
    %c3_130 = arith.constant 3 : index
    %c0_131 = arith.constant 0 : index
    %c0_132 = arith.constant 0 : index
    %126 = vector.load %arg2[%c3_129, %c3_130, %c0_131, %c0_132] : memref<4x4x4x128xbf16, #tpu.memory_space<vmem>>, vector<1x1x4x128xbf16>
    %127 = vector.shape_cast %126 : vector<1x1x4x128xbf16> to vector<4x128xbf16>
    %cst_133 = arith.constant dense<0.000000e+00> : vector<288x128xf32>
    %128 = tpu.matmul %125, %127, %cst_133 {dimension_numbers = #tpu.dot_dimension_numbers<[1], [0], [0], [1], [0, 0, 1, 1], [], []>} : vector<288x4xbf16>, vector<4x128xbf16>, vector<288x128xf32> -> vector<288x128xf32>
    %129 = arith.addf %123, %128 : vector<288x128xf32>
    %130 = vector.broadcast %0 : vector<288x1xf32> to vector<288x128xf32>
    %131 = arith.mulf %129, %130 : vector<288x128xf32>
    %132 = arith.truncf %131 : vector<288x128xf32> to vector<288x128xbf16>
    %c3_134 = arith.constant 3 : index
    %c0_135 = arith.constant 0 : index
    %c0_136 = arith.constant 0 : index
    %133 = vector.load %arg4[%c3_134, %c0_135, %c0_136] : memref<4x288x128xbf16, #tpu.memory_space<vmem>>, vector<1x288x128xbf16>
    %134 = vector.shape_cast %133 : vector<1x288x128xbf16> to vector<288x128xbf16>
    %135 = vector.shape_cast %132 : vector<288x128xbf16> to vector<1x288x128xbf16>
    tpu.vector_store %arg4[%c3_134, %c0_135, %c0_136], %135 {strides = array<i32>} : memref<4x288x128xbf16, #tpu.memory_space<vmem>>, vector<1x288x128xbf16>,
    %cst_137 = arith.constant dense<0.000000e+00> : vector<128xf32>
    %136 = vector.multi_reduction <add>, %131, %cst_137 [0] : vector<288x128xf32> to vector<128xf32>
    %137 = vector.shape_cast %136 : vector<128xf32> to vector<1x128xf32>
    %138 = arith.mulf %131, %131 : vector<288x128xf32>
    %cst_138 = arith.constant dense<0.000000e+00> : vector<128xf32>
    %139 = vector.multi_reduction <add>, %138, %cst_138 [0] : vector<288x128xf32> to vector<128xf32>
    %140 = vector.shape_cast %139 : vector<128xf32> to vector<1x128xf32>
    %141 = arith.addf %105, %137 : vector<1x128xf32>
    %142 = arith.addf %106, %140 : vector<1x128xf32>
    %c0_139 = arith.constant 0 : index
    %c0_140 = arith.constant 0 : index
    %c0_141 = arith.constant 0 : index
    %143 = vector.load %arg5[%c0_139, %c0_140, %c0_141] : memref<1x1x128xf32, #tpu.memory_space<vmem>>, vector<1x1x128xf32>
    %144 = vector.shape_cast %143 : vector<1x1x128xf32> to vector<1x128xf32>
    %145 = vector.shape_cast %141 : vector<1x128xf32> to vector<1x1x128xf32>
    tpu.vector_store %arg5[%c0_139, %c0_140, %c0_141], %145 {strides = array<i32>} : memref<1x1x128xf32, #tpu.memory_space<vmem>>, vector<1x1x128xf32>,
    %c0_142 = arith.constant 0 : index
    %c0_143 = arith.constant 0 : index
    %c0_144 = arith.constant 0 : index
    %146 = vector.load %arg6[%c0_142, %c0_143, %c0_144] : memref<1x1x128xf32, #tpu.memory_space<vmem>>, vector<1x1x128xf32>
    %147 = vector.shape_cast %146 : vector<1x1x128xf32> to vector<1x128xf32>
    %148 = vector.shape_cast %142 : vector<1x128xf32> to vector<1x1x128xf32>
    tpu.vector_store %arg6[%c0_142, %c0_143, %c0_144], %148 {strides = array<i32>} : memref<1x1x128xf32, #tpu.memory_space<vmem>>, vector<1x1x128xf32>,
    return
  }
  func.func @transform_0(%arg0: i32) -> (i32, i32, i32) {
    %c0_i32 = arith.constant 0 : i32
    %c0_i32_0 = arith.constant 0 : i32
    %c0_i32_1 = arith.constant 0 : i32
    return %arg0, %c0_i32, %c0_i32_0 : i32, i32, i32
  }
  func.func @transform_1(%arg0: i32) -> (i32, i32, i32, i32) {
    %c0_i32 = arith.constant 0 : i32
    %c0_i32_0 = arith.constant 0 : i32
    %c0_i32_1 = arith.constant 0 : i32
    %c0_i32_2 = arith.constant 0 : i32
    %c0_i32_3 = arith.constant 0 : i32
    return %c0_i32, %c0_i32_0, %c0_i32_1, %c0_i32_2 : i32, i32, i32, i32
  }
  func.func @transform_2(%arg0: i32) -> (i32, i32) {
    %c0_i32 = arith.constant 0 : i32
    %c0_i32_0 = arith.constant 0 : i32
    return %arg0, %c0_i32 : i32, i32
  }
  func.func @transform_3(%arg0: i32) -> (i32, i32, i32) {
    %c0_i32 = arith.constant 0 : i32
    %c0_i32_0 = arith.constant 0 : i32
    %c0_i32_1 = arith.constant 0 : i32
    return %c0_i32, %arg0, %c0_i32_0 : i32, i32, i32
  }
  func.func @transform_4(%arg0: i32) -> (i32, i32, i32) {
    %c0_i32 = arith.constant 0 : i32
    %c0_i32_0 = arith.constant 0 : i32
    %c0_i32_1 = arith.constant 0 : i32
    return %arg0, %c0_i32, %c0_i32_0 : i32, i32, i32
  }
  func.func @transform_5(%arg0: i32) -> (i32, i32, i32) {
    %c0_i32 = arith.constant 0 : i32
    %c0_i32_0 = arith.constant 0 : i32
    %c0_i32_1 = arith.constant 0 : i32
    return %arg0, %c0_i32, %c0_i32_0 : i32, i32, i32
  }
}

</mosaic_0001>

<llo_original>
// kernel: tpu_custom_call.1
$region0: #{tpu_custom_call.1}
  #allocation0 [shape = 'u32[]', space=smem, size = 0x4, offset = 0x4, fixed_abs, tag = 'smem constant byte address 0x4 - core index']
  #allocation1 [shape = 'u32[72,128]{1,0:T(1,128)}', space=vmem, size = 0x9000, scoped, tag = 'internal scratch']
  #allocation7 [shape = 's32[]', space=sflag, size = 0x4, offset = 0, fixed_abs, tag = 'sflag constant byte address 0x0 - dummy sync flag']
  %s0 = inlined_call_operand.vmem [shape: bf16[2,342,4], index: 0, kind: input, shape index: {}]
  %s1 = inlined_call_operand.vmem [shape: bf16[4,4,4,128], index: 1, kind: input, shape index: {}]
  %s2 = inlined_call_operand.vmem [shape: f32[576,1], index: 2, kind: input, shape index: {}]
  %s3 = inlined_call_operand.hbm [shape: bf16[4,576,128], index: 3, kind: output, shape index: {0}]
  %s4 = inlined_call_operand.hbm [shape: f32[2,1,128], index: 4, kind: output, shape index: {1}]
  %s5 = inlined_call_operand.hbm [shape: f32[2,1,128], index: 5, kind: output, shape index: {2}]
  %6 = xla_tuple %s3, %s4, %s5
  %s7 = sld [smem:[#allocation0]]
  $region61: #{tpu_custom_call.1} parent=0
    _
  %s9 = ssub.s32 1, %s7
  %s10 = scalar_select 0, %s9, %s7
  $region1: #{tpu_custom_call.1} parent=0
    #allocation2 [shape = 'u8[589824]{0}', space=vmem, size = 0x90000, scoped, tag = 'output window, operand 0']
    #allocation3 [shape = 's32[2]{0}', space=sflag, size = 0x8, scoped, tag = 'scoped memory for tpu_custom_call.1']
    #allocation4 [shape = 'u8[1024]{0}', space=vmem, size = 0x400, scoped, tag = 'output window, operand 1']
    #allocation5 [shape = 's32[2]{0}', space=sflag, size = 0x8, scoped, tag = 'scoped memory for tpu_custom_call.1']
    #allocation6 [shape = 'u8[1024]{0}', space=vmem, size = 0x400, scoped, tag = 'output window, operand 2']
    %11 = vsyncpa [#allocation3], 0
    %s12 = scalar_lea.sflag [#allocation3], 1
    %13 = vsyncpa %s12, 0
    %14 = vsyncpa [#allocation5], 0
    %s15 = scalar_lea.sflag [#allocation5], 1
    %16 = vsyncpa %s15, 0
    loop: start=0, step=1, limit=4
    $region2: #{tpu_custom_call.1} parent=1 // loop_pre_header
      _
    $region3: #{tpu_custom_call.1} parent=1 // loop_header
      %s18 = sphi 0, %s22
      %p19 = scmp.ge.s32.totalorder %s18, 4
      %s28 = sphi 0, %s30
      %s31 = sphi 0, %s28
      %s32 = sphi 0, %s31
      %s48 = sphi 0, %s32
      %s52 = sphi 0, %s52
      %s54 = sphi 0, %s52
      %s55 = sphi 0, %s54
      %s69 = sphi 0, %s55
      %s75 = sphi 0, %s77
      %s78 = sphi 0, %s75
      %s79 = sphi 0, %s78
      %s95 = sphi 0, %s79
      %s101 = sphi 0, %s103
      %s104 = sphi 0, %s101
      %s105 = sphi 0, %s104
      %s121 = sphi 0, %s105
      %s127 = sphi 0, %s129
      %s130 = sphi 0, %s127
      %s131 = sphi 0, %s130
      %s147 = sphi 0, %s131
      %s153 = sphi 0, %s155
      %s156 = sphi 0, %s153
      %s157 = sphi 0, %s156
      %s173 = sphi 0, %s157
    $region4: #{tpu_custom_call.1} parent=1 // loop_header_branch
      %21 = sbr.rel (%p19) target = $region8
    $region5: #{tpu_custom_call.1} parent=1 // loop_body
      %s23 = ssub.s32 %s18, 1
      %s24 = ssub.s32 %s18, 2
      %s25 = sadd.s32 %s18, 1
      %s26 = ssub.s32 %s18, %s25
      %p27 = scmp.eq.s32.totalorder %s26, 0
      %s29 = sadd.s32 %s28, 1
      %s30 = scalar_select %p27, %s28, %s29
      %p33 = pneg %p27
      %p34 = scmp.eq.s32.totalorder %s18, 1
      %p35 = por %p33, %p34
      %p36 = scmp.ne.s32.totalorder %s28, %s31
      %p37 = scmp.eq.s32.totalorder %s18, 0
      %p38 = por %p36, %p37
      %p39 = scmp.ne.s32.totalorder %s28, %s31
      %p40 = scmp.eq.s32.totalorder %s23, 1
      %p41 = por %p39, %p40
      %p42 = scmp.ne.s32.totalorder %s31, %s32
      %p43 = scmp.eq.s32.totalorder %s23, 0
      %p44 = por %p42, %p43
      %p45 = scmp.ne.s32.totalorder %s31, %s32
      %p46 = scmp.eq.s32.totalorder %s24, 1
      %p47 = por %p45, %p46
      %p49 = scmp.ne.s32.totalorder %s32, %s48
      %p50 = scmp.eq.s32.totalorder %s24, 0
      %p51 = por %p49, %p50
      %s53 = sadd.s32 %s52, 1
      %p56 = scmp.eq.s32.totalorder %s18, 1
      %p57 = scmp.ne.s32.totalorder %s52, %s54
      %p58 = scmp.eq.s32.totalorder %s18, 0
      %p59 = por %p57, %p58
      %p60 = scmp.ne.s32.totalorder %s52, %s54
      %p61 = scmp.eq.s32.totalorder %s23, 1
      %p62 = por %p60, %p61
      %p63 = scmp.ne.s32.totalorder %s54, %s55
      %p64 = scmp.eq.s32.totalorder %s23, 0
      %p65 = por %p63, %p64
      %p66 = scmp.ne.s32.totalorder %s54, %s55
      %p67 = scmp.eq.s32.totalorder %s24, 1
      %p68 = por %p66, %p67
      %p70 = scmp.ne.s32.totalorder %s55, %s69
      %p71 = scmp.eq.s32.totalorder %s24, 0
      %p72 = por %p70, %p71
      %s73 = ssub.s32 %s18, %s25
      %p74 = scmp.eq.s32.totalorder %s73, 0
      %s76 = sadd.s32 %s75, 1
      %s77 = scalar_select %p74, %s75, %s76
      %p80 = pneg %p74
      %p81 = scmp.eq.s32.totalorder %s18, 1
      %p82 = por %p80, %p81
      %p83 = scmp.ne.s32.totalorder %s75, %s78
      %p84 = scmp.eq.s32.totalorder %s18, 0
      %p85 = por %p83, %p84
      %p86 = scmp.ne.s32.totalorder %s75, %s78
      %p87 = scmp.eq.s32.totalorder %s23, 1
      %p88 = por %p86, %p87
      %p89 = scmp.ne.s32.totalorder %s78, %s79
      %p90 = scmp.eq.s32.totalorder %s23, 0
      %p91 = por %p89, %p90
      %p92 = scmp.ne.s32.totalorder %s78, %s79
      %p93 = scmp.eq.s32.totalorder %s24, 1
      %p94 = por %p92, %p93
      %p96 = scmp.ne.s32.totalorder %s79, %s95
      %p97 = scmp.eq.s32.totalorder %s24, 0
      %p98 = por %p96, %p97
      %s99 = ssub.s32 %s18, %s25
      %p100 = scmp.eq.s32.totalorder %s99, 0
      %s102 = sadd.s32 %s101, 1
      %s103 = scalar_select %p100, %s101, %s102
      %p106 = pneg %p100
      %p107 = scmp.eq.s32.totalorder %s18, 1
      %p108 = por %p106, %p107
      %p109 = scmp.ne.s32.totalorder %s101, %s104
      %p110 = scmp.eq.s32.totalorder %s18, 0
      %p111 = por %p109, %p110
      %p112 = scmp.ne.s32.totalorder %s101, %s104
      %p113 = scmp.eq.s32.totalorder %s23, 1
      %p114 = por %p112, %p113
      %p115 = scmp.ne.s32.totalorder %s104, %s105
      %p116 = scmp.eq.s32.totalorder %s23, 0
      %p117 = por %p115, %p116
      %p118 = scmp.ne.s32.totalorder %s104, %s105
      %p119 = scmp.eq.s32.totalorder %s24, 1
      %p120 = por %p118, %p119
      %p122 = scmp.ne.s32.totalorder %s105, %s121
      %p123 = scmp.eq.s32.totalorder %s24, 0
      %p124 = por %p122, %p123
      %s125 = ssub.s32 %s18, %s25
      %p126 = scmp.eq.s32.totalorder %s125, 0
      %s128 = sadd.s32 %s127, 1
      %s129 = scalar_select %p126, %s127, %s128
      %p132 = pneg %p126
      %p133 = scmp.eq.s32.totalorder %s18, 1
      %p134 = por %p132, %p133
      %p135 = scmp.ne.s32.totalorder %s127, %s130
      %p136 = scmp.eq.s32.totalorder %s18, 0
      %p137 = por %p135, %p136
      %p138 = scmp.ne.s32.totalorder %s127, %s130
      %p139 = scmp.eq.s32.totalorder %s23, 1
      %p140 = por %p138, %p139
      %p141 = scmp.ne.s32.totalorder %s130, %s131
      %p142 = scmp.eq.s32.totalorder %s23, 0
      %p143 = por %p141, %p142
      %p144 = scmp.ne.s32.totalorder %s130, %s131
      %p145 = scmp.eq.s32.totalorder %s24, 1
      %p146 = por %p144, %p145
      %p148 = scmp.ne.s32.totalorder %s131, %s147
      %p149 = scmp.eq.s32.totalorder %s24, 0
      %p150 = por %p148, %p149
      %s151 = ssub.s32 %s18, %s25
      %p152 = scmp.eq.s32.totalorder %s151, 0
      %s154 = sadd.s32 %s153, 1
      %s155 = scalar_select %p152, %s153, %s154
      %p158 = pneg %p152
      %p159 = scmp.eq.s32.totalorder %s18, 1
      %p160 = por %p158, %p159
      %p161 = scmp.ne.s32.totalorder %s153, %s156
      %p162 = scmp.eq.s32.totalorder %s18, 0
      %p163 = por %p161, %p162
      %p164 = scmp.ne.s32.totalorder %s153, %s156
      %p165 = scmp.eq.s32.totalorder %s23, 1
      %p166 = por %p164, %p165
      %p167 = scmp.ne.s32.totalorder %s156, %s157
      %p168 = scmp.eq.s32.totalorder %s23, 0
      %p169 = por %p167, %p168
      %p170 = scmp.ne.s32.totalorder %s156, %s157
      %p171 = scmp.eq.s32.totalorder %s24, 1
      %p172 = por %p170, %p171
      %p174 = scmp.ne.s32.totalorder %s157, %s173
      %p175 = scmp.eq.s32.totalorder %s24, 0
      %p176 = por %p174, %p175
      %p177 = scmp.le.s32.totalorder 1, %s18
      %p178 = scmp.lt.s32.totalorder %s18, 3
      %p179 = pnand %p177, %p178
      %p180 = pneg %p179
      // Predicated region
      $region9: #{tpu_custom_call.1} parent=5 // pred_check
        _
      $region10: #{tpu_custom_call.1} parent=5 // pred_check_branch
        %182 = sbr.rel (%p179) target = $region12
      $region11: #{tpu_custom_call.1} parent=5 // pred_region
        %s183 = ssub.s32 %s18, 1
        // Predicated region
        $region13: #{tpu_custom_call.1} parent=11 // pred_check
          %p184 = pneg %p65
        $region14: #{tpu_custom_call.1} parent=11 // pred_check_branch
          %186 = sbr.rel (%p184) target = $region16
        $region15: #{tpu_custom_call.1} parent=11 // pred_region
          _
        $region16: #{tpu_custom_call.1} parent=11 // pred_fallthru
          _
      $region12: #{tpu_custom_call.1} parent=5 // pred_fallthru
        _
      %p187 = scmp.lt.s32.totalorder %s18, 2
      // Predicated region
      $region17: #{tpu_custom_call.1} parent=5 // pred_check
        %p188 = pneg %p187
      $region18: #{tpu_custom_call.1} parent=5 // pred_check_branch
        %190 = sbr.rel (%p188) target = $region20
      $region19: #{tpu_custom_call.1} parent=5 // pred_region
        // Predicated region
        $region21: #{tpu_custom_call.1} parent=19 // pred_check
          %p191 = pneg %p38
        $region22: #{tpu_custom_call.1} parent=19 // pred_check_branch
          %193 = sbr.rel (%p191) target = $region24
        $region23: #{tpu_custom_call.1} parent=19 // pred_region
          %p194 = scmp.lt.s32.totalorder %s18, 1
          %s195 = scalar_select %p194, %s18, 1
          %s196 = smul.addr %s195, 43
          %s197 = smul.addr %s196, 4
          %s198 = scalar_lea.vmem %s0, %s197
        $region24: #{tpu_custom_call.1} parent=19 // pred_fallthru
          _
        // Predicated region
        $region25: #{tpu_custom_call.1} parent=19 // pred_check
          %p199 = pneg %p85
        $region26: #{tpu_custom_call.1} parent=19 // pred_check_branch
          %201 = sbr.rel (%p199) target = $region28
        $region27: #{tpu_custom_call.1} parent=19 // pred_region
          %s202 = smul.u32 36, %s18
          %p203 = scmp.lt.s32.totalorder %s202, 71
          %s204 = scalar_select %p203, %s202, 71
          %s205 = smul.addr %s204, 8
          %s206 = scalar_lea.vmem %s2, %s205
          %s207 = smul.u32 36, %s18
        $region28: #{tpu_custom_call.1} parent=19 // pred_fallthru
          _
      $region20: #{tpu_custom_call.1} parent=5 // pred_fallthru
        _
      %p208 = scmp.le.s32.totalorder 1, %s18
      %p209 = scmp.lt.s32.totalorder %s18, 3
      %p210 = pnand %p208, %p209
      %p211 = pneg %p210
      // Predicated region
      $region29: #{tpu_custom_call.1} parent=5 // pred_check
        _
      $region30: #{tpu_custom_call.1} parent=5 // pred_check_branch
        %213 = sbr.rel (%p210) target = $region32
      $region31: #{tpu_custom_call.1} parent=5 // pred_region
        %s214 = ssub.s32 %s18, 1
        %p215 = scmp.lt.s32.totalorder %s23, 1
        %s216 = scalar_select %p215, %s23, 1
        %s217 = smul.addr %s216, 43
        %s218 = smul.addr %s217, 4
        %s219 = scalar_lea.vmem %s0, %s218
        %p220 = pneg %p44
        %p221 = pneg %p41
        %p222 = pneg %p65
        %p223 = pneg %p62
        %s224 = smul.u32 36, %s23
        %p225 = scmp.lt.s32.totalorder %s224, 71
        %s226 = scalar_select %p225, %s224, 71
        %s227 = smul.addr %s226, 8
        %s228 = scalar_lea.vmem %s2, %s227
        %p229 = pneg %p91
        %p230 = pneg %p88
        %p231 = pneg %p117
        %p232 = pneg %p114
        %s233 = sand.u32 %s104, 1
        %s234 = scalar_lea.sflag [#allocation3], %s233
        %s235 = sand.u32 %s104, 1
        %s236 = smul.addr %s235, 576
        %s237 = scalar_lea.vmem [#allocation2], %s236
        %p238 = pneg %p143
        %p239 = pneg %p140
        %s240 = sand.u32 %s23, 1
        %s241 = scalar_lea.sflag [#allocation5], %s240
        %s242 = sand.u32 %s130, 1
        %s243 = scalar_lea.vmem [#allocation4], %s242
        %p244 = pneg %p169
        %p245 = pneg %p166
        %s246 = sand.u32 %s23, 1
        %s247 = scalar_lea.sflag [#allocation5], %s246
        %s248 = sand.u32 %s156, 1
        %s249 = scalar_lea.vmem [#allocation6], %s248
        %p250 = scmp.lt.s32.totalorder %s23, 1
        %s251 = scalar_select %p250, %s23, 1
        %s252 = smul.addr %s251, 43
        %s253 = smul.addr %s252, 4
        %s254 = scalar_lea.vmem %s0, %s253
        %s255 = smul.u32 36, %s23
        %p256 = scmp.lt.s32.totalorder %s255, 71
        %s257 = scalar_select %p256, %s255, 71
        %s258 = smul.addr %s257, 8
        %s259 = scalar_lea.vmem %s2, %s258
        %s260 = smul.u32 36, %s23
        %s261 = smul.u32 36, %s23
        %v263 = vld [vmem:[%s259] sm:$0xff]
        %v264 = vld [vmem:[%s259 + $0x8] sm:$0xff]
        %v265 = vld [vmem:[%s259 + $0x10] sm:$0xff]
        %v266 = vld [vmem:[%s259 + $0x18] sm:$0xff]
        %v267 = vld [vmem:[%s259 + $0x20] sm:$0xff]
        %v268 = vld [vmem:[%s259 + $0x28] sm:$0xff]
        %v269 = vld [vmem:[%s259 + $0x30] sm:$0xff]
        %v270 = vld [vmem:[%s259 + $0x38] sm:$0xff]
        %v271 = vld [vmem:[%s259 + $0x40] sm:$0xff]
        %v272 = vld [vmem:[%s259 + $0x48] sm:$0xff]
        %v273 = vld [vmem:[%s259 + $0x50] sm:$0xff]
        %v274 = vld [vmem:[%s259 + $0x58] sm:$0xff]
        %v275 = vld [vmem:[%s259 + $0x60] sm:$0xff]
        %v276 = vld [vmem:[%s259 + $0x68] sm:$0xff]
        %v277 = vld [vmem:[%s259 + $0x70] sm:$0xff]
        %v278 = vld [vmem:[%s259 + $0x78] sm:$0xff]
        %v279 = vld [vmem:[%s259 + $0x80] sm:$0xff]
        %v280 = vld [vmem:[%s259 + $0x88] sm:$0xff]
        %v281 = vld [vmem:[%s259 + $0x90] sm:$0xff]
        %v282 = vld [vmem:[%s259 + $0x98] sm:$0xff]
        %v283 = vld [vmem:[%s259 + $0xa0] sm:$0xff]
        %v284 = vld [vmem:[%s259 + $0xa8] sm:$0xff]
        %v285 = vld [vmem:[%s259 + $0xb0] sm:$0xff]
        %v286 = vld [vmem:[%s259 + $0xb8] sm:$0xff]
        %v287 = vld [vmem:[%s259 + $0xc0] sm:$0xff]
        %v288 = vld [vmem:[%s259 + $0xc8] sm:$0xff]
        %v289 = vld [vmem:[%s259 + $0xd0] sm:$0xff]
        %v290 = vld [vmem:[%s259 + $0xd8] sm:$0xff]
        %v291 = vld [vmem:[%s259 + $0xe0] sm:$0xff]
        %v292 = vld [vmem:[%s259 + $0xe8] sm:$0xff]
        %v293 = vld [vmem:[%s259 + $0xf0] sm:$0xff]
        %v294 = vld [vmem:[%s259 + $0xf8] sm:$0xff]
        %v295 = vld [vmem:[%s259 + $0x100] sm:$0xff]
        %v296 = vld [vmem:[%s259 + $0x108] sm:$0xff]
        %v297 = vld [vmem:[%s259 + $0x110] sm:$0xff]
        %v298 = vld [vmem:[%s259 + $0x118] sm:$0xff]
        %v299 = vld [vmem:[%s254] sm:$0xf]
        %v300 = vld [vmem:[%s254 + $0x4] sm:$0xf]
        %v301 = vld [vmem:[%s254 + $0x8] sm:$0xf]
        %v302 = vld [vmem:[%s254 + $0xc] sm:$0xf]
        %v303 = vld [vmem:[%s254 + $0x10] sm:$0xf]
        %v304 = vld [vmem:[%s254 + $0x14] sm:$0xf]
        %v305 = vld [vmem:[%s254 + $0x18] sm:$0xf]
        %v306 = vld [vmem:[%s254 + $0x1c] sm:$0xf]
        %v307 = vld [vmem:[%s254 + $0x20] sm:$0xf]
        %v308 = vld [vmem:[%s254 + $0x24] sm:$0xf]
        %v309 = vld [vmem:[%s254 + $0x28] sm:$0xf]
        %v310 = vld [vmem:[%s254 + $0x2c] sm:$0xf]
        %v311 = vld [vmem:[%s254 + $0x30] sm:$0xf]
        %v312 = vld [vmem:[%s254 + $0x34] sm:$0xf]
        %v313 = vld [vmem:[%s254 + $0x38] sm:$0xf]
        %v314 = vld [vmem:[%s254 + $0x3c] sm:$0xf]
        %v315 = vld [vmem:[%s254 + $0x40] sm:$0xf]
        %v316 = vld [vmem:[%s254 + $0x44] sm:$0xf]
        %v317 = vld [vmem:[%s254 + $0x48] sm:$0xf]
        %v318 = vld [vmem:[%s254 + $0x4c] sm:$0xf]
        %v319 = vld [vmem:[%s254 + $0x50] sm:$0xf]
        %v320 = vld [vmem:[%s254 + $0x54] sm:$0xf]
        %v321 = vld [vmem:[%s254 + $0x58] sm:$0xf]
        %v322 = vld [vmem:[%s254 + $0x5c] sm:$0xf]
        %v323 = vld [vmem:[%s254 + $0x60] sm:$0xf]
        %v324 = vld [vmem:[%s254 + $0x64] sm:$0xf]
        %v325 = vld [vmem:[%s254 + $0x68] sm:$0xf]
        %v326 = vld [vmem:[%s254 + $0x6c] sm:$0xf]
        %v327 = vld [vmem:[%s254 + $0x70] sm:$0xf]
        %v328 = vld [vmem:[%s254 + $0x74] sm:$0xf]
        %v329 = vld [vmem:[%s254 + $0x78] sm:$0xf]
        %v330 = vld [vmem:[%s254 + $0x7c] sm:$0xf]
        %v331 = vld [vmem:[%s254 + $0x80] sm:$0xf]
        %v332 = vld [vmem:[%s254 + $0x84] sm:$0xf]
        %v333 = vld [vmem:[%s254 + $0x88] sm:$0xf]
        %v334 = vld [vmem:[%s254 + $0x8c] sm:$0xf]
        %v335 = vld [vmem:[%s1] sm:$0x3]
        %v336 = vld [vmem:[%s254 + $0x90] sm:$0x1]
        %s337 = scalar_lea.vmem %s1, 2
        %v338 = vld [vmem:[%s337] sm:$0x3]
        %v376 = vunpack.c.l.b16 %v299
        %v377 = vunpack.c.l.b16 %v300
        %v378 = vunpack.c.l.b16 %v301
        %v379 = vunpack.c.l.b16 %v302
        %v380 = vunpack.c.l.b16 %v303
        %v381 = vunpack.c.l.b16 %v304
        %v382 = vunpack.c.l.b16 %v305
        %v383 = vunpack.c.l.b16 %v306
        %v384 = vunpack.c.l.b16 %v307
        %v385 = vunpack.c.l.b16 %v308
        %v386 = vunpack.c.l.b16 %v309
        %v387 = vunpack.c.l.b16 %v310
        %v388 = vunpack.c.l.b16 %v311
        %v389 = vunpack.c.l.b16 %v312
        %v390 = vunpack.c.l.b16 %v313
        %v391 = vunpack.c.l.b16 %v314
        %v392 = vunpack.c.l.b16 %v315
        %v393 = vunpack.c.l.b16 %v316
        %v394 = vunpack.c.l.b16 %v317
        %v395 = vunpack.c.l.b16 %v318
        %v396 = vunpack.c.l.b16 %v319
        %v397 = vunpack.c.l.b16 %v320
        %v398 = vunpack.c.l.b16 %v321
        %v399 = vunpack.c.l.b16 %v322
        %v400 = vunpack.c.l.b16 %v323
        %v401 = vunpack.c.l.b16 %v324
        %v402 = vunpack.c.l.b16 %v325
        %v403 = vunpack.c.l.b16 %v326
        %v404 = vunpack.c.l.b16 %v327
        %v405 = vunpack.c.l.b16 %v328
        %v406 = vunpack.c.l.b16 %v329
        %v407 = vunpack.c.l.b16 %v330
        %v408 = vunpack.c.l.b16 %v331
        %v409 = vunpack.c.l.b16 %v332
        %v410 = vunpack.c.l.b16 %v333
        %v411 = vunpack.c.l.b16 %v334
        %v412 = vunpack.c.l.b16 %v336
        %v413 = vpack.c.b16 %v377, %v376
        %v414 = vpack.c.b16 %v379, %v378
        %v415 = vpack.c.b16 %v381, %v380
        %v416 = vpack.c.b16 %v383, %v382
        %v417 = vpack.c.b16 %v385, %v384
        %v418 = vpack.c.b16 %v387, %v386
        %v419 = vpack.c.b16 %v389, %v388
        %v420 = vpack.c.b16 %v391, %v390
        %v421 = vpack.c.b16 %v393, %v392
        %v422 = vpack.c.b16 %v395, %v394
        %v423 = vpack.c.b16 %v397, %v396
        %v424 = vpack.c.b16 %v399, %v398
        %v425 = vpack.c.b16 %v401, %v400
        %v426 = vpack.c.b16 %v403, %v402
        %v427 = vpack.c.b16 %v405, %v404
        %v428 = vpack.c.b16 %v407, %v406
        %v429 = vpack.c.b16 %v409, %v408
        %v430 = vpack.c.b16 %v411, %v410
        %v431 = vpack.c.b16 %v412, %v412
        %vm432 = vsmask.f32 7424
        %v434 = vshrl.u32 %v413, 16
        %v436 = vshll.u32 %v413, 16
        %v438 = vrot.slane %v436, 1
        %v439 = vor.u32 %v434, %v438
        %v441 = vshll.u32 %v414, 16
        %v443 = vrot.slane %v441, 1
        %v444 = vsel %vm432, %v439, %v443
        %v445 = vshrl.u32 %v414, 16
        %v447 = vor.u32 %v445, %v443
        %v449 = vshll.u32 %v415, 16
        %v451 = vrot.slane %v449, 1
        %v452 = vsel %vm432, %v447, %v451
        %v453 = vshrl.u32 %v415, 16
        %v455 = vor.u32 %v453, %v451
        %v457 = vshll.u32 %v416, 16
        %v459 = vrot.slane %v457, 1
        %v460 = vsel %vm432, %v455, %v459
        %v461 = vshrl.u32 %v416, 16
        %v463 = vor.u32 %v461, %v459
        %v465 = vshll.u32 %v417, 16
        %v467 = vrot.slane %v465, 1
        %v468 = vsel %vm432, %v463, %v467
        %v469 = vshrl.u32 %v417, 16
        %v471 = vor.u32 %v469, %v467
        %v473 = vshll.u32 %v418, 16
        %v475 = vrot.slane %v473, 1
        %v476 = vsel %vm432, %v471, %v475
        %v477 = vshrl.u32 %v418, 16
        %v479 = vor.u32 %v477, %v475
        %v481 = vshll.u32 %v419, 16
        %v483 = vrot.slane %v481, 1
        %v484 = vsel %vm432, %v479, %v483
        %v485 = vshrl.u32 %v419, 16
        %v487 = vor.u32 %v485, %v483
        %v489 = vshll.u32 %v420, 16
        %v491 = vrot.slane %v489, 1
        %v492 = vsel %vm432, %v487, %v491
        %v493 = vshrl.u32 %v420, 16
        %v495 = vor.u32 %v493, %v491
        %v497 = vshll.u32 %v421, 16
        %v499 = vrot.slane %v497, 1
        %v500 = vsel %vm432, %v495, %v499
        %v501 = vshrl.u32 %v421, 16
        %v503 = vor.u32 %v501, %v499
        %v505 = vshll.u32 %v422, 16
        %v507 = vrot.slane %v505, 1
        %v508 = vsel %vm432, %v503, %v507
        %v509 = vshrl.u32 %v422, 16
        %v511 = vor.u32 %v509, %v507
        %v513 = vshll.u32 %v423, 16
        %v515 = vrot.slane %v513, 1
        %v516 = vsel %vm432, %v511, %v515
        %v517 = vshrl.u32 %v423, 16
        %v519 = vor.u32 %v517, %v515
        %v521 = vshll.u32 %v424, 16
        %v523 = vrot.slane %v521, 1
        %v524 = vsel %vm432, %v519, %v523
        %v525 = vshrl.u32 %v424, 16
        %v527 = vor.u32 %v525, %v523
        %v529 = vshll.u32 %v425, 16
        %v531 = vrot.slane %v529, 1
        %v532 = vsel %vm432, %v527, %v531
        %v533 = vshrl.u32 %v425, 16
        %v535 = vor.u32 %v533, %v531
        %v537 = vshll.u32 %v426, 16
        %v539 = vrot.slane %v537, 1
        %v540 = vsel %vm432, %v535, %v539
        %v541 = vshrl.u32 %v426, 16
        %v543 = vor.u32 %v541, %v539
        %v545 = vshll.u32 %v427, 16
        %v547 = vrot.slane %v545, 1
        %v548 = vsel %vm432, %v543, %v547
        %v549 = vshrl.u32 %v427, 16
        %v551 = vor.u32 %v549, %v547
        %v553 = vshll.u32 %v428, 16
        %v555 = vrot.slane %v553, 1
        %v556 = vsel %vm432, %v551, %v555
        %v557 = vshrl.u32 %v428, 16
        %v559 = vor.u32 %v557, %v555
        %v561 = vshll.u32 %v429, 16
        %v563 = vrot.slane %v561, 1
        %v564 = vsel %vm432, %v559, %v563
        %v565 = vshrl.u32 %v429, 16
        %v567 = vor.u32 %v565, %v563
        %v569 = vshll.u32 %v430, 16
        %v571 = vrot.slane %v569, 1
        %v572 = vsel %vm432, %v567, %v571
        %v573 = vshrl.u32 %v430, 16
        %v575 = vor.u32 %v573, %v571
        %v577 = vshll.u32 %v431, 16
        %v579 = vrot.slane %v577, 1
        %v580 = vsel %vm432, %v575, %v579
        %vm581 = vcmask 31744
        %v583 = vsel %vm581, %v444, 0
        %v586 = vsel %vm581, %v452, 0
        %v589 = vsel %vm581, %v460, 0
        %v592 = vsel %vm581, %v468, 0
        %v595 = vsel %vm581, %v476, 0
        %v598 = vsel %vm581, %v484, 0
        %v601 = vsel %vm581, %v492, 0
        %v604 = vsel %vm581, %v500, 0
        %v607 = vsel %vm581, %v508, 0
        %v610 = vsel %vm581, %v516, 0
        %v613 = vsel %vm581, %v524, 0
        %v616 = vsel %vm581, %v532, 0
        %v619 = vsel %vm581, %v540, 0
        %v622 = vsel %vm581, %v548, 0
        %v625 = vsel %vm581, %v556, 0
        %v628 = vsel %vm581, %v564, 0
        %v631 = vsel %vm581, %v572, 0
        %v634 = vsel %vm581, %v580, 0
        %vm636 = vcmask 1041408
        %v638 = vsel %vm636, %v338, 0
        %640 = vmatpush.bf16.msra.mxu0 0
        %641 = vmatpush.bf16.msra.mxu0 0
        %642 = vmatpush.bf16.msra.mxu0 0
        %643 = vmatpush.bf16.msra.mxu0 0
        %644 = vmatpush.bf16.msra.mxu0 0
        %645 = vmatpush.bf16.msra.mxu0 0
        %646 = vmatpush.bf16.msra.mxu0 0
        %647 = vmatpush.bf16.msra.mxu0 %v638
        %648 = vmatmul.bf16.gmra.mxu0 %v583
        %v649 = vpop.f32.mrf.mxu0
        %v650 = vadd.f32 0.0, %v649
        %v651 = vpop.f32.mrf.mxu0
        %v652 = vadd.f32 0.0, %v651
        %653 = vmatmul.bf16.gmra.mxu0 %v586
        %v654 = vpop.f32.mrf.mxu0
        %v655 = vadd.f32 0.0, %v654
        %v656 = vpop.f32.mrf.mxu0
        %v657 = vadd.f32 0.0, %v656
        %658 = vmatmul.bf16.gmra.mxu0 %v589
        %v659 = vpop.f32.mrf.mxu0
        %v660 = vadd.f32 0.0, %v659
        %v661 = vpop.f32.mrf.mxu0
        %v662 = vadd.f32 0.0, %v661
        %663 = vmatmul.bf16.gmra.mxu0 %v592
        %v664 = vpop.f32.mrf.mxu0
        %v665 = vadd.f32 0.0, %v664
        %v666 = vpop.f32.mrf.mxu0
        %v667 = vadd.f32 0.0, %v666
        %668 = vmatmul.bf16.gmra.mxu0 %v595
        %v669 = vpop.f32.mrf.mxu0
        %v670 = vadd.f32 0.0, %v669
        %v671 = vpop.f32.mrf.mxu0
        %v672 = vadd.f32 0.0, %v671
        %673 = vmatmul.bf16.gmra.mxu0 %v598
        %v674 = vpop.f32.mrf.mxu0
        %v675 = vadd.f32 0.0, %v674
        %v676 = vpop.f32.mrf.mxu0
        %v677 = vadd.f32 0.0, %v676
        %678 = vmatmul.bf16.gmra.mxu0 %v601
        %v679 = vpop.f32.mrf.mxu0
        %v680 = vadd.f32 0.0, %v679
        %v681 = vpop.f32.mrf.mxu0
        %v682 = vadd.f32 0.0, %v681
        %683 = vmatmul.bf16.gmra.mxu0 %v604
        %v684 = vpop.f32.mrf.mxu0
        %v685 = vadd.f32 0.0, %v684
        %v686 = vpop.f32.mrf.mxu0
        %v687 = vadd.f32 0.0, %v686
        %688 = vmatmul.bf16.gmra.mxu0 %v607
        %v689 = vpop.f32.mrf.mxu0
        %v690 = vadd.f32 0.0, %v689
        %v691 = vpop.f32.mrf.mxu0
        %v692 = vadd.f32 0.0, %v691
        %693 = vmatmul.bf16.gmra.mxu0 %v610
        %v694 = vpop.f32.mrf.mxu0
        %v695 = vadd.f32 0.0, %v694
        %v696 = vpop.f32.mrf.mxu0
        %v697 = vadd.f32 0.0, %v696
        %698 = vmatmul.bf16.gmra.mxu0 %v613
        %v699 = vpop.f32.mrf.mxu0
        %v700 = vadd.f32 0.0, %v699
        %v701 = vpop.f32.mrf.mxu0
        %v702 = vadd.f32 0.0, %v701
        %703 = vmatmul.bf16.gmra.mxu0 %v616
        %v704 = vpop.f32.mrf.mxu0
        %v705 = vadd.f32 0.0, %v704
        %v706 = vpop.f32.mrf.mxu0
        %v707 = vadd.f32 0.0, %v706
        %708 = vmatmul.bf16.gmra.mxu0 %v619
        %v709 = vpop.f32.mrf.mxu0
        %v710 = vadd.f32 0.0, %v709
        %v711 = vpop.f32.mrf.mxu0
        %v712 = vadd.f32 0.0, %v711
        %713 = vmatmul.bf16.gmra.mxu0 %v622
        %v714 = vpop.f32.mrf.mxu0
        %v715 = vadd.f32 0.0, %v714
        %v716 = vpop.f32.mrf.mxu0
        %v717 = vadd.f32 0.0, %v716
        %718 = vmatmul.bf16.gmra.mxu0 %v625
        %v719 = vpop.f32.mrf.mxu0
        %v720 = vadd.f32 0.0, %v719
        %v721 = vpop.f32.mrf.mxu0
        %v722 = vadd.f32 0.0, %v721
        %723 = vmatmul.bf16.gmra.mxu0 %v628
        %v724 = vpop.f32.mrf.mxu0
        %v725 = vadd.f32 0.0, %v724
        %v726 = vpop.f32.mrf.mxu0
        %v727 = vadd.f32 0.0, %v726
        %728 = vmatmul.bf16.gmra.mxu0 %v631
        %v729 = vpop.f32.mrf.mxu0
        %v730 = vadd.f32 0.0, %v729
        %v731 = vpop.f32.mrf.mxu0
        %v732 = vadd.f32 0.0, %v731
        %733 = vmatmul.bf16.gmra.mxu0 %v634
        %v734 = vpop.f32.mrf.mxu0
        %v735 = vadd.f32 0.0, %v734
        %v736 = vpop.f32.mrf.mxu0
        %v737 = vadd.f32 0.0, %v736
        %738 = vdwg.mxu0
        %v739 = vsel %vm581, %v413, 0
        %v741 = vsel %vm581, %v414, 0
        %v743 = vsel %vm581, %v415, 0
        %v745 = vsel %vm581, %v416, 0
        %v747 = vsel %vm581, %v417, 0
        %v749 = vsel %vm581, %v418, 0
        %v751 = vsel %vm581, %v419, 0
        %v753 = vsel %vm581, %v420, 0
        %v755 = vsel %vm581, %v421, 0
        %v757 = vsel %vm581, %v422, 0
        %v759 = vsel %vm581, %v423, 0
        %v761 = vsel %vm581, %v424, 0
        %v763 = vsel %vm581, %v425, 0
        %v765 = vsel %vm581, %v426, 0
        %v767 = vsel %vm581, %v427, 0
        %v769 = vsel %vm581, %v428, 0
        %v771 = vsel %vm581, %v429, 0
        %v773 = vsel %vm581, %v430, 0
        %v776 = vsel %vm636, %v335, 0
        %778 = vmatpush.bf16.msra.mxu0 0
        %779 = vmatpush.bf16.msra.mxu0 0
        %780 = vmatpush.bf16.msra.mxu0 0
        %781 = vmatpush.bf16.msra.mxu0 0
        %782 = vmatpush.bf16.msra.mxu0 0
        %783 = vmatpush.bf16.msra.mxu0 0
        %784 = vmatpush.bf16.msra.mxu0 0
        %785 = vmatpush.bf16.msra.mxu0 %v776
        %786 = vmatmul.bf16.gmra.mxu0 %v739
        %v787 = vpop.f32.mrf.mxu0
        %v788 = vadd.f32 %v650, %v787
        %v789 = vpop.f32.mrf.mxu0
        %v790 = vadd.f32 %v652, %v789
        %791 = vmatmul.bf16.gmra.mxu0 %v741
        %v792 = vpop.f32.mrf.mxu0
        %v793 = vadd.f32 %v655, %v792
        %v794 = vpop.f32.mrf.mxu0
        %v795 = vadd.f32 %v657, %v794
        %796 = vmatmul.bf16.gmra.mxu0 %v743
        %v797 = vpop.f32.mrf.mxu0
        %v798 = vadd.f32 %v660, %v797
        %v799 = vpop.f32.mrf.mxu0
        %v800 = vadd.f32 %v662, %v799
        %801 = vmatmul.bf16.gmra.mxu0 %v745
        %v802 = vpop.f32.mrf.mxu0
        %v803 = vadd.f32 %v665, %v802
        %v804 = vpop.f32.mrf.mxu0
        %v805 = vadd.f32 %v667, %v804
        %806 = vmatmul.bf16.gmra.mxu0 %v747
        %v807 = vpop.f32.mrf.mxu0
        %v808 = vadd.f32 %v670, %v807
        %v809 = vpop.f32.mrf.mxu0
        %v810 = vadd.f32 %v672, %v809
        %811 = vmatmul.bf16.gmra.mxu0 %v749
        %v812 = vpop.f32.mrf.mxu0
        %v813 = vadd.f32 %v675, %v812
        %v814 = vpop.f32.mrf.mxu0
        %v815 = vadd.f32 %v677, %v814
        %816 = vmatmul.bf16.gmra.mxu0 %v751
        %v817 = vpop.f32.mrf.mxu0
        %v818 = vadd.f32 %v680, %v817
        %v819 = vpop.f32.mrf.mxu0
        %v820 = vadd.f32 %v682, %v819
        %821 = vmatmul.bf16.gmra.mxu0 %v753
        %v822 = vpop.f32.mrf.mxu0
        %v823 = vadd.f32 %v685, %v822
        %v824 = vpop.f32.mrf.mxu0
        %v825 = vadd.f32 %v687, %v824
        %826 = vmatmul.bf16.gmra.mxu0 %v755
        %v827 = vpop.f32.mrf.mxu0
        %v828 = vadd.f32 %v690, %v827
        %v829 = vpop.f32.mrf.mxu0
        %v830 = vadd.f32 %v692, %v829
        %831 = vmatmul.bf16.gmra.mxu0 %v757
        %v832 = vpop.f32.mrf.mxu0
        %v833 = vadd.f32 %v695, %v832
        %v834 = vpop.f32.mrf.mxu0
        %v835 = vadd.f32 %v697, %v834
        %836 = vmatmul.bf16.gmra.mxu0 %v759
        %v837 = vpop.f32.mrf.mxu0
        %v838 = vadd.f32 %v700, %v837
        %v839 = vpop.f32.mrf.mxu0
        %v840 = vadd.f32 %v702, %v839
        %841 = vmatmul.bf16.gmra.mxu0 %v761
        %v842 = vpop.f32.mrf.mxu0
        %v843 = vadd.f32 %v705, %v842
        %v844 = vpop.f32.mrf.mxu0
        %v845 = vadd.f32 %v707, %v844
        %846 = vmatmul.bf16.gmra.mxu0 %v763
        %v847 = vpop.f32.mrf.mxu0
        %v848 = vadd.f32 %v710, %v847
        %v849 = vpop.f32.mrf.mxu0
        %v850 = vadd.f32 %v712, %v849
        %851 = vmatmul.bf16.gmra.mxu0 %v765
        %v852 = vpop.f32.mrf.mxu0
        %v853 = vadd.f32 %v715, %v852
        %v854 = vpop.f32.mrf.mxu0
        %v855 = vadd.f32 %v717, %v854
        %856 = vmatmul.bf16.gmra.mxu0 %v767
        %v857 = vpop.f32.mrf.mxu0
        %v858 = vadd.f32 %v720, %v857
        %v859 = vpop.f32.mrf.mxu0
        %v860 = vadd.f32 %v722, %v859
        %861 = vmatmul.bf16.gmra.mxu0 %v769
        %v862 = vpop.f32.mrf.mxu0
        %v863 = vadd.f32 %v725, %v862
        %v864 = vpop.f32.mrf.mxu0
        %v865 = vadd.f32 %v727, %v864
        %866 = vmatmul.bf16.gmra.mxu0 %v771
        %v867 = vpop.f32.mrf.mxu0
        %v868 = vadd.f32 %v730, %v867
        %v869 = vpop.f32.mrf.mxu0
        %v870 = vadd.f32 %v732, %v869
        %871 = vmatmul.bf16.gmra.mxu0 %v773
        %v872 = vpop.f32.mrf.mxu0
        %v873 = vadd.f32 %v735, %v872
        %v874 = vpop.f32.mrf.mxu0
        %v875 = vadd.f32 %v737, %v874
        %876 = vdwg.mxu0
        %v877 = vld [vmem:[%s254 + $0x8] sm:$0xe]
        %v878 = vld [vmem:[%s254 + $0xc] sm:$0xf]
        %v879 = vld [vmem:[%s254 + $0x10] sm:$0xf]
        %v880 = vld [vmem:[%s254 + $0x14] sm:$0xf]
        %v881 = vld [vmem:[%s254 + $0x18] sm:$0xf]
        %v882 = vld [vmem:[%s254 + $0x1c] sm:$0xf]
        %v883 = vld [vmem:[%s254 + $0x20] sm:$0xf]
        %v884 = vld [vmem:[%s254 + $0x24] sm:$0xf]
        %v885 = vld [vmem:[%s254 + $0x28] sm:$0xf]
        %v886 = vld [vmem:[%s254 + $0x2c] sm:$0xf]
        %v887 = vld [vmem:[%s254 + $0x30] sm:$0xf]
        %v888 = vld [vmem:[%s254 + $0x34] sm:$0xf]
        %v889 = vld [vmem:[%s254 + $0x38] sm:$0xf]
        %v890 = vld [vmem:[%s254 + $0x3c] sm:$0xf]
        %v891 = vld [vmem:[%s254 + $0x40] sm:$0xf]
        %v892 = vld [vmem:[%s254 + $0x44] sm:$0xf]
        %v893 = vld [vmem:[%s254 + $0x48] sm:$0xf]
        %v894 = vld [vmem:[%s254 + $0x4c] sm:$0xf]
        %v895 = vld [vmem:[%s254 + $0x50] sm:$0xf]
        %v896 = vld [vmem:[%s254 + $0x54] sm:$0xf]
        %v897 = vld [vmem:[%s254 + $0x58] sm:$0xf]
        %v898 = vld [vmem:[%s254 + $0x5c] sm:$0xf]
        %v899 = vld [vmem:[%s254 + $0x60] sm:$0xf]
        %v900 = vld [vmem:[%s254 + $0x64] sm:$0xf]
        %v901 = vld [vmem:[%s254 + $0x68] sm:$0xf]
        %v902 = vld [vmem:[%s254 + $0x6c] sm:$0xf]
        %v903 = vld [vmem:[%s254 + $0x70] sm:$0xf]
        %v904 = vld [vmem:[%s254 + $0x74] sm:$0xf]
        %v905 = vld [vmem:[%s254 + $0x78] sm:$0xf]
        %v906 = vld [vmem:[%s254 + $0x7c] sm:$0xf]
        %v907 = vld [vmem:[%s254 + $0x80] sm:$0xf]
        %v908 = vld [vmem:[%s254 + $0x84] sm:$0xf]
        %v909 = vld [vmem:[%s254 + $0x88] sm:$0xf]
        %v910 = vld [vmem:[%s254 + $0x8c] sm:$0xf]
        %v911 = vld [vmem:[%s254 + $0x90] sm:$0xf]
        %v912 = vld [vmem:[%s254 + $0x94] sm:$0xf]
        %v913 = vld [vmem:[%s254 + $0x98] sm:$0x1]
        %s914 = scalar_lea.vmem %s1, 4
        %v915 = vld [vmem:[%s914] sm:$0x3]
        %v953 = vunpack.c.l.b16 %v877
        %v954 = vunpack.c.l.b16 %v878
        %v955 = vunpack.c.l.b16 %v879
        %v956 = vunpack.c.l.b16 %v880
        %v957 = vunpack.c.l.b16 %v881
        %v958 = vunpack.c.l.b16 %v882
        %v959 = vunpack.c.l.b16 %v883
        %v960 = vunpack.c.l.b16 %v884
        %v961 = vunpack.c.l.b16 %v885
        %v962 = vunpack.c.l.b16 %v886
        %v963 = vunpack.c.l.b16 %v887
        %v964 = vunpack.c.l.b16 %v888
        %v965 = vunpack.c.l.b16 %v889
        %v966 = vunpack.c.l.b16 %v890
        %v967 = vunpack.c.l.b16 %v891
        %v968 = vunpack.c.l.b16 %v892
        %v969 = vunpack.c.l.b16 %v893
        %v970 = vunpack.c.l.b16 %v894
        %v971 = vunpack.c.l.b16 %v895
        %v972 = vunpack.c.l.b16 %v896
        %v973 = vunpack.c.l.b16 %v897
        %v974 = vunpack.c.l.b16 %v898
        %v975 = vunpack.c.l.b16 %v899
        %v976 = vunpack.c.l.b16 %v900
        %v977 = vunpack.c.l.b16 %v901
        %v978 = vunpack.c.l.b16 %v902
        %v979 = vunpack.c.l.b16 %v903
        %v980 = vunpack.c.l.b16 %v904
        %v981 = vunpack.c.l.b16 %v905
        %v982 = vunpack.c.l.b16 %v906
        %v983 = vunpack.c.l.b16 %v907
        %v984 = vunpack.c.l.b16 %v908
        %v985 = vunpack.c.l.b16 %v909
        %v986 = vunpack.c.l.b16 %v910
        %v987 = vunpack.c.l.b16 %v911
        %v988 = vunpack.c.l.b16 %v912
        %v989 = vunpack.c.l.b16 %v913
        %v990 = vpack.c.b16 %v954, %v953
        %v991 = vpack.c.b16 %v956, %v955
        %v992 = vpack.c.b16 %v958, %v957
        %v993 = vpack.c.b16 %v960, %v959
        %v994 = vpack.c.b16 %v962, %v961
        %v995 = vpack.c.b16 %v964, %v963
        %v996 = vpack.c.b16 %v966, %v965
        %v997 = vpack.c.b16 %v968, %v967
        %v998 = vpack.c.b16 %v970, %v969
        %v999 = vpack.c.b16 %v972, %v971
        %v1000 = vpack.c.b16 %v974, %v973
        %v1001 = vpack.c.b16 %v976, %v975
        %v1002 = vpack.c.b16 %v978, %v977
        %v1003 = vpack.c.b16 %v980, %v979
        %v1004 = vpack.c.b16 %v982, %v981
        %v1005 = vpack.c.b16 %v984, %v983
        %v1006 = vpack.c.b16 %v986, %v985
        %v1007 = vpack.c.b16 %v988, %v987
        %v1008 = vpack.c.b16 %v989, %v989
        %vm1009 = vcmask 1046528
        %v1010 = vrot.slane %v990, 1
        %v1011 = vrot.slane %v991, 1
        %v1012 = vsel %vm1009, %v1010, %v1011
        %v1013 = vrot.slane %v992, 1
        %v1014 = vsel %vm1009, %v1011, %v1013
        %v1015 = vrot.slane %v993, 1
        %v1016 = vsel %vm1009, %v1013, %v1015
        %v1017 = vrot.slane %v994, 1
        %v1018 = vsel %vm1009, %v1015, %v1017
        %v1019 = vrot.slane %v995, 1
        %v1020 = vsel %vm1009, %v1017, %v1019
        %v1021 = vrot.slane %v996, 1
        %v1022 = vsel %vm1009, %v1019, %v1021
        %v1023 = vrot.slane %v997, 1
        %v1024 = vsel %vm1009, %v1021, %v1023
        %v1025 = vrot.slane %v998, 1
        %v1026 = vsel %vm1009, %v1023, %v1025
        %v1027 = vrot.slane %v999, 1
        %v1028 = vsel %vm1009, %v1025, %v1027
        %v1029 = vrot.slane %v1000, 1
        %v1030 = vsel %vm1009, %v1027, %v1029
        %v1031 = vrot.slane %v1001, 1
        %v1032 = vsel %vm1009, %v1029, %v1031
        %v1033 = vrot.slane %v1002, 1
        %v1034 = vsel %vm1009, %v1031, %v1033
        %v1035 = vrot.slane %v1003, 1
        %v1036 = vsel %vm1009, %v1033, %v1035
        %v1037 = vrot.slane %v1004, 1
        %v1038 = vsel %vm1009, %v1035, %v1037
        %v1039 = vrot.slane %v1005, 1
        %v1040 = vsel %vm1009, %v1037, %v1039
        %v1041 = vrot.slane %v1006, 1
        %v1042 = vsel %vm1009, %v1039, %v1041
        %v1043 = vrot.slane %v1007, 1
        %v1044 = vsel %vm1009, %v1041, %v1043
        %v1045 = vrot.slane %v1008, 1
        %v1046 = vsel %vm1009, %v1043, %v1045
        %v1048 = vsel %vm581, %v1012, 0
        %v1051 = vsel %vm581, %v1014, 0
        %v1054 = vsel %vm581, %v1016, 0
        %v1057 = vsel %vm581, %v1018, 0
        %v1060 = vsel %vm581, %v1020, 0
        %v1063 = vsel %vm581, %v1022, 0
        %v1066 = vsel %vm581, %v1024, 0
        %v1069 = vsel %vm581, %v1026, 0
        %v1072 = vsel %vm581, %v1028, 0
        %v1075 = vsel %vm581, %v1030, 0
        %v1078 = vsel %vm581, %v1032, 0
        %v1081 = vsel %vm581, %v1034, 0
        %v1084 = vsel %vm581, %v1036, 0
        %v1087 = vsel %vm581, %v1038, 0
        %v1090 = vsel %vm581, %v1040, 0
        %v1093 = vsel %vm581, %v1042, 0
        %v1096 = vsel %vm581, %v1044, 0
        %v1099 = vsel %vm581, %v1046, 0
        %v1102 = vsel %vm636, %v915, 0
        %1104 = vmatpush.bf16.msra.mxu0 0
        %1105 = vmatpush.bf16.msra.mxu0 0
        %1106 = vmatpush.bf16.msra.mxu0 0
        %1107 = vmatpush.bf16.msra.mxu0 0
        %1108 = vmatpush.bf16.msra.mxu0 0
        %1109 = vmatpush.bf16.msra.mxu0 0
        %1110 = vmatpush.bf16.msra.mxu0 0
        %1111 = vmatpush.bf16.msra.mxu0 %v1102
        %1112 = vmatmul.bf16.gmra.mxu0 %v1048
        %v1113 = vpop.f32.mrf.mxu0
        %v1114 = vadd.f32 0.0, %v1113
        %v1115 = vpop.f32.mrf.mxu0
        %v1116 = vadd.f32 0.0, %v1115
        %1117 = vmatmul.bf16.gmra.mxu0 %v1051
        %v1118 = vpop.f32.mrf.mxu0
        %v1119 = vadd.f32 0.0, %v1118
        %v1120 = vpop.f32.mrf.mxu0
        %v1121 = vadd.f32 0.0, %v1120
        %1122 = vmatmul.bf16.gmra.mxu0 %v1054
        %v1123 = vpop.f32.mrf.mxu0
        %v1124 = vadd.f32 0.0, %v1123
        %v1125 = vpop.f32.mrf.mxu0
        %v1126 = vadd.f32 0.0, %v1125
        %1127 = vmatmul.bf16.gmra.mxu0 %v1057
        %v1128 = vpop.f32.mrf.mxu0
        %v1129 = vadd.f32 0.0, %v1128
        %v1130 = vpop.f32.mrf.mxu0
        %v1131 = vadd.f32 0.0, %v1130
        %1132 = vmatmul.bf16.gmra.mxu0 %v1060
        %v1133 = vpop.f32.mrf.mxu0
        %v1134 = vadd.f32 0.0, %v1133
        %v1135 = vpop.f32.mrf.mxu0
        %v1136 = vadd.f32 0.0, %v1135
        %1137 = vmatmul.bf16.gmra.mxu0 %v1063
        %v1138 = vpop.f32.mrf.mxu0
        %v1139 = vadd.f32 0.0, %v1138
        %v1140 = vpop.f32.mrf.mxu0
        %v1141 = vadd.f32 0.0, %v1140
        %1142 = vmatmul.bf16.gmra.mxu0 %v1066
        %v1143 = vpop.f32.mrf.mxu0
        %v1144 = vadd.f32 0.0, %v1143
        %v1145 = vpop.f32.mrf.mxu0
        %v1146 = vadd.f32 0.0, %v1145
        %1147 = vmatmul.bf16.gmra.mxu0 %v1069
        %v1148 = vpop.f32.mrf.mxu0
        %v1149 = vadd.f32 0.0, %v1148
        %v1150 = vpop.f32.mrf.mxu0
        %v1151 = vadd.f32 0.0, %v1150
        %1152 = vmatmul.bf16.gmra.mxu0 %v1072
        %v1153 = vpop.f32.mrf.mxu0
        %v1154 = vadd.f32 0.0, %v1153
        %v1155 = vpop.f32.mrf.mxu0
        %v1156 = vadd.f32 0.0, %v1155
        %1157 = vmatmul.bf16.gmra.mxu0 %v1075
        %v1158 = vpop.f32.mrf.mxu0
        %v1159 = vadd.f32 0.0, %v1158
        %v1160 = vpop.f32.mrf.mxu0
        %v1161 = vadd.f32 0.0, %v1160
        %1162 = vmatmul.bf16.gmra.mxu0 %v1078
        %v1163 = vpop.f32.mrf.mxu0
        %v1164 = vadd.f32 0.0, %v1163
        %v1165 = vpop.f32.mrf.mxu0
        %v1166 = vadd.f32 0.0, %v1165
        %1167 = vmatmul.bf16.gmra.mxu0 %v1081
        %v1168 = vpop.f32.mrf.mxu0
        %v1169 = vadd.f32 0.0, %v1168
        %v1170 = vpop.f32.mrf.mxu0
        %v1171 = vadd.f32 0.0, %v1170
        %1172 = vmatmul.bf16.gmra.mxu0 %v1084
        %v1173 = vpop.f32.mrf.mxu0
        %v1174 = vadd.f32 0.0, %v1173
        %v1175 = vpop.f32.mrf.mxu0
        %v1176 = vadd.f32 0.0, %v1175
        %1177 = vmatmul.bf16.gmra.mxu0 %v1087
        %v1178 = vpop.f32.mrf.mxu0
        %v1179 = vadd.f32 0.0, %v1178
        %v1180 = vpop.f32.mrf.mxu0
        %v1181 = vadd.f32 0.0, %v1180
        %1182 = vmatmul.bf16.gmra.mxu0 %v1090
        %v1183 = vpop.f32.mrf.mxu0
        %v1184 = vadd.f32 0.0, %v1183
        %v1185 = vpop.f32.mrf.mxu0
        %v1186 = vadd.f32 0.0, %v1185
        %1187 = vmatmul.bf16.gmra.mxu0 %v1093
        %v1188 = vpop.f32.mrf.mxu0
        %v1189 = vadd.f32 0.0, %v1188
        %v1190 = vpop.f32.mrf.mxu0
        %v1191 = vadd.f32 0.0, %v1190
        %1192 = vmatmul.bf16.gmra.mxu0 %v1096
        %v1193 = vpop.f32.mrf.mxu0
        %v1194 = vadd.f32 0.0, %v1193
        %v1195 = vpop.f32.mrf.mxu0
        %v1196 = vadd.f32 0.0, %v1195
        %1197 = vmatmul.bf16.gmra.mxu0 %v1099
        %v1198 = vpop.f32.mrf.mxu0
        %v1199 = vadd.f32 0.0, %v1198
        %v1200 = vpop.f32.mrf.mxu0
        %v1201 = vadd.f32 0.0, %v1200
        %1202 = vdwg.mxu0
        %v1203 = vadd.f32 %v788, %v1114
        %v1204 = vadd.f32 %v790, %v1116
        %v1205 = vadd.f32 %v793, %v1119
        %v1206 = vadd.f32 %v795, %v1121
        %v1207 = vadd.f32 %v798, %v1124
        %v1208 = vadd.f32 %v800, %v1126
        %v1209 = vadd.f32 %v803, %v1129
        %v1210 = vadd.f32 %v805, %v1131
        %v1211 = vadd.f32 %v808, %v1134
        %v1212 = vadd.f32 %v810, %v1136
        %v1213 = vadd.f32 %v813, %v1139
        %v1214 = vadd.f32 %v815, %v1141
        %v1215 = vadd.f32 %v818, %v1144
        %v1216 = vadd.f32 %v820, %v1146
        %v1217 = vadd.f32 %v823, %v1149
        %v1218 = vadd.f32 %v825, %v1151
        %v1219 = vadd.f32 %v828, %v1154
        %v1220 = vadd.f32 %v830, %v1156
        %v1221 = vadd.f32 %v833, %v1159
        %v1222 = vadd.f32 %v835, %v1161
        %v1223 = vadd.f32 %v838, %v1164
        %v1224 = vadd.f32 %v840, %v1166
        %v1225 = vadd.f32 %v843, %v1169
        %v1226 = vadd.f32 %v845, %v1171
        %v1227 = vadd.f32 %v848, %v1174
        %v1228 = vadd.f32 %v850, %v1176
        %v1229 = vadd.f32 %v853, %v1179
        %v1230 = vadd.f32 %v855, %v1181
        %v1231 = vadd.f32 %v858, %v1184
        %v1232 = vadd.f32 %v860, %v1186
        %v1233 = vadd.f32 %v863, %v1189
        %v1234 = vadd.f32 %v865, %v1191
        %v1235 = vadd.f32 %v868, %v1194
        %v1236 = vadd.f32 %v870, %v1196
        %v1237 = vadd.f32 %v873, %v1199
        %v1238 = vadd.f32 %v875, %v1201
        %v1239 = vld [vmem:[%s254 + $0x98] sm:$0x3]
        %s1240 = scalar_lea.vmem %s1, 6
        %v1241 = vld [vmem:[%s1240] sm:$0x3]
        %v1243 = vunpack.c.l.b16 %v1239
        %v1244 = vpack.c.b16 %v1243, %v1243
        %vm1245 = vsmask.f32 6400
        %v1247 = vshrl.u32 %v990, 16
        %v1249 = vrot.slane %v1247, 1
        %v1250 = vshll.u32 %v990, 16
        %v1252 = vrot.slane %v1250, 2
        %v1253 = vor.u32 %v1249, %v1252
        %v1255 = vshrl.u32 %v991, 16
        %v1257 = vrot.slane %v1255, 1
        %v1258 = vshll.u32 %v991, 16
        %v1260 = vrot.slane %v1258, 2
        %v1261 = vor.u32 %v1257, %v1260
        %v1262 = vsel %vm1245, %v1253, %v1261
        %v1264 = vshrl.u32 %v992, 16
        %v1266 = vrot.slane %v1264, 1
        %v1267 = vshll.u32 %v992, 16
        %v1269 = vrot.slane %v1267, 2
        %v1270 = vor.u32 %v1266, %v1269
        %v1271 = vsel %vm1245, %v1261, %v1270
        %v1273 = vshrl.u32 %v993, 16
        %v1275 = vrot.slane %v1273, 1
        %v1276 = vshll.u32 %v993, 16
        %v1278 = vrot.slane %v1276, 2
        %v1279 = vor.u32 %v1275, %v1278
        %v1280 = vsel %vm1245, %v1270, %v1279
        %v1282 = vshrl.u32 %v994, 16
        %v1284 = vrot.slane %v1282, 1
        %v1285 = vshll.u32 %v994, 16
        %v1287 = vrot.slane %v1285, 2
        %v1288 = vor.u32 %v1284, %v1287
        %v1289 = vsel %vm1245, %v1279, %v1288
        %v1291 = vshrl.u32 %v995, 16
        %v1293 = vrot.slane %v1291, 1
        %v1294 = vshll.u32 %v995, 16
        %v1296 = vrot.slane %v1294, 2
        %v1297 = vor.u32 %v1293, %v1296
        %v1298 = vsel %vm1245, %v1288, %v1297
        %v1300 = vshrl.u32 %v996, 16
        %v1302 = vrot.slane %v1300, 1
        %v1303 = vshll.u32 %v996, 16
        %v1305 = vrot.slane %v1303, 2
        %v1306 = vor.u32 %v1302, %v1305
        %v1307 = vsel %vm1245, %v1297, %v1306
        %v1309 = vshrl.u32 %v997, 16
        %v1311 = vrot.slane %v1309, 1
        %v1312 = vshll.u32 %v997, 16
        %v1314 = vrot.slane %v1312, 2
        %v1315 = vor.u32 %v1311, %v1314
        %v1316 = vsel %vm1245, %v1306, %v1315
        %v1318 = vshrl.u32 %v998, 16
        %v1320 = vrot.slane %v1318, 1
        %v1321 = vshll.u32 %v998, 16
        %v1323 = vrot.slane %v1321, 2
        %v1324 = vor.u32 %v1320, %v1323
        %v1325 = vsel %vm1245, %v1315, %v1324
        %v1327 = vshrl.u32 %v999, 16
        %v1329 = vrot.slane %v1327, 1
        %v1330 = vshll.u32 %v999, 16
        %v1332 = vrot.slane %v1330, 2
        %v1333 = vor.u32 %v1329, %v1332
        %v1334 = vsel %vm1245, %v1324, %v1333
        %v1336 = vshrl.u32 %v1000, 16
        %v1338 = vrot.slane %v1336, 1
        %v1339 = vshll.u32 %v1000, 16
        %v1341 = vrot.slane %v1339, 2
        %v1342 = vor.u32 %v1338, %v1341
        %v1343 = vsel %vm1245, %v1333, %v1342
        %v1345 = vshrl.u32 %v1001, 16
        %v1347 = vrot.slane %v1345, 1
        %v1348 = vshll.u32 %v1001, 16
        %v1350 = vrot.slane %v1348, 2
        %v1351 = vor.u32 %v1347, %v1350
        %v1352 = vsel %vm1245, %v1342, %v1351
        %v1354 = vshrl.u32 %v1002, 16
        %v1356 = vrot.slane %v1354, 1
        %v1357 = vshll.u32 %v1002, 16
        %v1359 = vrot.slane %v1357, 2
        %v1360 = vor.u32 %v1356, %v1359
        %v1361 = vsel %vm1245, %v1351, %v1360
        %v1363 = vshrl.u32 %v1003, 16
        %v1365 = vrot.slane %v1363, 1
        %v1366 = vshll.u32 %v1003, 16
        %v1368 = vrot.slane %v1366, 2
        %v1369 = vor.u32 %v1365, %v1368
        %v1370 = vsel %vm1245, %v1360, %v1369
        %v1372 = vshrl.u32 %v1004, 16
        %v1374 = vrot.slane %v1372, 1
        %v1375 = vshll.u32 %v1004, 16
        %v1377 = vrot.slane %v1375, 2
        %v1378 = vor.u32 %v1374, %v1377
        %v1379 = vsel %vm1245, %v1369, %v1378
        %v1381 = vshrl.u32 %v1005, 16
        %v1383 = vrot.slane %v1381, 1
        %v1384 = vshll.u32 %v1005, 16
        %v1386 = vrot.slane %v1384, 2
        %v1387 = vor.u32 %v1383, %v1386
        %v1388 = vsel %vm1245, %v1378, %v1387
        %v1390 = vshrl.u32 %v1006, 16
        %v1392 = vrot.slane %v1390, 1
        %v1393 = vshll.u32 %v1006, 16
        %v1395 = vrot.slane %v1393, 2
        %v1396 = vor.u32 %v1392, %v1395
        %v1397 = vsel %vm1245, %v1387, %v1396
        %v1399 = vshrl.u32 %v1007, 16
        %v1401 = vrot.slane %v1399, 1
        %v1402 = vshll.u32 %v1007, 16
        %v1404 = vrot.slane %v1402, 2
        %v1405 = vor.u32 %v1401, %v1404
        %v1406 = vsel %vm1245, %v1396, %v1405
        %v1408 = vshrl.u32 %v1244, 16
        %v1410 = vrot.slane %v1408, 1
        %v1411 = vshll.u32 %v1244, 16
        %v1413 = vrot.slane %v1411, 2
        %v1414 = vor.u32 %v1410, %v1413
        %v1415 = vsel %vm1245, %v1405, %v1414
        %v1417 = vsel %vm581, %v1262, 0
        %v1420 = vsel %vm581, %v1271, 0
        %v1423 = vsel %vm581, %v1280, 0
        %v1426 = vsel %vm581, %v1289, 0
        %v1429 = vsel %vm581, %v1298, 0
        %v1432 = vsel %vm581, %v1307, 0
        %v1435 = vsel %vm581, %v1316, 0
        %v1438 = vsel %vm581, %v1325, 0
        %v1441 = vsel %vm581, %v1334, 0
        %v1444 = vsel %vm581, %v1343, 0
        %v1447 = vsel %vm581, %v1352, 0
        %v1450 = vsel %vm581, %v1361, 0
        %v1453 = vsel %vm581, %v1370, 0
        %v1456 = vsel %vm581, %v1379, 0
        %v1459 = vsel %vm581, %v1388, 0
        %v1462 = vsel %vm581, %v1397, 0
        %v1465 = vsel %vm581, %v1406, 0
        %v1468 = vsel %vm581, %v1415, 0
        %v1471 = vsel %vm636, %v1241, 0
        %1473 = vmatpush.bf16.msra.mxu0 0
        %1474 = vmatpush.bf16.msra.mxu0 0
        %1475 = vmatpush.bf16.msra.mxu0 0
        %1476 = vmatpush.bf16.msra.mxu0 0
        %1477 = vmatpush.bf16.msra.mxu0 0
        %1478 = vmatpush.bf16.msra.mxu0 0
        %1479 = vmatpush.bf16.msra.mxu0 0
        %1480 = vmatpush.bf16.msra.mxu0 %v1471
        %1481 = vmatmul.bf16.gmra.mxu0 %v1417
        %v1482 = vpop.f32.mrf.mxu0
        %v1483 = vadd.f32 0.0, %v1482
        %v1484 = vpop.f32.mrf.mxu0
        %v1485 = vadd.f32 0.0, %v1484
        %1486 = vmatmul.bf16.gmra.mxu0 %v1420
        %v1487 = vpop.f32.mrf.mxu0
        %v1488 = vadd.f32 0.0, %v1487
        %v1489 = vpop.f32.mrf.mxu0
        %v1490 = vadd.f32 0.0, %v1489
        %1491 = vmatmul.bf16.gmra.mxu0 %v1423
        %v1492 = vpop.f32.mrf.mxu0
        %v1493 = vadd.f32 0.0, %v1492
        %v1494 = vpop.f32.mrf.mxu0
        %v1495 = vadd.f32 0.0, %v1494
        %1496 = vmatmul.bf16.gmra.mxu0 %v1426
        %v1497 = vpop.f32.mrf.mxu0
        %v1498 = vadd.f32 0.0, %v1497
        %v1499 = vpop.f32.mrf.mxu0
        %v1500 = vadd.f32 0.0, %v1499
        %1501 = vmatmul.bf16.gmra.mxu0 %v1429
        %v1502 = vpop.f32.mrf.mxu0
        %v1503 = vadd.f32 0.0, %v1502
        %v1504 = vpop.f32.mrf.mxu0
        %v1505 = vadd.f32 0.0, %v1504
        %1506 = vmatmul.bf16.gmra.mxu0 %v1432
        %v1507 = vpop.f32.mrf.mxu0
        %v1508 = vadd.f32 0.0, %v1507
        %v1509 = vpop.f32.mrf.mxu0
        %v1510 = vadd.f32 0.0, %v1509
        %1511 = vmatmul.bf16.gmra.mxu0 %v1435
        %v1512 = vpop.f32.mrf.mxu0
        %v1513 = vadd.f32 0.0, %v1512
        %v1514 = vpop.f32.mrf.mxu0
        %v1515 = vadd.f32 0.0, %v1514
        %1516 = vmatmul.bf16.gmra.mxu0 %v1438
        %v1517 = vpop.f32.mrf.mxu0
        %v1518 = vadd.f32 0.0, %v1517
        %v1519 = vpop.f32.mrf.mxu0
        %v1520 = vadd.f32 0.0, %v1519
        %1521 = vmatmul.bf16.gmra.mxu0 %v1441
        %v1522 = vpop.f32.mrf.mxu0
        %v1523 = vadd.f32 0.0, %v1522
        %v1524 = vpop.f32.mrf.mxu0
        %v1525 = vadd.f32 0.0, %v1524
        %1526 = vmatmul.bf16.gmra.mxu0 %v1444
        %v1527 = vpop.f32.mrf.mxu0
        %v1528 = vadd.f32 0.0, %v1527
        %v1529 = vpop.f32.mrf.mxu0
        %v1530 = vadd.f32 0.0, %v1529
        %1531 = vmatmul.bf16.gmra.mxu0 %v1447
        %v1532 = vpop.f32.mrf.mxu0
        %v1533 = vadd.f32 0.0, %v1532
        %v1534 = vpop.f32.mrf.mxu0
        %v1535 = vadd.f32 0.0, %v1534
        %1536 = vmatmul.bf16.gmra.mxu0 %v1450
        %v1537 = vpop.f32.mrf.mxu0
        %v1538 = vadd.f32 0.0, %v1537
        %v1539 = vpop.f32.mrf.mxu0
        %v1540 = vadd.f32 0.0, %v1539
        %1541 = vmatmul.bf16.gmra.mxu0 %v1453
        %v1542 = vpop.f32.mrf.mxu0
        %v1543 = vadd.f32 0.0, %v1542
        %v1544 = vpop.f32.mrf.mxu0
        %v1545 = vadd.f32 0.0, %v1544
        %1546 = vmatmul.bf16.gmra.mxu0 %v1456
        %v1547 = vpop.f32.mrf.mxu0
        %v1548 = vadd.f32 0.0, %v1547
        %v1549 = vpop.f32.mrf.mxu0
        %v1550 = vadd.f32 0.0, %v1549
        %1551 = vmatmul.bf16.gmra.mxu0 %v1459
        %v1552 = vpop.f32.mrf.mxu0
        %v1553 = vadd.f32 0.0, %v1552
        %v1554 = vpop.f32.mrf.mxu0
        %v1555 = vadd.f32 0.0, %v1554
        %1556 = vmatmul.bf16.gmra.mxu0 %v1462
        %v1557 = vpop.f32.mrf.mxu0
        %v1558 = vadd.f32 0.0, %v1557
        %v1559 = vpop.f32.mrf.mxu0
        %v1560 = vadd.f32 0.0, %v1559
        %1561 = vmatmul.bf16.gmra.mxu0 %v1465
        %v1562 = vpop.f32.mrf.mxu0
        %v1563 = vadd.f32 0.0, %v1562
        %v1564 = vpop.f32.mrf.mxu0
        %v1565 = vadd.f32 0.0, %v1564
        %1566 = vmatmul.bf16.gmra.mxu0 %v1468
        %v1567 = vpop.f32.mrf.mxu0
        %v1568 = vadd.f32 0.0, %v1567
        %v1569 = vpop.f32.mrf.mxu0
        %v1570 = vadd.f32 0.0, %v1569
        %1571 = vdwg.mxu0
        %v1572 = vadd.f32 %v1203, %v1483
        %v1573 = vadd.f32 %v1204, %v1485
        %v1574 = vadd.f32 %v1205, %v1488
        %v1575 = vadd.f32 %v1206, %v1490
        %v1576 = vadd.f32 %v1207, %v1493
        %v1577 = vadd.f32 %v1208, %v1495
        %v1578 = vadd.f32 %v1209, %v1498
        %v1579 = vadd.f32 %v1210, %v1500
        %v1580 = vadd.f32 %v1211, %v1503
        %v1581 = vadd.f32 %v1212, %v1505
        %v1582 = vadd.f32 %v1213, %v1508
        %v1583 = vadd.f32 %v1214, %v1510
        %v1584 = vadd.f32 %v1215, %v1513
        %v1585 = vadd.f32 %v1216, %v1515
        %v1586 = vadd.f32 %v1217, %v1518
        %v1587 = vadd.f32 %v1218, %v1520
        %v1588 = vadd.f32 %v1219, %v1523
        %v1589 = vadd.f32 %v1220, %v1525
        %v1590 = vadd.f32 %v1221, %v1528
        %v1591 = vadd.f32 %v1222, %v1530
        %v1592 = vadd.f32 %v1223, %v1533
        %v1593 = vadd.f32 %v1224, %v1535
        %v1594 = vadd.f32 %v1225, %v1538
        %v1595 = vadd.f32 %v1226, %v1540
        %v1596 = vadd.f32 %v1227, %v1543
        %v1597 = vadd.f32 %v1228, %v1545
        %v1598 = vadd.f32 %v1229, %v1548
        %v1599 = vadd.f32 %v1230, %v1550
        %v1600 = vadd.f32 %v1231, %v1553
        %v1601 = vadd.f32 %v1232, %v1555
        %v1602 = vadd.f32 %v1233, %v1558
        %v1603 = vadd.f32 %v1234, %v1560
        %v1604 = vadd.f32 %v1235, %v1563
        %v1605 = vadd.f32 %v1236, %v1565
        %v1606 = vadd.f32 %v1237, %v1568
        %v1607 = vadd.f32 %v1238, %v1570
        %1609 = vset.pattern.permute.xlu0 0
        %1610 = vperm.xlu0 %1609, %v263
        %v1611 = vpop.permute.xlu0 %1610
        %1614 = vset.pattern.permute.xlu0 0
        %1615 = vperm.xlu0 %1614, %v264
        %v1616 = vpop.permute.xlu0 %1615
        %1619 = vset.pattern.permute.xlu0 0
        %1620 = vperm.xlu0 %1619, %v265
        %v1621 = vpop.permute.xlu0 %1620
        %1624 = vset.pattern.permute.xlu0 0
        %1625 = vperm.xlu0 %1624, %v266
        %v1626 = vpop.permute.xlu0 %1625
        %1629 = vset.pattern.permute.xlu0 0
        %1630 = vperm.xlu0 %1629, %v267
        %v1631 = vpop.permute.xlu0 %1630
        %1634 = vset.pattern.permute.xlu0 0
        %1635 = vperm.xlu0 %1634, %v268
        %v1636 = vpop.permute.xlu0 %1635
        %1639 = vset.pattern.permute.xlu0 0
        %1640 = vperm.xlu0 %1639, %v269
        %v1641 = vpop.permute.xlu0 %1640
        %1644 = vset.pattern.permute.xlu0 0
        %1645 = vperm.xlu0 %1644, %v270
        %v1646 = vpop.permute.xlu0 %1645
        %1649 = vset.pattern.permute.xlu0 0
        %1650 = vperm.xlu0 %1649, %v271
        %v1651 = vpop.permute.xlu0 %1650
        %1654 = vset.pattern.permute.xlu0 0
        %1655 = vperm.xlu0 %1654, %v272
        %v1656 = vpop.permute.xlu0 %1655
        %1659 = vset.pattern.permute.xlu0 0
        %1660 = vperm.xlu0 %1659, %v273
        %v1661 = vpop.permute.xlu0 %1660
        %1664 = vset.pattern.permute.xlu0 0
        %1665 = vperm.xlu0 %1664, %v274
        %v1666 = vpop.permute.xlu0 %1665
        %1669 = vset.pattern.permute.xlu0 0
        %1670 = vperm.xlu0 %1669, %v275
        %v1671 = vpop.permute.xlu0 %1670
        %1674 = vset.pattern.permute.xlu0 0
        %1675 = vperm.xlu0 %1674, %v276
        %v1676 = vpop.permute.xlu0 %1675
        %1679 = vset.pattern.permute.xlu0 0
        %1680 = vperm.xlu0 %1679, %v277
        %v1681 = vpop.permute.xlu0 %1680
        %1684 = vset.pattern.permute.xlu0 0
        %1685 = vperm.xlu0 %1684, %v278
        %v1686 = vpop.permute.xlu0 %1685
        %1689 = vset.pattern.permute.xlu0 0
        %1690 = vperm.xlu0 %1689, %v279
        %v1691 = vpop.permute.xlu0 %1690
        %1694 = vset.pattern.permute.xlu0 0
        %1695 = vperm.xlu0 %1694, %v280
        %v1696 = vpop.permute.xlu0 %1695
        %1699 = vset.pattern.permute.xlu0 0
        %1700 = vperm.xlu0 %1699, %v281
        %v1701 = vpop.permute.xlu0 %1700
        %1704 = vset.pattern.permute.xlu0 0
        %1705 = vperm.xlu0 %1704, %v282
        %v1706 = vpop.permute.xlu0 %1705
        %1709 = vset.pattern.permute.xlu0 0
        %1710 = vperm.xlu0 %1709, %v283
        %v1711 = vpop.permute.xlu0 %1710
        %1714 = vset.pattern.permute.xlu0 0
        %1715 = vperm.xlu0 %1714, %v284
        %v1716 = vpop.permute.xlu0 %1715
        %1719 = vset.pattern.permute.xlu0 0
        %1720 = vperm.xlu0 %1719, %v285
        %v1721 = vpop.permute.xlu0 %1720
        %1724 = vset.pattern.permute.xlu0 0
        %1725 = vperm.xlu0 %1724, %v286
        %v1726 = vpop.permute.xlu0 %1725
        %1729 = vset.pattern.permute.xlu0 0
        %1730 = vperm.xlu0 %1729, %v287
        %v1731 = vpop.permute.xlu0 %1730
        %1734 = vset.pattern.permute.xlu0 0
        %1735 = vperm.xlu0 %1734, %v288
        %v1736 = vpop.permute.xlu0 %1735
        %1739 = vset.pattern.permute.xlu0 0
        %1740 = vperm.xlu0 %1739, %v289
        %v1741 = vpop.permute.xlu0 %1740
        %1744 = vset.pattern.permute.xlu0 0
        %1745 = vperm.xlu0 %1744, %v290
        %v1746 = vpop.permute.xlu0 %1745
        %1749 = vset.pattern.permute.xlu0 0
        %1750 = vperm.xlu0 %1749, %v291
        %v1751 = vpop.permute.xlu0 %1750
        %1754 = vset.pattern.permute.xlu0 0
        %1755 = vperm.xlu0 %1754, %v292
        %v1756 = vpop.permute.xlu0 %1755
        %1759 = vset.pattern.permute.xlu0 0
        %1760 = vperm.xlu0 %1759, %v293
        %v1761 = vpop.permute.xlu0 %1760
        %1764 = vset.pattern.permute.xlu0 0
        %1765 = vperm.xlu0 %1764, %v294
        %v1766 = vpop.permute.xlu0 %1765
        %1769 = vset.pattern.permute.xlu0 0
        %1770 = vperm.xlu0 %1769, %v295
        %v1771 = vpop.permute.xlu0 %1770
        %1774 = vset.pattern.permute.xlu0 0
        %1775 = vperm.xlu0 %1774, %v296
        %v1776 = vpop.permute.xlu0 %1775
        %1779 = vset.pattern.permute.xlu0 0
        %1780 = vperm.xlu0 %1779, %v297
        %v1781 = vpop.permute.xlu0 %1780
        %1784 = vset.pattern.permute.xlu0 0
        %1785 = vperm.xlu0 %1784, %v298
        %v1786 = vpop.permute.xlu0 %1785
        %v1788 = vmul.f32 %v1572, %v1611
        %v1789 = vmul.f32 %v1573, %v1616
        %v1790 = vmul.f32 %v1574, %v1621
        %v1791 = vmul.f32 %v1575, %v1626
        %v1792 = vmul.f32 %v1576, %v1631
        %v1793 = vmul.f32 %v1577, %v1636
        %v1794 = vmul.f32 %v1578, %v1641
        %v1795 = vmul.f32 %v1579, %v1646
        %v1796 = vmul.f32 %v1580, %v1651
        %v1797 = vmul.f32 %v1581, %v1656
        %v1798 = vmul.f32 %v1582, %v1661
        %v1799 = vmul.f32 %v1583, %v1666
        %v1800 = vmul.f32 %v1584, %v1671
        %v1801 = vmul.f32 %v1585, %v1676
        %v1802 = vmul.f32 %v1586, %v1681
        %v1803 = vmul.f32 %v1587, %v1686
        %v1804 = vmul.f32 %v1588, %v1691
        %v1805 = vmul.f32 %v1589, %v1696
        %v1806 = vmul.f32 %v1590, %v1701
        %v1807 = vmul.f32 %v1591, %v1706
        %v1808 = vmul.f32 %v1592, %v1711
        %v1809 = vmul.f32 %v1593, %v1716
        %v1810 = vmul.f32 %v1594, %v1721
        %v1811 = vmul.f32 %v1595, %v1726
        %v1812 = vmul.f32 %v1596, %v1731
        %v1813 = vmul.f32 %v1597, %v1736
        %v1814 = vmul.f32 %v1598, %v1741
        %v1815 = vmul.f32 %v1599, %v1746
        %v1816 = vmul.f32 %v1600, %v1751
        %v1817 = vmul.f32 %v1601, %v1756
        %v1818 = vmul.f32 %v1602, %v1761
        %v1819 = vmul.f32 %v1603, %v1766
        %v1820 = vmul.f32 %v1604, %v1771
        %v1821 = vmul.f32 %v1605, %v1776
        %v1822 = vmul.f32 %v1606, %v1781
        %v1823 = vmul.f32 %v1607, %v1786
        %v1824 = vpack.c.bf16 %v1788, %v1788
        %v1825 = vpack.c.bf16 %v1789, %v1789
        %v1826 = vpack.c.bf16 %v1790, %v1790
        %v1827 = vpack.c.bf16 %v1791, %v1791
        %v1828 = vpack.c.bf16 %v1792, %v1792
        %v1829 = vpack.c.bf16 %v1793, %v1793
        %v1830 = vpack.c.bf16 %v1794, %v1794
        %v1831 = vpack.c.bf16 %v1795, %v1795
        %v1832 = vpack.c.bf16 %v1796, %v1796
        %v1833 = vpack.c.bf16 %v1797, %v1797
        %v1834 = vpack.c.bf16 %v1798, %v1798
        %v1835 = vpack.c.bf16 %v1799, %v1799
        %v1836 = vpack.c.bf16 %v1800, %v1800
        %v1837 = vpack.c.bf16 %v1801, %v1801
        %v1838 = vpack.c.bf16 %v1802, %v1802
        %v1839 = vpack.c.bf16 %v1803, %v1803
        %v1840 = vpack.c.bf16 %v1804, %v1804
        %v1841 = vpack.c.bf16 %v1805, %v1805
        %v1842 = vpack.c.bf16 %v1806, %v1806
        %v1843 = vpack.c.bf16 %v1807, %v1807
        %v1844 = vpack.c.bf16 %v1808, %v1808
        %v1845 = vpack.c.bf16 %v1809, %v1809
        %v1846 = vpack.c.bf16 %v1810, %v1810
        %v1847 = vpack.c.bf16 %v1811, %v1811
        %v1848 = vpack.c.bf16 %v1812, %v1812
        %v1849 = vpack.c.bf16 %v1813, %v1813
        %v1850 = vpack.c.bf16 %v1814, %v1814
        %v1851 = vpack.c.bf16 %v1815, %v1815
        %v1852 = vpack.c.bf16 %v1816, %v1816
        %v1853 = vpack.c.bf16 %v1817, %v1817
        %v1854 = vpack.c.bf16 %v1818, %v1818
        %v1855 = vpack.c.bf16 %v1819, %v1819
        %v1856 = vpack.c.bf16 %v1820, %v1820
        %v1857 = vpack.c.bf16 %v1821, %v1821
        %v1858 = vpack.c.bf16 %v1822, %v1822
        %v1859 = vpack.c.bf16 %v1823, %v1823
        %1860 = vst [vmem:[%s237] sm:$0xf] %v1824
        %1861 = vst [vmem:[%s237 + $0x4] sm:$0xf] %v1825
        %1862 = vst [vmem:[%s237 + $0x8] sm:$0xf] %v1826
        %1863 = vst [vmem:[%s237 + $0xc] sm:$0xf] %v1827
        %1864 = vst [vmem:[%s237 + $0x10] sm:$0xf] %v1828
        %1865 = vst [vmem:[%s237 + $0x14] sm:$0xf] %v1829
        %1866 = vst [vmem:[%s237 + $0x18] sm:$0xf] %v1830
        %1867 = vst [vmem:[%s237 + $0x1c] sm:$0xf] %v1831
        %1868 = vst [vmem:[%s237 + $0x20] sm:$0xf] %v1832
        %1869 = vst [vmem:[%s237 + $0x24] sm:$0xf] %v1833
        %1870 = vst [vmem:[%s237 + $0x28] sm:$0xf] %v1834
        %1871 = vst [vmem:[%s237 + $0x2c] sm:$0xf] %v1835
        %1872 = vst [vmem:[%s237 + $0x30] sm:$0xf] %v1836
        %1873 = vst [vmem:[%s237 + $0x34] sm:$0xf] %v1837
        %1874 = vst [vmem:[%s237 + $0x38] sm:$0xf] %v1838
        %1875 = vst [vmem:[%s237 + $0x3c] sm:$0xf] %v1839
        %1876 = vst [vmem:[%s237 + $0x40] sm:$0xf] %v1840
        %1877 = vst [vmem:[%s237 + $0x44] sm:$0xf] %v1841
        %1878 = vst [vmem:[%s237 + $0x48] sm:$0xf] %v1842
        %1879 = vst [vmem:[%s237 + $0x4c] sm:$0xf] %v1843
        %1880 = vst [vmem:[%s237 + $0x50] sm:$0xf] %v1844
        %1881 = vst [vmem:[%s237 + $0x54] sm:$0xf] %v1845
        %1882 = vst [vmem:[%s237 + $0x58] sm:$0xf] %v1846
        %1883 = vst [vmem:[%s237 + $0x5c] sm:$0xf] %v1847
        %1884 = vst [vmem:[%s237 + $0x60] sm:$0xf] %v1848
        %1885 = vst [vmem:[%s237 + $0x64] sm:$0xf] %v1849
        %1886 = vst [vmem:[%s237 + $0x68] sm:$0xf] %v1850
        %1887 = vst [vmem:[%s237 + $0x6c] sm:$0xf] %v1851
        %1888 = vst [vmem:[%s237 + $0x70] sm:$0xf] %v1852
        %1889 = vst [vmem:[%s237 + $0x74] sm:$0xf] %v1853
        %1890 = vst [vmem:[%s237 + $0x78] sm:$0xf] %v1854
        %1891 = vst [vmem:[%s237 + $0x7c] sm:$0xf] %v1855
        %1892 = vst [vmem:[%s237 + $0x80] sm:$0xf] %v1856
        %1893 = vst [vmem:[%s237 + $0x84] sm:$0xf] %v1857
        %1894 = vst [vmem:[%s237 + $0x88] sm:$0xf] %v1858
        %1895 = vst [vmem:[%s237 + $0x8c] sm:$0xf] %v1859
        %v1896 = vadd.f32 %v1788, %v1789
        %v1897 = vadd.f32 %v1896, %v1790
        %v1898 = vadd.f32 %v1897, %v1791
        %v1899 = vadd.f32 %v1898, %v1792
        %v1900 = vadd.f32 %v1899, %v1793
        %v1901 = vadd.f32 %v1900, %v1794
        %v1902 = vadd.f32 %v1901, %v1795
        %v1903 = vadd.f32 %v1902, %v1796
        %v1904 = vadd.f32 %v1903, %v1797
        %v1905 = vadd.f32 %v1904, %v1798
        %v1906 = vadd.f32 %v1905, %v1799
        %v1907 = vadd.f32 %v1906, %v1800
        %v1908 = vadd.f32 %v1907, %v1801
        %v1909 = vadd.f32 %v1908, %v1802
        %v1910 = vadd.f32 %v1909, %v1803
        %v1911 = vadd.f32 %v1910, %v1804
        %v1912 = vadd.f32 %v1911, %v1805
        %v1913 = vadd.f32 %v1912, %v1806
        %v1914 = vadd.f32 %v1913, %v1807
        %v1915 = vadd.f32 %v1914, %v1808
        %v1916 = vadd.f32 %v1915, %v1809
        %v1917 = vadd.f32 %v1916, %v1810
        %v1918 = vadd.f32 %v1917, %v1811
        %v1919 = vadd.f32 %v1918, %v1812
        %v1920 = vadd.f32 %v1919, %v1813
        %v1921 = vadd.f32 %v1920, %v1814
        %v1922 = vadd.f32 %v1921, %v1815
        %v1923 = vadd.f32 %v1922, %v1816
        %v1924 = vadd.f32 %v1923, %v1817
        %v1925 = vadd.f32 %v1924, %v1818
        %v1926 = vadd.f32 %v1925, %v1819
        %v1927 = vadd.f32 %v1926, %v1820
        %v1928 = vadd.f32 %v1927, %v1821
        %v1929 = vadd.f32 %v1928, %v1822
        %v1930 = vadd.f32 %v1929, %v1823
        %v1931 = vrot.slane %v1930, 4
        %v1932 = vadd.f32 %v1930, %v1931
        %v1933 = vrot.slane %v1932, 2
        %v1934 = vadd.f32 %v1932, %v1933
        %v1935 = vrot.slane %v1934, 1
        %v1936 = vadd.f32 %v1934, %v1935
        %v1937 = vmul.f32 %v1788, %v1788
        %v1938 = vmul.f32 %v1789, %v1789
        %v1939 = vmul.f32 %v1790, %v1790
        %v1940 = vmul.f32 %v1791, %v1791
        %v1941 = vmul.f32 %v1792, %v1792
        %v1942 = vmul.f32 %v1793, %v1793
        %v1943 = vmul.f32 %v1794, %v1794
        %v1944 = vmul.f32 %v1795, %v1795
        %v1945 = vmul.f32 %v1796, %v1796
        %v1946 = vmul.f32 %v1797, %v1797
        %v1947 = vmul.f32 %v1798, %v1798
        %v1948 = vmul.f32 %v1799, %v1799
        %v1949 = vmul.f32 %v1800, %v1800
        %v1950 = vmul.f32 %v1801, %v1801
        %v1951 = vmul.f32 %v1802, %v1802
        %v1952 = vmul.f32 %v1803, %v1803
        %v1953 = vmul.f32 %v1804, %v1804
        %v1954 = vmul.f32 %v1805, %v1805
        %v1955 = vmul.f32 %v1806, %v1806
        %v1956 = vmul.f32 %v1807, %v1807
        %v1957 = vmul.f32 %v1808, %v1808
        %v1958 = vmul.f32 %v1809, %v1809
        %v1959 = vmul.f32 %v1810, %v1810
        %v1960 = vmul.f32 %v1811, %v1811
        %v1961 = vmul.f32 %v1812, %v1812
        %v1962 = vmul.f32 %v1813, %v1813
        %v1963 = vmul.f32 %v1814, %v1814
        %v1964 = vmul.f32 %v1815, %v1815
        %v1965 = vmul.f32 %v1816, %v1816
        %v1966 = vmul.f32 %v1817, %v1817
        %v1967 = vmul.f32 %v1818, %v1818
        %v1968 = vmul.f32 %v1819, %v1819
        %v1969 = vmul.f32 %v1820, %v1820
        %v1970 = vmul.f32 %v1821, %v1821
        %v1971 = vmul.f32 %v1822, %v1822
        %v1972 = vmul.f32 %v1823, %v1823
        %v1973 = vadd.f32 %v1937, %v1938
        %v1974 = vadd.f32 %v1973, %v1939
        %v1975 = vadd.f32 %v1974, %v1940
        %v1976 = vadd.f32 %v1975, %v1941
        %v1977 = vadd.f32 %v1976, %v1942
        %v1978 = vadd.f32 %v1977, %v1943
        %v1979 = vadd.f32 %v1978, %v1944
        %v1980 = vadd.f32 %v1979, %v1945
        %v1981 = vadd.f32 %v1980, %v1946
        %v1982 = vadd.f32 %v1981, %v1947
        %v1983 = vadd.f32 %v1982, %v1948
        %v1984 = vadd.f32 %v1983, %v1949
        %v1985 = vadd.f32 %v1984, %v1950
        %v1986 = vadd.f32 %v1985, %v1951
        %v1987 = vadd.f32 %v1986, %v1952
        %v1988 = vadd.f32 %v1987, %v1953
        %v1989 = vadd.f32 %v1988, %v1954
        %v1990 = vadd.f32 %v1989, %v1955
        %v1991 = vadd.f32 %v1990, %v1956
        %v1992 = vadd.f32 %v1991, %v1957
        %v1993 = vadd.f32 %v1992, %v1958
        %v1994 = vadd.f32 %v1993, %v1959
        %v1995 = vadd.f32 %v1994, %v1960
        %v1996 = vadd.f32 %v1995, %v1961
        %v1997 = vadd.f32 %v1996, %v1962
        %v1998 = vadd.f32 %v1997, %v1963
        %v1999 = vadd.f32 %v1998, %v1964
        %v2000 = vadd.f32 %v1999, %v1965
        %v2001 = vadd.f32 %v2000, %v1966
        %v2002 = vadd.f32 %v2001, %v1967
        %v2003 = vadd.f32 %v2002, %v1968
        %v2004 = vadd.f32 %v2003, %v1969
        %v2005 = vadd.f32 %v2004, %v1970
        %v2006 = vadd.f32 %v2005, %v1971
        %v2007 = vadd.f32 %v2006, %v1972
        %v2008 = vrot.slane %v2007, 4
        %v2009 = vadd.f32 %v2007, %v2008
        %v2010 = vrot.slane %v2009, 2
        %v2011 = vadd.f32 %v2009, %v2010
        %v2012 = vrot.slane %v2011, 1
        %v2013 = vadd.f32 %v2011, %v2012
        %v2014 = vld [vmem:[%s254] sm:$0xf]
        %v2015 = vld [vmem:[%s254 + $0x4] sm:$0xf]
        %v2016 = vld [vmem:[%s254 + $0x8] sm:$0xf]
        %v2017 = vld [vmem:[%s254 + $0xc] sm:$0xf]
        %v2018 = vld [vmem:[%s254 + $0x10] sm:$0xf]
        %v2019 = vld [vmem:[%s254 + $0x14] sm:$0xf]
        %v2020 = vld [vmem:[%s254 + $0x18] sm:$0xf]
        %v2021 = vld [vmem:[%s254 + $0x1c] sm:$0xf]
        %v2022 = vld [vmem:[%s254 + $0x20] sm:$0xf]
        %v2023 = vld [vmem:[%s254 + $0x24] sm:$0xf]
        %v2024 = vld [vmem:[%s254 + $0x28] sm:$0xf]
        %v2025 = vld [vmem:[%s254 + $0x2c] sm:$0xf]
        %v2026 = vld [vmem:[%s254 + $0x30] sm:$0xf]
        %v2027 = vld [vmem:[%s254 + $0x34] sm:$0xf]
        %v2028 = vld [vmem:[%s254 + $0x38] sm:$0xf]
        %v2029 = vld [vmem:[%s254 + $0x3c] sm:$0xf]
        %v2030 = vld [vmem:[%s254 + $0x40] sm:$0xf]
        %v2031 = vld [vmem:[%s254 + $0x44] sm:$0xf]
        %v2032 = vld [vmem:[%s254 + $0x48] sm:$0xf]
        %v2033 = vld [vmem:[%s254 + $0x4c] sm:$0xf]
        %v2034 = vld [vmem:[%s254 + $0x50] sm:$0xf]
        %v2035 = vld [vmem:[%s254 + $0x54] sm:$0xf]
        %v2036 = vld [vmem:[%s254 + $0x58] sm:$0xf]
        %v2037 = vld [vmem:[%s254 + $0x5c] sm:$0xf]
        %v2038 = vld [vmem:[%s254 + $0x60] sm:$0xf]
        %v2039 = vld [vmem:[%s254 + $0x64] sm:$0xf]
        %v2040 = vld [vmem:[%s254 + $0x68] sm:$0xf]
        %v2041 = vld [vmem:[%s254 + $0x6c] sm:$0xf]
        %v2042 = vld [vmem:[%s254 + $0x70] sm:$0xf]
        %v2043 = vld [vmem:[%s254 + $0x74] sm:$0xf]
        %v2044 = vld [vmem:[%s254 + $0x78] sm:$0xf]
        %v2045 = vld [vmem:[%s254 + $0x7c] sm:$0xf]
        %v2046 = vld [vmem:[%s254 + $0x80] sm:$0xf]
        %v2047 = vld [vmem:[%s254 + $0x84] sm:$0xf]
        %v2048 = vld [vmem:[%s254 + $0x88] sm:$0xf]
        %v2049 = vld [vmem:[%s254 + $0x8c] sm:$0xf]
        %v2050 = vld [vmem:[%s254 + $0x90] sm:$0x1]
        %s2051 = scalar_lea.vmem %s1, 8
        %v2052 = vld [vmem:[%s2051] sm:$0x3]
        %v2053 = vld [vmem:[%s254] sm:$0xe]
        %s2054 = scalar_lea.vmem %s1, 10
        %v2055 = vld [vmem:[%s2054] sm:$0x3]
        %v2093 = vunpack.c.l.b16 %v2053
        %v2094 = vunpack.c.l.b16 %v2015
        %v2095 = vunpack.c.l.b16 %v2016
        %v2096 = vunpack.c.l.b16 %v2017
        %v2097 = vunpack.c.l.b16 %v2018
        %v2098 = vunpack.c.l.b16 %v2019
        %v2099 = vunpack.c.l.b16 %v2020
        %v2100 = vunpack.c.l.b16 %v2021
        %v2101 = vunpack.c.l.b16 %v2022
        %v2102 = vunpack.c.l.b16 %v2023
        %v2103 = vunpack.c.l.b16 %v2024
        %v2104 = vunpack.c.l.b16 %v2025
        %v2105 = vunpack.c.l.b16 %v2026
        %v2106 = vunpack.c.l.b16 %v2027
        %v2107 = vunpack.c.l.b16 %v2028
        %v2108 = vunpack.c.l.b16 %v2029
        %v2109 = vunpack.c.l.b16 %v2030
        %v2110 = vunpack.c.l.b16 %v2031
        %v2111 = vunpack.c.l.b16 %v2032
        %v2112 = vunpack.c.l.b16 %v2033
        %v2113 = vunpack.c.l.b16 %v2034
        %v2114 = vunpack.c.l.b16 %v2035
        %v2115 = vunpack.c.l.b16 %v2036
        %v2116 = vunpack.c.l.b16 %v2037
        %v2117 = vunpack.c.l.b16 %v2038
        %v2118 = vunpack.c.l.b16 %v2039
        %v2119 = vunpack.c.l.b16 %v2040
        %v2120 = vunpack.c.l.b16 %v2041
        %v2121 = vunpack.c.l.b16 %v2042
        %v2122 = vunpack.c.l.b16 %v2043
        %v2123 = vunpack.c.l.b16 %v2044
        %v2124 = vunpack.c.l.b16 %v2045
        %v2125 = vunpack.c.l.b16 %v2046
        %v2126 = vunpack.c.l.b16 %v2047
        %v2127 = vunpack.c.l.b16 %v2048
        %v2128 = vunpack.c.l.b16 %v2049
        %v2129 = vunpack.c.l.b16 %v2050
        %v2130 = vpack.c.b16 %v2094, %v2093
        %v2131 = vpack.c.b16 %v2096, %v2095
        %v2132 = vpack.c.b16 %v2098, %v2097
        %v2133 = vpack.c.b16 %v2100, %v2099
        %v2134 = vpack.c.b16 %v2102, %v2101
        %v2135 = vpack.c.b16 %v2104, %v2103
        %v2136 = vpack.c.b16 %v2106, %v2105
        %v2137 = vpack.c.b16 %v2108, %v2107
        %v2138 = vpack.c.b16 %v2110, %v2109
        %v2139 = vpack.c.b16 %v2112, %v2111
        %v2140 = vpack.c.b16 %v2114, %v2113
        %v2141 = vpack.c.b16 %v2116, %v2115
        %v2142 = vpack.c.b16 %v2118, %v2117
        %v2143 = vpack.c.b16 %v2120, %v2119
        %v2144 = vpack.c.b16 %v2122, %v2121
        %v2145 = vpack.c.b16 %v2124, %v2123
        %v2146 = vpack.c.b16 %v2126, %v2125
        %v2147 = vpack.c.b16 %v2128, %v2127
        %v2148 = vpack.c.b16 %v2129, %v2129
        %v2149 = vrot.slane %v2130, 1
        %v2150 = vrot.slane %v2131, 1
        %v2151 = vsel %vm1009, %v2149, %v2150
        %v2152 = vrot.slane %v2132, 1
        %v2153 = vsel %vm1009, %v2150, %v2152
        %v2154 = vrot.slane %v2133, 1
        %v2155 = vsel %vm1009, %v2152, %v2154
        %v2156 = vrot.slane %v2134, 1
        %v2157 = vsel %vm1009, %v2154, %v2156
        %v2158 = vrot.slane %v2135, 1
        %v2159 = vsel %vm1009, %v2156, %v2158
        %v2160 = vrot.slane %v2136, 1
        %v2161 = vsel %vm1009, %v2158, %v2160
        %v2162 = vrot.slane %v2137, 1
        %v2163 = vsel %vm1009, %v2160, %v2162
        %v2164 = vrot.slane %v2138, 1
        %v2165 = vsel %vm1009, %v2162, %v2164
        %v2166 = vrot.slane %v2139, 1
        %v2167 = vsel %vm1009, %v2164, %v2166
        %v2168 = vrot.slane %v2140, 1
        %v2169 = vsel %vm1009, %v2166, %v2168
        %v2170 = vrot.slane %v2141, 1
        %v2171 = vsel %vm1009, %v2168, %v2170
        %v2172 = vrot.slane %v2142, 1
        %v2173 = vsel %vm1009, %v2170, %v2172
        %v2174 = vrot.slane %v2143, 1
        %v2175 = vsel %vm1009, %v2172, %v2174
        %v2176 = vrot.slane %v2144, 1
        %v2177 = vsel %vm1009, %v2174, %v2176
        %v2178 = vrot.slane %v2145, 1
        %v2179 = vsel %vm1009, %v2176, %v2178
        %v2180 = vrot.slane %v2146, 1
        %v2181 = vsel %vm1009, %v2178, %v2180
        %v2182 = vrot.slane %v2147, 1
        %v2183 = vsel %vm1009, %v2180, %v2182
        %v2184 = vrot.slane %v2148, 1
        %v2185 = vsel %vm1009, %v2182, %v2184
        %v2187 = vsel %vm581, %v2151, 0
        %v2190 = vsel %vm581, %v2153, 0
        %v2193 = vsel %vm581, %v2155, 0
        %v2196 = vsel %vm581, %v2157, 0
        %v2199 = vsel %vm581, %v2159, 0
        %v2202 = vsel %vm581, %v2161, 0
        %v2205 = vsel %vm581, %v2163, 0
        %v2208 = vsel %vm581, %v2165, 0
        %v2211 = vsel %vm581, %v2167, 0
        %v2214 = vsel %vm581, %v2169, 0
        %v2217 = vsel %vm581, %v2171, 0
        %v2220 = vsel %vm581, %v2173, 0
        %v2223 = vsel %vm581, %v2175, 0
        %v2226 = vsel %vm581, %v2177, 0
        %v2229 = vsel %vm581, %v2179, 0
        %v2232 = vsel %vm581, %v2181, 0
        %v2235 = vsel %vm581, %v2183, 0
        %v2238 = vsel %vm581, %v2185, 0
        %v2241 = vsel %vm636, %v2055, 0
        %2243 = vmatpush.bf16.msra.mxu0 0
        %2244 = vmatpush.bf16.msra.mxu0 0
        %2245 = vmatpush.bf16.msra.mxu0 0
        %2246 = vmatpush.bf16.msra.mxu0 0
        %2247 = vmatpush.bf16.msra.mxu0 0
        %2248 = vmatpush.bf16.msra.mxu0 0
        %2249 = vmatpush.bf16.msra.mxu0 0
        %2250 = vmatpush.bf16.msra.mxu0 %v2241
        %2251 = vmatmul.bf16.gmra.mxu0 %v2187
        %v2252 = vpop.f32.mrf.mxu0
        %v2253 = vadd.f32 0.0, %v2252
        %v2254 = vpop.f32.mrf.mxu0
        %v2255 = vadd.f32 0.0, %v2254
        %2256 = vmatmul.bf16.gmra.mxu0 %v2190
        %v2257 = vpop.f32.mrf.mxu0
        %v2258 = vadd.f32 0.0, %v2257
        %v2259 = vpop.f32.mrf.mxu0
        %v2260 = vadd.f32 0.0, %v2259
        %2261 = vmatmul.bf16.gmra.mxu0 %v2193
        %v2262 = vpop.f32.mrf.mxu0
        %v2263 = vadd.f32 0.0, %v2262
        %v2264 = vpop.f32.mrf.mxu0
        %v2265 = vadd.f32 0.0, %v2264
        %2266 = vmatmul.bf16.gmra.mxu0 %v2196
        %v2267 = vpop.f32.mrf.mxu0
        %v2268 = vadd.f32 0.0, %v2267
        %v2269 = vpop.f32.mrf.mxu0
        %v2270 = vadd.f32 0.0, %v2269
        %2271 = vmatmul.bf16.gmra.mxu0 %v2199
        %v2272 = vpop.f32.mrf.mxu0
        %v2273 = vadd.f32 0.0, %v2272
        %v2274 = vpop.f32.mrf.mxu0
        %v2275 = vadd.f32 0.0, %v2274
        %2276 = vmatmul.bf16.gmra.mxu0 %v2202
        %v2277 = vpop.f32.mrf.mxu0
        %v2278 = vadd.f32 0.0, %v2277
        %v2279 = vpop.f32.mrf.mxu0
        %v2280 = vadd.f32 0.0, %v2279
        %2281 = vmatmul.bf16.gmra.mxu0 %v2205
        %v2282 = vpop.f32.mrf.mxu0
        %v2283 = vadd.f32 0.0, %v2282
        %v2284 = vpop.f32.mrf.mxu0
        %v2285 = vadd.f32 0.0, %v2284
        %2286 = vmatmul.bf16.gmra.mxu0 %v2208
        %v2287 = vpop.f32.mrf.mxu0
        %v2288 = vadd.f32 0.0, %v2287
        %v2289 = vpop.f32.mrf.mxu0
        %v2290 = vadd.f32 0.0, %v2289
        %2291 = vmatmul.bf16.gmra.mxu0 %v2211
        %v2292 = vpop.f32.mrf.mxu0
        %v2293 = vadd.f32 0.0, %v2292
        %v2294 = vpop.f32.mrf.mxu0
        %v2295 = vadd.f32 0.0, %v2294
        %2296 = vmatmul.bf16.gmra.mxu0 %v2214
        %v2297 = vpop.f32.mrf.mxu0
        %v2298 = vadd.f32 0.0, %v2297
        %v2299 = vpop.f32.mrf.mxu0
        %v2300 = vadd.f32 0.0, %v2299
        %2301 = vmatmul.bf16.gmra.mxu0 %v2217
        %v2302 = vpop.f32.mrf.mxu0
        %v2303 = vadd.f32 0.0, %v2302
        %v2304 = vpop.f32.mrf.mxu0
        %v2305 = vadd.f32 0.0, %v2304
        %2306 = vmatmul.bf16.gmra.mxu0 %v2220
        %v2307 = vpop.f32.mrf.mxu0
        %v2308 = vadd.f32 0.0, %v2307
        %v2309 = vpop.f32.mrf.mxu0
        %v2310 = vadd.f32 0.0, %v2309
        %2311 = vmatmul.bf16.gmra.mxu0 %v2223
        %v2312 = vpop.f32.mrf.mxu0
        %v2313 = vadd.f32 0.0, %v2312
        %v2314 = vpop.f32.mrf.mxu0
        %v2315 = vadd.f32 0.0, %v2314
        %2316 = vmatmul.bf16.gmra.mxu0 %v2226
        %v2317 = vpop.f32.mrf.mxu0
        %v2318 = vadd.f32 0.0, %v2317
        %v2319 = vpop.f32.mrf.mxu0
        %v2320 = vadd.f32 0.0, %v2319
        %2321 = vmatmul.bf16.gmra.mxu0 %v2229
        %v2322 = vpop.f32.mrf.mxu0
        %v2323 = vadd.f32 0.0, %v2322
        %v2324 = vpop.f32.mrf.mxu0
        %v2325 = vadd.f32 0.0, %v2324
        %2326 = vmatmul.bf16.gmra.mxu0 %v2232
        %v2327 = vpop.f32.mrf.mxu0
        %v2328 = vadd.f32 0.0, %v2327
        %v2329 = vpop.f32.mrf.mxu0
        %v2330 = vadd.f32 0.0, %v2329
        %2331 = vmatmul.bf16.gmra.mxu0 %v2235
        %v2332 = vpop.f32.mrf.mxu0
        %v2333 = vadd.f32 0.0, %v2332
        %v2334 = vpop.f32.mrf.mxu0
        %v2335 = vadd.f32 0.0, %v2334
        %2336 = vmatmul.bf16.gmra.mxu0 %v2238
        %v2337 = vpop.f32.mrf.mxu0
        %v2338 = vadd.f32 0.0, %v2337
        %v2339 = vpop.f32.mrf.mxu0
        %v2340 = vadd.f32 0.0, %v2339
        %2341 = vdwg.mxu0
        %v2343 = vunpack.c.l.b16 %v2014
        %v2344 = vpack.c.b16 %v2094, %v2343
        %v2346 = vshrl.u32 %v2344, 16
        %v2348 = vshll.u32 %v2344, 16
        %v2350 = vrot.slane %v2348, 1
        %v2351 = vor.u32 %v2346, %v2350
        %v2353 = vshll.u32 %v2131, 16
        %v2355 = vrot.slane %v2353, 1
        %v2356 = vsel %vm432, %v2351, %v2355
        %v2357 = vshrl.u32 %v2131, 16
        %v2359 = vor.u32 %v2357, %v2355
        %v2361 = vshll.u32 %v2132, 16
        %v2363 = vrot.slane %v2361, 1
        %v2364 = vsel %vm432, %v2359, %v2363
        %v2365 = vshrl.u32 %v2132, 16
        %v2367 = vor.u32 %v2365, %v2363
        %v2369 = vshll.u32 %v2133, 16
        %v2371 = vrot.slane %v2369, 1
        %v2372 = vsel %vm432, %v2367, %v2371
        %v2373 = vshrl.u32 %v2133, 16
        %v2375 = vor.u32 %v2373, %v2371
        %v2377 = vshll.u32 %v2134, 16
        %v2379 = vrot.slane %v2377, 1
        %v2380 = vsel %vm432, %v2375, %v2379
        %v2381 = vshrl.u32 %v2134, 16
        %v2383 = vor.u32 %v2381, %v2379
        %v2385 = vshll.u32 %v2135, 16
        %v2387 = vrot.slane %v2385, 1
        %v2388 = vsel %vm432, %v2383, %v2387
        %v2389 = vshrl.u32 %v2135, 16
        %v2391 = vor.u32 %v2389, %v2387
        %v2393 = vshll.u32 %v2136, 16
        %v2395 = vrot.slane %v2393, 1
        %v2396 = vsel %vm432, %v2391, %v2395
        %v2397 = vshrl.u32 %v2136, 16
        %v2399 = vor.u32 %v2397, %v2395
        %v2401 = vshll.u32 %v2137, 16
        %v2403 = vrot.slane %v2401, 1
        %v2404 = vsel %vm432, %v2399, %v2403
        %v2405 = vshrl.u32 %v2137, 16
        %v2407 = vor.u32 %v2405, %v2403
        %v2409 = vshll.u32 %v2138, 16
        %v2411 = vrot.slane %v2409, 1
        %v2412 = vsel %vm432, %v2407, %v2411
        %v2413 = vshrl.u32 %v2138, 16
        %v2415 = vor.u32 %v2413, %v2411
        %v2417 = vshll.u32 %v2139, 16
        %v2419 = vrot.slane %v2417, 1
        %v2420 = vsel %vm432, %v2415, %v2419
        %v2421 = vshrl.u32 %v2139, 16
        %v2423 = vor.u32 %v2421, %v2419
        %v2425 = vshll.u32 %v2140, 16
        %v2427 = vrot.slane %v2425, 1
        %v2428 = vsel %vm432, %v2423, %v2427
        %v2429 = vshrl.u32 %v2140, 16
        %v2431 = vor.u32 %v2429, %v2427
        %v2433 = vshll.u32 %v2141, 16
        %v2435 = vrot.slane %v2433, 1
        %v2436 = vsel %vm432, %v2431, %v2435
        %v2437 = vshrl.u32 %v2141, 16
        %v2439 = vor.u32 %v2437, %v2435
        %v2441 = vshll.u32 %v2142, 16
        %v2443 = vrot.slane %v2441, 1
        %v2444 = vsel %vm432, %v2439, %v2443
        %v2445 = vshrl.u32 %v2142, 16
        %v2447 = vor.u32 %v2445, %v2443
        %v2449 = vshll.u32 %v2143, 16
        %v2451 = vrot.slane %v2449, 1
        %v2452 = vsel %vm432, %v2447, %v2451
        %v2453 = vshrl.u32 %v2143, 16
        %v2455 = vor.u32 %v2453, %v2451
        %v2457 = vshll.u32 %v2144, 16
        %v2459 = vrot.slane %v2457, 1
        %v2460 = vsel %vm432, %v2455, %v2459
        %v2461 = vshrl.u32 %v2144, 16
        %v2463 = vor.u32 %v2461, %v2459
        %v2465 = vshll.u32 %v2145, 16
        %v2467 = vrot.slane %v2465, 1
        %v2468 = vsel %vm432, %v2463, %v2467
        %v2469 = vshrl.u32 %v2145, 16
        %v2471 = vor.u32 %v2469, %v2467
        %v2473 = vshll.u32 %v2146, 16
        %v2475 = vrot.slane %v2473, 1
        %v2476 = vsel %vm432, %v2471, %v2475
        %v2477 = vshrl.u32 %v2146, 16
        %v2479 = vor.u32 %v2477, %v2475
        %v2481 = vshll.u32 %v2147, 16
        %v2483 = vrot.slane %v2481, 1
        %v2484 = vsel %vm432, %v2479, %v2483
        %v2485 = vshrl.u32 %v2147, 16
        %v2487 = vor.u32 %v2485, %v2483
        %v2489 = vshll.u32 %v2148, 16
        %v2491 = vrot.slane %v2489, 1
        %v2492 = vsel %vm432, %v2487, %v2491
        %v2494 = vsel %vm581, %v2356, 0
        %v2497 = vsel %vm581, %v2364, 0
        %v2500 = vsel %vm581, %v2372, 0
        %v2503 = vsel %vm581, %v2380, 0
        %v2506 = vsel %vm581, %v2388, 0
        %v2509 = vsel %vm581, %v2396, 0
        %v2512 = vsel %vm581, %v2404, 0
        %v2515 = vsel %vm581, %v2412, 0
        %v2518 = vsel %vm581, %v2420, 0
        %v2521 = vsel %vm581, %v2428, 0
        %v2524 = vsel %vm581, %v2436, 0
        %v2527 = vsel %vm581, %v2444, 0
        %v2530 = vsel %vm581, %v2452, 0
        %v2533 = vsel %vm581, %v2460, 0
        %v2536 = vsel %vm581, %v2468, 0
        %v2539 = vsel %vm581, %v2476, 0
        %v2542 = vsel %vm581, %v2484, 0
        %v2545 = vsel %vm581, %v2492, 0
        %v2548 = vsel %vm636, %v2052, 0
        %2550 = vmatpush.bf16.msra.mxu0 0
        %2551 = vmatpush.bf16.msra.mxu0 0
        %2552 = vmatpush.bf16.msra.mxu0 0
        %2553 = vmatpush.bf16.msra.mxu0 0
        %2554 = vmatpush.bf16.msra.mxu0 0
        %2555 = vmatpush.bf16.msra.mxu0 0
        %2556 = vmatpush.bf16.msra.mxu0 0
        %2557 = vmatpush.bf16.msra.mxu0 %v2548
        %2558 = vmatmul.bf16.gmra.mxu0 %v2494
        %v2559 = vpop.f32.mrf.mxu0
        %v2560 = vadd.f32 %v2253, %v2559
        %v2561 = vpop.f32.mrf.mxu0
        %v2562 = vadd.f32 %v2255, %v2561
        %2563 = vmatmul.bf16.gmra.mxu0 %v2497
        %v2564 = vpop.f32.mrf.mxu0
        %v2565 = vadd.f32 %v2258, %v2564
        %v2566 = vpop.f32.mrf.mxu0
        %v2567 = vadd.f32 %v2260, %v2566
        %2568 = vmatmul.bf16.gmra.mxu0 %v2500
        %v2569 = vpop.f32.mrf.mxu0
        %v2570 = vadd.f32 %v2263, %v2569
        %v2571 = vpop.f32.mrf.mxu0
        %v2572 = vadd.f32 %v2265, %v2571
        %2573 = vmatmul.bf16.gmra.mxu0 %v2503
        %v2574 = vpop.f32.mrf.mxu0
        %v2575 = vadd.f32 %v2268, %v2574
        %v2576 = vpop.f32.mrf.mxu0
        %v2577 = vadd.f32 %v2270, %v2576
        %2578 = vmatmul.bf16.gmra.mxu0 %v2506
        %v2579 = vpop.f32.mrf.mxu0
        %v2580 = vadd.f32 %v2273, %v2579
        %v2581 = vpop.f32.mrf.mxu0
        %v2582 = vadd.f32 %v2275, %v2581
        %2583 = vmatmul.bf16.gmra.mxu0 %v2509
        %v2584 = vpop.f32.mrf.mxu0
        %v2585 = vadd.f32 %v2278, %v2584
        %v2586 = vpop.f32.mrf.mxu0
        %v2587 = vadd.f32 %v2280, %v2586
        %2588 = vmatmul.bf16.gmra.mxu0 %v2512
        %v2589 = vpop.f32.mrf.mxu0
        %v2590 = vadd.f32 %v2283, %v2589
        %v2591 = vpop.f32.mrf.mxu0
        %v2592 = vadd.f32 %v2285, %v2591
        %2593 = vmatmul.bf16.gmra.mxu0 %v2515
        %v2594 = vpop.f32.mrf.mxu0
        %v2595 = vadd.f32 %v2288, %v2594
        %v2596 = vpop.f32.mrf.mxu0
        %v2597 = vadd.f32 %v2290, %v2596
        %2598 = vmatmul.bf16.gmra.mxu0 %v2518
        %v2599 = vpop.f32.mrf.mxu0
        %v2600 = vadd.f32 %v2293, %v2599
        %v2601 = vpop.f32.mrf.mxu0
        %v2602 = vadd.f32 %v2295, %v2601
        %2603 = vmatmul.bf16.gmra.mxu0 %v2521
        %v2604 = vpop.f32.mrf.mxu0
        %v2605 = vadd.f32 %v2298, %v2604
        %v2606 = vpop.f32.mrf.mxu0
        %v2607 = vadd.f32 %v2300, %v2606
        %2608 = vmatmul.bf16.gmra.mxu0 %v2524
        %v2609 = vpop.f32.mrf.mxu0
        %v2610 = vadd.f32 %v2303, %v2609
        %v2611 = vpop.f32.mrf.mxu0
        %v2612 = vadd.f32 %v2305, %v2611
        %2613 = vmatmul.bf16.gmra.mxu0 %v2527
        %v2614 = vpop.f32.mrf.mxu0
        %v2615 = vadd.f32 %v2308, %v2614
        %v2616 = vpop.f32.mrf.mxu0
        %v2617 = vadd.f32 %v2310, %v2616
        %2618 = vmatmul.bf16.gmra.mxu0 %v2530
        %v2619 = vpop.f32.mrf.mxu0
        %v2620 = vadd.f32 %v2313, %v2619
        %v2621 = vpop.f32.mrf.mxu0
        %v2622 = vadd.f32 %v2315, %v2621
        %2623 = vmatmul.bf16.gmra.mxu0 %v2533
        %v2624 = vpop.f32.mrf.mxu0
        %v2625 = vadd.f32 %v2318, %v2624
        %v2626 = vpop.f32.mrf.mxu0
        %v2627 = vadd.f32 %v2320, %v2626
        %2628 = vmatmul.bf16.gmra.mxu0 %v2536
        %v2629 = vpop.f32.mrf.mxu0
        %v2630 = vadd.f32 %v2323, %v2629
        %v2631 = vpop.f32.mrf.mxu0
        %v2632 = vadd.f32 %v2325, %v2631
        %2633 = vmatmul.bf16.gmra.mxu0 %v2539
        %v2634 = vpop.f32.mrf.mxu0
        %v2635 = vadd.f32 %v2328, %v2634
        %v2636 = vpop.f32.mrf.mxu0
        %v2637 = vadd.f32 %v2330, %v2636
        %2638 = vmatmul.bf16.gmra.mxu0 %v2542
        %v2639 = vpop.f32.mrf.mxu0
        %v2640 = vadd.f32 %v2333, %v2639
        %v2641 = vpop.f32.mrf.mxu0
        %v2642 = vadd.f32 %v2335, %v2641
        %2643 = vmatmul.bf16.gmra.mxu0 %v2545
        %v2644 = vpop.f32.mrf.mxu0
        %v2645 = vadd.f32 %v2338, %v2644
        %v2646 = vpop.f32.mrf.mxu0
        %v2647 = vadd.f32 %v2340, %v2646
        %2648 = vdwg.mxu0
        %v2649 = vld [vmem:[%s254 + $0x8] sm:$0xe]
        %v2650 = vld [vmem:[%s254 + $0xc] sm:$0xf]
        %v2651 = vld [vmem:[%s254 + $0x10] sm:$0xf]
        %v2652 = vld [vmem:[%s254 + $0x14] sm:$0xf]
        %v2653 = vld [vmem:[%s254 + $0x18] sm:$0xf]
        %v2654 = vld [vmem:[%s254 + $0x1c] sm:$0xf]
        %v2655 = vld [vmem:[%s254 + $0x20] sm:$0xf]
        %v2656 = vld [vmem:[%s254 + $0x24] sm:$0xf]
        %v2657 = vld [vmem:[%s254 + $0x28] sm:$0xf]
        %v2658 = vld [vmem:[%s254 + $0x2c] sm:$0xf]
        %v2659 = vld [vmem:[%s254 + $0x30] sm:$0xf]
        %v2660 = vld [vmem:[%s254 + $0x34] sm:$0xf]
        %v2661 = vld [vmem:[%s254 + $0x38] sm:$0xf]
        %v2662 = vld [vmem:[%s254 + $0x3c] sm:$0xf]
        %v2663 = vld [vmem:[%s254 + $0x40] sm:$0xf]
        %v2664 = vld [vmem:[%s254 + $0x44] sm:$0xf]
        %v2665 = vld [vmem:[%s254 + $0x48] sm:$0xf]
        %v2666 = vld [vmem:[%s254 + $0x4c] sm:$0xf]
        %v2667 = vld [vmem:[%s254 + $0x50] sm:$0xf]
        %v2668 = vld [vmem:[%s254 + $0x54] sm:$0xf]
        %v2669 = vld [vmem:[%s254 + $0x58] sm:$0xf]
        %v2670 = vld [vmem:[%s254 + $0x5c] sm:$0xf]
        %v2671 = vld [vmem:[%s254 + $0x60] sm:$0xf]
        %v2672 = vld [vmem:[%s254 + $0x64] sm:$0xf]
        %v2673 = vld [vmem:[%s254 + $0x68] sm:$0xf]
        %v2674 = vld [vmem:[%s254 + $0x6c] sm:$0xf]
        %v2675 = vld [vmem:[%s254 + $0x70] sm:$0xf]
        %v2676 = vld [vmem:[%s254 + $0x74] sm:$0xf]
        %v2677 = vld [vmem:[%s254 + $0x78] sm:$0xf]
        %v2678 = vld [vmem:[%s254 + $0x7c] sm:$0xf]
        %v2679 = vld [vmem:[%s254 + $0x80] sm:$0xf]
        %v2680 = vld [vmem:[%s254 + $0x84] sm:$0xf]
        %v2681 = vld [vmem:[%s254 + $0x88] sm:$0xf]
        %v2682 = vld [vmem:[%s254 + $0x8c] sm:$0xf]
        %v2683 = vld [vmem:[%s254 + $0x90] sm:$0xf]
        %v2684 = vld [vmem:[%s254 + $0x94] sm:$0xf]
        %v2685 = vld [vmem:[%s254 + $0x98] sm:$0x3]
        %s2686 = scalar_lea.vmem %s1, 12
        %v2687 = vld [vmem:[%s2686] sm:$0x3]
        %v2725 = vunpack.c.l.b16 %v2649
        %v2726 = vunpack.c.l.b16 %v2650
        %v2727 = vunpack.c.l.b16 %v2651
        %v2728 = vunpack.c.l.b16 %v2652
        %v2729 = vunpack.c.l.b16 %v2653
        %v2730 = vunpack.c.l.b16 %v2654
        %v2731 = vunpack.c.l.b16 %v2655
        %v2732 = vunpack.c.l.b16 %v2656
        %v2733 = vunpack.c.l.b16 %v2657
        %v2734 = vunpack.c.l.b16 %v2658
        %v2735 = vunpack.c.l.b16 %v2659
        %v2736 = vunpack.c.l.b16 %v2660
        %v2737 = vunpack.c.l.b16 %v2661
        %v2738 = vunpack.c.l.b16 %v2662
        %v2739 = vunpack.c.l.b16 %v2663
        %v2740 = vunpack.c.l.b16 %v2664
        %v2741 = vunpack.c.l.b16 %v2665
        %v2742 = vunpack.c.l.b16 %v2666
        %v2743 = vunpack.c.l.b16 %v2667
        %v2744 = vunpack.c.l.b16 %v2668
        %v2745 = vunpack.c.l.b16 %v2669
        %v2746 = vunpack.c.l.b16 %v2670
        %v2747 = vunpack.c.l.b16 %v2671
        %v2748 = vunpack.c.l.b16 %v2672
        %v2749 = vunpack.c.l.b16 %v2673
        %v2750 = vunpack.c.l.b16 %v2674
        %v2751 = vunpack.c.l.b16 %v2675
        %v2752 = vunpack.c.l.b16 %v2676
        %v2753 = vunpack.c.l.b16 %v2677
        %v2754 = vunpack.c.l.b16 %v2678
        %v2755 = vunpack.c.l.b16 %v2679
        %v2756 = vunpack.c.l.b16 %v2680
        %v2757 = vunpack.c.l.b16 %v2681
        %v2758 = vunpack.c.l.b16 %v2682
        %v2759 = vunpack.c.l.b16 %v2683
        %v2760 = vunpack.c.l.b16 %v2684
        %v2761 = vunpack.c.l.b16 %v2685
        %v2762 = vpack.c.b16 %v2726, %v2725
        %v2763 = vpack.c.b16 %v2728, %v2727
        %v2764 = vpack.c.b16 %v2730, %v2729
        %v2765 = vpack.c.b16 %v2732, %v2731
        %v2766 = vpack.c.b16 %v2734, %v2733
        %v2767 = vpack.c.b16 %v2736, %v2735
        %v2768 = vpack.c.b16 %v2738, %v2737
        %v2769 = vpack.c.b16 %v2740, %v2739
        %v2770 = vpack.c.b16 %v2742, %v2741
        %v2771 = vpack.c.b16 %v2744, %v2743
        %v2772 = vpack.c.b16 %v2746, %v2745
        %v2773 = vpack.c.b16 %v2748, %v2747
        %v2774 = vpack.c.b16 %v2750, %v2749
        %v2775 = vpack.c.b16 %v2752, %v2751
        %v2776 = vpack.c.b16 %v2754, %v2753
        %v2777 = vpack.c.b16 %v2756, %v2755
        %v2778 = vpack.c.b16 %v2758, %v2757
        %v2779 = vpack.c.b16 %v2760, %v2759
        %v2780 = vpack.c.b16 %v2761, %v2761
        %v2782 = vshrl.u32 %v2762, 16
        %v2784 = vrot.slane %v2782, 1
        %v2785 = vshll.u32 %v2762, 16
        %v2787 = vrot.slane %v2785, 2
        %v2788 = vor.u32 %v2784, %v2787
        %v2790 = vshrl.u32 %v2763, 16
        %v2792 = vrot.slane %v2790, 1
        %v2793 = vshll.u32 %v2763, 16
        %v2795 = vrot.slane %v2793, 2
        %v2796 = vor.u32 %v2792, %v2795
        %v2797 = vsel %vm1245, %v2788, %v2796
        %v2799 = vshrl.u32 %v2764, 16
        %v2801 = vrot.slane %v2799, 1
        %v2802 = vshll.u32 %v2764, 16
        %v2804 = vrot.slane %v2802, 2
        %v2805 = vor.u32 %v2801, %v2804
        %v2806 = vsel %vm1245, %v2796, %v2805
        %v2808 = vshrl.u32 %v2765, 16
        %v2810 = vrot.slane %v2808, 1
        %v2811 = vshll.u32 %v2765, 16
        %v2813 = vrot.slane %v2811, 2
        %v2814 = vor.u32 %v2810, %v2813
        %v2815 = vsel %vm1245, %v2805, %v2814
        %v2817 = vshrl.u32 %v2766, 16
        %v2819 = vrot.slane %v2817, 1
        %v2820 = vshll.u32 %v2766, 16
        %v2822 = vrot.slane %v2820, 2
        %v2823 = vor.u32 %v2819, %v2822
        %v2824 = vsel %vm1245, %v2814, %v2823
        %v2826 = vshrl.u32 %v2767, 16
        %v2828 = vrot.slane %v2826, 1
        %v2829 = vshll.u32 %v2767, 16
        %v2831 = vrot.slane %v2829, 2
        %v2832 = vor.u32 %v2828, %v2831
        %v2833 = vsel %vm1245, %v2823, %v2832
        %v2835 = vshrl.u32 %v2768, 16
        %v2837 = vrot.slane %v2835, 1
        %v2838 = vshll.u32 %v2768, 16
        %v2840 = vrot.slane %v2838, 2
        %v2841 = vor.u32 %v2837, %v2840
        %v2842 = vsel %vm1245, %v2832, %v2841
        %v2844 = vshrl.u32 %v2769, 16
        %v2846 = vrot.slane %v2844, 1
        %v2847 = vshll.u32 %v2769, 16
        %v2849 = vrot.slane %v2847, 2
        %v2850 = vor.u32 %v2846, %v2849
        %v2851 = vsel %vm1245, %v2841, %v2850
        %v2853 = vshrl.u32 %v2770, 16
        %v2855 = vrot.slane %v2853, 1
        %v2856 = vshll.u32 %v2770, 16
        %v2858 = vrot.slane %v2856, 2
        %v2859 = vor.u32 %v2855, %v2858
        %v2860 = vsel %vm1245, %v2850, %v2859
        %v2862 = vshrl.u32 %v2771, 16
        %v2864 = vrot.slane %v2862, 1
        %v2865 = vshll.u32 %v2771, 16
        %v2867 = vrot.slane %v2865, 2
        %v2868 = vor.u32 %v2864, %v2867
        %v2869 = vsel %vm1245, %v2859, %v2868
        %v2871 = vshrl.u32 %v2772, 16
        %v2873 = vrot.slane %v2871, 1
        %v2874 = vshll.u32 %v2772, 16
        %v2876 = vrot.slane %v2874, 2
        %v2877 = vor.u32 %v2873, %v2876
        %v2878 = vsel %vm1245, %v2868, %v2877
        %v2880 = vshrl.u32 %v2773, 16
        %v2882 = vrot.slane %v2880, 1
        %v2883 = vshll.u32 %v2773, 16
        %v2885 = vrot.slane %v2883, 2
        %v2886 = vor.u32 %v2882, %v2885
        %v2887 = vsel %vm1245, %v2877, %v2886
        %v2889 = vshrl.u32 %v2774, 16
        %v2891 = vrot.slane %v2889, 1
        %v2892 = vshll.u32 %v2774, 16
        %v2894 = vrot.slane %v2892, 2
        %v2895 = vor.u32 %v2891, %v2894
        %v2896 = vsel %vm1245, %v2886, %v2895
        %v2898 = vshrl.u32 %v2775, 16
        %v2900 = vrot.slane %v2898, 1
        %v2901 = vshll.u32 %v2775, 16
        %v2903 = vrot.slane %v2901, 2
        %v2904 = vor.u32 %v2900, %v2903
        %v2905 = vsel %vm1245, %v2895, %v2904
        %v2907 = vshrl.u32 %v2776, 16
        %v2909 = vrot.slane %v2907, 1
        %v2910 = vshll.u32 %v2776, 16
        %v2912 = vrot.slane %v2910, 2
        %v2913 = vor.u32 %v2909, %v2912
        %v2914 = vsel %vm1245, %v2904, %v2913
        %v2916 = vshrl.u32 %v2777, 16
        %v2918 = vrot.slane %v2916, 1
        %v2919 = vshll.u32 %v2777, 16
        %v2921 = vrot.slane %v2919, 2
        %v2922 = vor.u32 %v2918, %v2921
        %v2923 = vsel %vm1245, %v2913, %v2922
        %v2925 = vshrl.u32 %v2778, 16
        %v2927 = vrot.slane %v2925, 1
        %v2928 = vshll.u32 %v2778, 16
        %v2930 = vrot.slane %v2928, 2
        %v2931 = vor.u32 %v2927, %v2930
        %v2932 = vsel %vm1245, %v2922, %v2931
        %v2934 = vshrl.u32 %v2779, 16
        %v2936 = vrot.slane %v2934, 1
        %v2937 = vshll.u32 %v2779, 16
        %v2939 = vrot.slane %v2937, 2
        %v2940 = vor.u32 %v2936, %v2939
        %v2941 = vsel %vm1245, %v2931, %v2940
        %v2943 = vshrl.u32 %v2780, 16
        %v2945 = vrot.slane %v2943, 1
        %v2946 = vshll.u32 %v2780, 16
        %v2948 = vrot.slane %v2946, 2
        %v2949 = vor.u32 %v2945, %v2948
        %v2950 = vsel %vm1245, %v2940, %v2949
        %v2952 = vsel %vm581, %v2797, 0
        %v2955 = vsel %vm581, %v2806, 0
        %v2958 = vsel %vm581, %v2815, 0
        %v2961 = vsel %vm581, %v2824, 0
        %v2964 = vsel %vm581, %v2833, 0
        %v2967 = vsel %vm581, %v2842, 0
        %v2970 = vsel %vm581, %v2851, 0
        %v2973 = vsel %vm581, %v2860, 0
        %v2976 = vsel %vm581, %v2869, 0
        %v2979 = vsel %vm581, %v2878, 0
        %v2982 = vsel %vm581, %v2887, 0
        %v2985 = vsel %vm581, %v2896, 0
        %v2988 = vsel %vm581, %v2905, 0
        %v2991 = vsel %vm581, %v2914, 0
        %v2994 = vsel %vm581, %v2923, 0
        %v2997 = vsel %vm581, %v2932, 0
        %v3000 = vsel %vm581, %v2941, 0
        %v3003 = vsel %vm581, %v2950, 0
        %v3006 = vsel %vm636, %v2687, 0
        %3008 = vmatpush.bf16.msra.mxu0 0
        %3009 = vmatpush.bf16.msra.mxu0 0
        %3010 = vmatpush.bf16.msra.mxu0 0
        %3011 = vmatpush.bf16.msra.mxu0 0
        %3012 = vmatpush.bf16.msra.mxu0 0
        %3013 = vmatpush.bf16.msra.mxu0 0
        %3014 = vmatpush.bf16.msra.mxu0 0
        %3015 = vmatpush.bf16.msra.mxu0 %v3006
        %3016 = vmatmul.bf16.gmra.mxu0 %v2952
        %v3017 = vpop.f32.mrf.mxu0
        %v3018 = vadd.f32 0.0, %v3017
        %v3019 = vpop.f32.mrf.mxu0
        %v3020 = vadd.f32 0.0, %v3019
        %3021 = vmatmul.bf16.gmra.mxu0 %v2955
        %v3022 = vpop.f32.mrf.mxu0
        %v3023 = vadd.f32 0.0, %v3022
        %v3024 = vpop.f32.mrf.mxu0
        %v3025 = vadd.f32 0.0, %v3024
        %3026 = vmatmul.bf16.gmra.mxu0 %v2958
        %v3027 = vpop.f32.mrf.mxu0
        %v3028 = vadd.f32 0.0, %v3027
        %v3029 = vpop.f32.mrf.mxu0
        %v3030 = vadd.f32 0.0, %v3029
        %3031 = vmatmul.bf16.gmra.mxu0 %v2961
        %v3032 = vpop.f32.mrf.mxu0
        %v3033 = vadd.f32 0.0, %v3032
        %v3034 = vpop.f32.mrf.mxu0
        %v3035 = vadd.f32 0.0, %v3034
        %3036 = vmatmul.bf16.gmra.mxu0 %v2964
        %v3037 = vpop.f32.mrf.mxu0
        %v3038 = vadd.f32 0.0, %v3037
        %v3039 = vpop.f32.mrf.mxu0
        %v3040 = vadd.f32 0.0, %v3039
        %3041 = vmatmul.bf16.gmra.mxu0 %v2967
        %v3042 = vpop.f32.mrf.mxu0
        %v3043 = vadd.f32 0.0, %v3042
        %v3044 = vpop.f32.mrf.mxu0
        %v3045 = vadd.f32 0.0, %v3044
        %3046 = vmatmul.bf16.gmra.mxu0 %v2970
        %v3047 = vpop.f32.mrf.mxu0
        %v3048 = vadd.f32 0.0, %v3047
        %v3049 = vpop.f32.mrf.mxu0
        %v3050 = vadd.f32 0.0, %v3049
        %3051 = vmatmul.bf16.gmra.mxu0 %v2973
        %v3052 = vpop.f32.mrf.mxu0
        %v3053 = vadd.f32 0.0, %v3052
        %v3054 = vpop.f32.mrf.mxu0
        %v3055 = vadd.f32 0.0, %v3054
        %3056 = vmatmul.bf16.gmra.mxu0 %v2976
        %v3057 = vpop.f32.mrf.mxu0
        %v3058 = vadd.f32 0.0, %v3057
        %v3059 = vpop.f32.mrf.mxu0
        %v3060 = vadd.f32 0.0, %v3059
        %3061 = vmatmul.bf16.gmra.mxu0 %v2979
        %v3062 = vpop.f32.mrf.mxu0
        %v3063 = vadd.f32 0.0, %v3062
        %v3064 = vpop.f32.mrf.mxu0
        %v3065 = vadd.f32 0.0, %v3064
        %3066 = vmatmul.bf16.gmra.mxu0 %v2982
        %v3067 = vpop.f32.mrf.mxu0
        %v3068 = vadd.f32 0.0, %v3067
        %v3069 = vpop.f32.mrf.mxu0
        %v3070 = vadd.f32 0.0, %v3069
        %3071 = vmatmul.bf16.gmra.mxu0 %v2985
        %v3072 = vpop.f32.mrf.mxu0
        %v3073 = vadd.f32 0.0, %v3072
        %v3074 = vpop.f32.mrf.mxu0
        %v3075 = vadd.f32 0.0, %v3074
        %3076 = vmatmul.bf16.gmra.mxu0 %v2988
        %v3077 = vpop.f32.mrf.mxu0
        %v3078 = vadd.f32 0.0, %v3077
        %v3079 = vpop.f32.mrf.mxu0
        %v3080 = vadd.f32 0.0, %v3079
        %3081 = vmatmul.bf16.gmra.mxu0 %v2991
        %v3082 = vpop.f32.mrf.mxu0
        %v3083 = vadd.f32 0.0, %v3082
        %v3084 = vpop.f32.mrf.mxu0
        %v3085 = vadd.f32 0.0, %v3084
        %3086 = vmatmul.bf16.gmra.mxu0 %v2994
        %v3087 = vpop.f32.mrf.mxu0
        %v3088 = vadd.f32 0.0, %v3087
        %v3089 = vpop.f32.mrf.mxu0
        %v3090 = vadd.f32 0.0, %v3089
        %3091 = vmatmul.bf16.gmra.mxu0 %v2997
        %v3092 = vpop.f32.mrf.mxu0
        %v3093 = vadd.f32 0.0, %v3092
        %v3094 = vpop.f32.mrf.mxu0
        %v3095 = vadd.f32 0.0, %v3094
        %3096 = vmatmul.bf16.gmra.mxu0 %v3000
        %v3097 = vpop.f32.mrf.mxu0
        %v3098 = vadd.f32 0.0, %v3097
        %v3099 = vpop.f32.mrf.mxu0
        %v3100 = vadd.f32 0.0, %v3099
        %3101 = vmatmul.bf16.gmra.mxu0 %v3003
        %v3102 = vpop.f32.mrf.mxu0
        %v3103 = vadd.f32 0.0, %v3102
        %v3104 = vpop.f32.mrf.mxu0
        %v3105 = vadd.f32 0.0, %v3104
        %3106 = vdwg.mxu0
        %v3107 = vadd.f32 %v2560, %v3018
        %v3108 = vadd.f32 %v2562, %v3020
        %v3109 = vadd.f32 %v2565, %v3023
        %v3110 = vadd.f32 %v2567, %v3025
        %v3111 = vadd.f32 %v2570, %v3028
        %v3112 = vadd.f32 %v2572, %v3030
        %v3113 = vadd.f32 %v2575, %v3033
        %v3114 = vadd.f32 %v2577, %v3035
        %v3115 = vadd.f32 %v2580, %v3038
        %v3116 = vadd.f32 %v2582, %v3040
        %v3117 = vadd.f32 %v2585, %v3043
        %v3118 = vadd.f32 %v2587, %v3045
        %v3119 = vadd.f32 %v2590, %v3048
        %v3120 = vadd.f32 %v2592, %v3050
        %v3121 = vadd.f32 %v2595, %v3053
        %v3122 = vadd.f32 %v2597, %v3055
        %v3123 = vadd.f32 %v2600, %v3058
        %v3124 = vadd.f32 %v2602, %v3060
        %v3125 = vadd.f32 %v2605, %v3063
        %v3126 = vadd.f32 %v2607, %v3065
        %v3127 = vadd.f32 %v2610, %v3068
        %v3128 = vadd.f32 %v2612, %v3070
        %v3129 = vadd.f32 %v2615, %v3073
        %v3130 = vadd.f32 %v2617, %v3075
        %v3131 = vadd.f32 %v2620, %v3078
        %v3132 = vadd.f32 %v2622, %v3080
        %v3133 = vadd.f32 %v2625, %v3083
        %v3134 = vadd.f32 %v2627, %v3085
        %v3135 = vadd.f32 %v2630, %v3088
        %v3136 = vadd.f32 %v2632, %v3090
        %v3137 = vadd.f32 %v2635, %v3093
        %v3138 = vadd.f32 %v2637, %v3095
        %v3139 = vadd.f32 %v2640, %v3098
        %v3140 = vadd.f32 %v2642, %v3100
        %v3141 = vadd.f32 %v2645, %v3103
        %v3142 = vadd.f32 %v2647, %v3105
        %v3143 = vld [vmem:[%s254 + $0x8] sm:$0xc]
        %s3144 = scalar_lea.vmem %s1, 14
        %v3145 = vld [vmem:[%s3144] sm:$0x3]
        %v3147 = vunpack.c.l.b16 %v3143
        %v3148 = vpack.c.b16 %v2726, %v3147
        %vm3149 = vcmask 1045504
        %v3150 = vrot.slane %v3148, 2
        %v3151 = vrot.slane %v2763, 2
        %v3152 = vsel %vm3149, %v3150, %v3151
        %v3153 = vrot.slane %v2764, 2
        %v3154 = vsel %vm3149, %v3151, %v3153
        %v3155 = vrot.slane %v2765, 2
        %v3156 = vsel %vm3149, %v3153, %v3155
        %v3157 = vrot.slane %v2766, 2
        %v3158 = vsel %vm3149, %v3155, %v3157
        %v3159 = vrot.slane %v2767, 2
        %v3160 = vsel %vm3149, %v3157, %v3159
        %v3161 = vrot.slane %v2768, 2
        %v3162 = vsel %vm3149, %v3159, %v3161
        %v3163 = vrot.slane %v2769, 2
        %v3164 = vsel %vm3149, %v3161, %v3163
        %v3165 = vrot.slane %v2770, 2
        %v3166 = vsel %vm3149, %v3163, %v3165
        %v3167 = vrot.slane %v2771, 2
        %v3168 = vsel %vm3149, %v3165, %v3167
        %v3169 = vrot.slane %v2772, 2
        %v3170 = vsel %vm3149, %v3167, %v3169
        %v3171 = vrot.slane %v2773, 2
        %v3172 = vsel %vm3149, %v3169, %v3171
        %v3173 = vrot.slane %v2774, 2
        %v3174 = vsel %vm3149, %v3171, %v3173
        %v3175 = vrot.slane %v2775, 2
        %v3176 = vsel %vm3149, %v3173, %v3175
        %v3177 = vrot.slane %v2776, 2
        %v3178 = vsel %vm3149, %v3175, %v3177
        %v3179 = vrot.slane %v2777, 2
        %v3180 = vsel %vm3149, %v3177, %v3179
        %v3181 = vrot.slane %v2778, 2
        %v3182 = vsel %vm3149, %v3179, %v3181
        %v3183 = vrot.slane %v2779, 2
        %v3184 = vsel %vm3149, %v3181, %v3183
        %v3185 = vrot.slane %v2780, 2
        %v3186 = vsel %vm3149, %v3183, %v3185
        %v3188 = vsel %vm581, %v3152, 0
        %v3191 = vsel %vm581, %v3154, 0
        %v3194 = vsel %vm581, %v3156, 0
        %v3197 = vsel %vm581, %v3158, 0
        %v3200 = vsel %vm581, %v3160, 0
        %v3203 = vsel %vm581, %v3162, 0
        %v3206 = vsel %vm581, %v3164, 0
        %v3209 = vsel %vm581, %v3166, 0
        %v3212 = vsel %vm581, %v3168, 0
        %v3215 = vsel %vm581, %v3170, 0
        %v3218 = vsel %vm581, %v3172, 0
        %v3221 = vsel %vm581, %v3174, 0
        %v3224 = vsel %vm581, %v3176, 0
        %v3227 = vsel %vm581, %v3178, 0
        %v3230 = vsel %vm581, %v3180, 0
        %v3233 = vsel %vm581, %v3182, 0
        %v3236 = vsel %vm581, %v3184, 0
        %v3239 = vsel %vm581, %v3186, 0
        %v3242 = vsel %vm636, %v3145, 0
        %3244 = vmatpush.bf16.msra.mxu0 0
        %3245 = vmatpush.bf16.msra.mxu0 0
        %3246 = vmatpush.bf16.msra.mxu0 0
        %3247 = vmatpush.bf16.msra.mxu0 0
        %3248 = vmatpush.bf16.msra.mxu0 0
        %3249 = vmatpush.bf16.msra.mxu0 0
        %3250 = vmatpush.bf16.msra.mxu0 0
        %3251 = vmatpush.bf16.msra.mxu0 %v3242
        %3252 = vmatmul.bf16.gmra.mxu0 %v3188
        %v3253 = vpop.f32.mrf.mxu0
        %v3254 = vadd.f32 0.0, %v3253
        %v3255 = vpop.f32.mrf.mxu0
        %v3256 = vadd.f32 0.0, %v3255
        %3257 = vmatmul.bf16.gmra.mxu0 %v3191
        %v3258 = vpop.f32.mrf.mxu0
        %v3259 = vadd.f32 0.0, %v3258
        %v3260 = vpop.f32.mrf.mxu0
        %v3261 = vadd.f32 0.0, %v3260
        %3262 = vmatmul.bf16.gmra.mxu0 %v3194
        %v3263 = vpop.f32.mrf.mxu0
        %v3264 = vadd.f32 0.0, %v3263
        %v3265 = vpop.f32.mrf.mxu0
        %v3266 = vadd.f32 0.0, %v3265
        %3267 = vmatmul.bf16.gmra.mxu0 %v3197
        %v3268 = vpop.f32.mrf.mxu0
        %v3269 = vadd.f32 0.0, %v3268
        %v3270 = vpop.f32.mrf.mxu0
        %v3271 = vadd.f32 0.0, %v3270
        %3272 = vmatmul.bf16.gmra.mxu0 %v3200
        %v3273 = vpop.f32.mrf.mxu0
        %v3274 = vadd.f32 0.0, %v3273
        %v3275 = vpop.f32.mrf.mxu0
        %v3276 = vadd.f32 0.0, %v3275
        %3277 = vmatmul.bf16.gmra.mxu0 %v3203
        %v3278 = vpop.f32.mrf.mxu0
        %v3279 = vadd.f32 0.0, %v3278
        %v3280 = vpop.f32.mrf.mxu0
        %v3281 = vadd.f32 0.0, %v3280
        %3282 = vmatmul.bf16.gmra.mxu0 %v3206
        %v3283 = vpop.f32.mrf.mxu0
        %v3284 = vadd.f32 0.0, %v3283
        %v3285 = vpop.f32.mrf.mxu0
        %v3286 = vadd.f32 0.0, %v3285
        %3287 = vmatmul.bf16.gmra.mxu0 %v3209
        %v3288 = vpop.f32.mrf.mxu0
        %v3289 = vadd.f32 0.0, %v3288
        %v3290 = vpop.f32.mrf.mxu0
        %v3291 = vadd.f32 0.0, %v3290
        %3292 = vmatmul.bf16.gmra.mxu0 %v3212
        %v3293 = vpop.f32.mrf.mxu0
        %v3294 = vadd.f32 0.0, %v3293
        %v3295 = vpop.f32.mrf.mxu0
        %v3296 = vadd.f32 0.0, %v3295
        %3297 = vmatmul.bf16.gmra.mxu0 %v3215
        %v3298 = vpop.f32.mrf.mxu0
        %v3299 = vadd.f32 0.0, %v3298
        %v3300 = vpop.f32.mrf.mxu0
        %v3301 = vadd.f32 0.0, %v3300
        %3302 = vmatmul.bf16.gmra.mxu0 %v3218
        %v3303 = vpop.f32.mrf.mxu0
        %v3304 = vadd.f32 0.0, %v3303
        %v3305 = vpop.f32.mrf.mxu0
        %v3306 = vadd.f32 0.0, %v3305
        %3307 = vmatmul.bf16.gmra.mxu0 %v3221
        %v3308 = vpop.f32.mrf.mxu0
        %v3309 = vadd.f32 0.0, %v3308
        %v3310 = vpop.f32.mrf.mxu0
        %v3311 = vadd.f32 0.0, %v3310
        %3312 = vmatmul.bf16.gmra.mxu0 %v3224
        %v3313 = vpop.f32.mrf.mxu0
        %v3314 = vadd.f32 0.0, %v3313
        %v3315 = vpop.f32.mrf.mxu0
        %v3316 = vadd.f32 0.0, %v3315
        %3317 = vmatmul.bf16.gmra.mxu0 %v3227
        %v3318 = vpop.f32.mrf.mxu0
        %v3319 = vadd.f32 0.0, %v3318
        %v3320 = vpop.f32.mrf.mxu0
        %v3321 = vadd.f32 0.0, %v3320
        %3322 = vmatmul.bf16.gmra.mxu0 %v3230
        %v3323 = vpop.f32.mrf.mxu0
        %v3324 = vadd.f32 0.0, %v3323
        %v3325 = vpop.f32.mrf.mxu0
        %v3326 = vadd.f32 0.0, %v3325
        %3327 = vmatmul.bf16.gmra.mxu0 %v3233
        %v3328 = vpop.f32.mrf.mxu0
        %v3329 = vadd.f32 0.0, %v3328
        %v3330 = vpop.f32.mrf.mxu0
        %v3331 = vadd.f32 0.0, %v3330
        %3332 = vmatmul.bf16.gmra.mxu0 %v3236
        %v3333 = vpop.f32.mrf.mxu0
        %v3334 = vadd.f32 0.0, %v3333
        %v3335 = vpop.f32.mrf.mxu0
        %v3336 = vadd.f32 0.0, %v3335
        %3337 = vmatmul.bf16.gmra.mxu0 %v3239
        %v3338 = vpop.f32.mrf.mxu0
        %v3339 = vadd.f32 0.0, %v3338
        %v3340 = vpop.f32.mrf.mxu0
        %v3341 = vadd.f32 0.0, %v3340
        %3342 = vdwg.mxu0
        %v3343 = vadd.f32 %v3107, %v3254
        %v3344 = vadd.f32 %v3108, %v3256
        %v3345 = vadd.f32 %v3109, %v3259
        %v3346 = vadd.f32 %v3110, %v3261
        %v3347 = vadd.f32 %v3111, %v3264
        %v3348 = vadd.f32 %v3112, %v3266
        %v3349 = vadd.f32 %v3113, %v3269
        %v3350 = vadd.f32 %v3114, %v3271
        %v3351 = vadd.f32 %v3115, %v3274
        %v3352 = vadd.f32 %v3116, %v3276
        %v3353 = vadd.f32 %v3117, %v3279
        %v3354 = vadd.f32 %v3118, %v3281
        %v3355 = vadd.f32 %v3119, %v3284
        %v3356 = vadd.f32 %v3120, %v3286
        %v3357 = vadd.f32 %v3121, %v3289
        %v3358 = vadd.f32 %v3122, %v3291
        %v3359 = vadd.f32 %v3123, %v3294
        %v3360 = vadd.f32 %v3124, %v3296
        %v3361 = vadd.f32 %v3125, %v3299
        %v3362 = vadd.f32 %v3126, %v3301
        %v3363 = vadd.f32 %v3127, %v3304
        %v3364 = vadd.f32 %v3128, %v3306
        %v3365 = vadd.f32 %v3129, %v3309
        %v3366 = vadd.f32 %v3130, %v3311
        %v3367 = vadd.f32 %v3131, %v3314
        %v3368 = vadd.f32 %v3132, %v3316
        %v3369 = vadd.f32 %v3133, %v3319
        %v3370 = vadd.f32 %v3134, %v3321
        %v3371 = vadd.f32 %v3135, %v3324
        %v3372 = vadd.f32 %v3136, %v3326
        %v3373 = vadd.f32 %v3137, %v3329
        %v3374 = vadd.f32 %v3138, %v3331
        %v3375 = vadd.f32 %v3139, %v3334
        %v3376 = vadd.f32 %v3140, %v3336
        %v3377 = vadd.f32 %v3141, %v3339
        %v3378 = vadd.f32 %v3142, %v3341
        %v3379 = vmul.f32 %v3343, %v1611
        %v3380 = vmul.f32 %v3344, %v1616
        %v3381 = vmul.f32 %v3345, %v1621
        %v3382 = vmul.f32 %v3346, %v1626
        %v3383 = vmul.f32 %v3347, %v1631
        %v3384 = vmul.f32 %v3348, %v1636
        %v3385 = vmul.f32 %v3349, %v1641
        %v3386 = vmul.f32 %v3350, %v1646
        %v3387 = vmul.f32 %v3351, %v1651
        %v3388 = vmul.f32 %v3352, %v1656
        %v3389 = vmul.f32 %v3353, %v1661
        %v3390 = vmul.f32 %v3354, %v1666
        %v3391 = vmul.f32 %v3355, %v1671
        %v3392 = vmul.f32 %v3356, %v1676
        %v3393 = vmul.f32 %v3357, %v1681
        %v3394 = vmul.f32 %v3358, %v1686
        %v3395 = vmul.f32 %v3359, %v1691
        %v3396 = vmul.f32 %v3360, %v1696
        %v3397 = vmul.f32 %v3361, %v1701
        %v3398 = vmul.f32 %v3362, %v1706
        %v3399 = vmul.f32 %v3363, %v1711
        %v3400 = vmul.f32 %v3364, %v1716
        %v3401 = vmul.f32 %v3365, %v1721
        %v3402 = vmul.f32 %v3366, %v1726
        %v3403 = vmul.f32 %v3367, %v1731
        %v3404 = vmul.f32 %v3368, %v1736
        %v3405 = vmul.f32 %v3369, %v1741
        %v3406 = vmul.f32 %v3370, %v1746
        %v3407 = vmul.f32 %v3371, %v1751
        %v3408 = vmul.f32 %v3372, %v1756
        %v3409 = vmul.f32 %v3373, %v1761
        %v3410 = vmul.f32 %v3374, %v1766
        %v3411 = vmul.f32 %v3375, %v1771
        %v3412 = vmul.f32 %v3376, %v1776
        %v3413 = vmul.f32 %v3377, %v1781
        %v3414 = vmul.f32 %v3378, %v1786
        %v3415 = vpack.c.bf16 %v3379, %v3379
        %v3416 = vpack.c.bf16 %v3380, %v3380
        %v3417 = vpack.c.bf16 %v3381, %v3381
        %v3418 = vpack.c.bf16 %v3382, %v3382
        %v3419 = vpack.c.bf16 %v3383, %v3383
        %v3420 = vpack.c.bf16 %v3384, %v3384
        %v3421 = vpack.c.bf16 %v3385, %v3385
        %v3422 = vpack.c.bf16 %v3386, %v3386
        %v3423 = vpack.c.bf16 %v3387, %v3387
        %v3424 = vpack.c.bf16 %v3388, %v3388
        %v3425 = vpack.c.bf16 %v3389, %v3389
        %v3426 = vpack.c.bf16 %v3390, %v3390
        %v3427 = vpack.c.bf16 %v3391, %v3391
        %v3428 = vpack.c.bf16 %v3392, %v3392
        %v3429 = vpack.c.bf16 %v3393, %v3393
        %v3430 = vpack.c.bf16 %v3394, %v3394
        %v3431 = vpack.c.bf16 %v3395, %v3395
        %v3432 = vpack.c.bf16 %v3396, %v3396
        %v3433 = vpack.c.bf16 %v3397, %v3397
        %v3434 = vpack.c.bf16 %v3398, %v3398
        %v3435 = vpack.c.bf16 %v3399, %v3399
        %v3436 = vpack.c.bf16 %v3400, %v3400
        %v3437 = vpack.c.bf16 %v3401, %v3401
        %v3438 = vpack.c.bf16 %v3402, %v3402
        %v3439 = vpack.c.bf16 %v3403, %v3403
        %v3440 = vpack.c.bf16 %v3404, %v3404
        %v3441 = vpack.c.bf16 %v3405, %v3405
        %v3442 = vpack.c.bf16 %v3406, %v3406
        %v3443 = vpack.c.bf16 %v3407, %v3407
        %v3444 = vpack.c.bf16 %v3408, %v3408
        %v3445 = vpack.c.bf16 %v3409, %v3409
        %v3446 = vpack.c.bf16 %v3410, %v3410
        %v3447 = vpack.c.bf16 %v3411, %v3411
        %v3448 = vpack.c.bf16 %v3412, %v3412
        %v3449 = vpack.c.bf16 %v3413, %v3413
        %v3450 = vpack.c.bf16 %v3414, %v3414
        %s3451 = scalar_lea.vmem %s237, 144 [#allocation2]
        %3452 = vst [vmem:[%s3451] sm:$0xf] %v3415
        %3453 = vst [vmem:[%s3451 + $0x4] sm:$0xf] %v3416
        %3454 = vst [vmem:[%s3451 + $0x8] sm:$0xf] %v3417
        %3455 = vst [vmem:[%s3451 + $0xc] sm:$0xf] %v3418
        %3456 = vst [vmem:[%s3451 + $0x10] sm:$0xf] %v3419
        %3457 = vst [vmem:[%s3451 + $0x14] sm:$0xf] %v3420
        %3458 = vst [vmem:[%s3451 + $0x18] sm:$0xf] %v3421
        %3459 = vst [vmem:[%s3451 + $0x1c] sm:$0xf] %v3422
        %3460 = vst [vmem:[%s3451 + $0x20] sm:$0xf] %v3423
        %3461 = vst [vmem:[%s3451 + $0x24] sm:$0xf] %v3424
        %3462 = vst [vmem:[%s3451 + $0x28] sm:$0xf] %v3425
        %3463 = vst [vmem:[%s3451 + $0x2c] sm:$0xf] %v3426
        %3464 = vst [vmem:[%s3451 + $0x30] sm:$0xf] %v3427
        %3465 = vst [vmem:[%s3451 + $0x34] sm:$0xf] %v3428
        %3466 = vst [vmem:[%s3451 + $0x38] sm:$0xf] %v3429
        %3467 = vst [vmem:[%s3451 + $0x3c] sm:$0xf] %v3430
        %3468 = vst [vmem:[%s3451 + $0x40] sm:$0xf] %v3431
        %3469 = vst [vmem:[%s3451 + $0x44] sm:$0xf] %v3432
        %3470 = vst [vmem:[%s3451 + $0x48] sm:$0xf] %v3433
        %3471 = vst [vmem:[%s3451 + $0x4c] sm:$0xf] %v3434
        %3472 = vst [vmem:[%s3451 + $0x50] sm:$0xf] %v3435
        %3473 = vst [vmem:[%s3451 + $0x54] sm:$0xf] %v3436
        %3474 = vst [vmem:[%s3451 + $0x58] sm:$0xf] %v3437
        %3475 = vst [vmem:[%s3451 + $0x5c] sm:$0xf] %v3438
        %3476 = vst [vmem:[%s3451 + $0x60] sm:$0xf] %v3439
        %3477 = vst [vmem:[%s3451 + $0x64] sm:$0xf] %v3440
        %3478 = vst [vmem:[%s3451 + $0x68] sm:$0xf] %v3441
        %3479 = vst [vmem:[%s3451 + $0x6c] sm:$0xf] %v3442
        %3480 = vst [vmem:[%s3451 + $0x70] sm:$0xf] %v3443
        %3481 = vst [vmem:[%s3451 + $0x74] sm:$0xf] %v3444
        %3482 = vst [vmem:[%s3451 + $0x78] sm:$0xf] %v3445
        %3483 = vst [vmem:[%s3451 + $0x7c] sm:$0xf] %v3446
        %3484 = vst [vmem:[%s3451 + $0x80] sm:$0xf] %v3447
        %3485 = vst [vmem:[%s3451 + $0x84] sm:$0xf] %v3448
        %3486 = vst [vmem:[%s3451 + $0x88] sm:$0xf] %v3449
        %3487 = vst [vmem:[%s3451 + $0x8c] sm:$0xf] %v3450
        %v3488 = vadd.f32 %v3379, %v3380
        %v3489 = vadd.f32 %v3488, %v3381
        %v3490 = vadd.f32 %v3489, %v3382
        %v3491 = vadd.f32 %v3490, %v3383
        %v3492 = vadd.f32 %v3491, %v3384
        %v3493 = vadd.f32 %v3492, %v3385
        %v3494 = vadd.f32 %v3493, %v3386
        %v3495 = vadd.f32 %v3494, %v3387
        %v3496 = vadd.f32 %v3495, %v3388
        %v3497 = vadd.f32 %v3496, %v3389
        %v3498 = vadd.f32 %v3497, %v3390
        %v3499 = vadd.f32 %v3498, %v3391
        %v3500 = vadd.f32 %v3499, %v3392
        %v3501 = vadd.f32 %v3500, %v3393
        %v3502 = vadd.f32 %v3501, %v3394
        %v3503 = vadd.f32 %v3502, %v3395
        %v3504 = vadd.f32 %v3503, %v3396
        %v3505 = vadd.f32 %v3504, %v3397
        %v3506 = vadd.f32 %v3505, %v3398
        %v3507 = vadd.f32 %v3506, %v3399
        %v3508 = vadd.f32 %v3507, %v3400
        %v3509 = vadd.f32 %v3508, %v3401
        %v3510 = vadd.f32 %v3509, %v3402
        %v3511 = vadd.f32 %v3510, %v3403
        %v3512 = vadd.f32 %v3511, %v3404
        %v3513 = vadd.f32 %v3512, %v3405
        %v3514 = vadd.f32 %v3513, %v3406
        %v3515 = vadd.f32 %v3514, %v3407
        %v3516 = vadd.f32 %v3515, %v3408
        %v3517 = vadd.f32 %v3516, %v3409
        %v3518 = vadd.f32 %v3517, %v3410
        %v3519 = vadd.f32 %v3518, %v3411
        %v3520 = vadd.f32 %v3519, %v3412
        %v3521 = vadd.f32 %v3520, %v3413
        %v3522 = vadd.f32 %v3521, %v3414
        %v3523 = vrot.slane %v3522, 4
        %v3524 = vadd.f32 %v3522, %v3523
        %v3525 = vrot.slane %v3524, 2
        %v3526 = vadd.f32 %v3524, %v3525
        %v3527 = vrot.slane %v3526, 1
        %v3528 = vadd.f32 %v3526, %v3527
        %v3529 = vmul.f32 %v3379, %v3379
        %v3530 = vmul.f32 %v3380, %v3380
        %v3531 = vmul.f32 %v3381, %v3381
        %v3532 = vmul.f32 %v3382, %v3382
        %v3533 = vmul.f32 %v3383, %v3383
        %v3534 = vmul.f32 %v3384, %v3384
        %v3535 = vmul.f32 %v3385, %v3385
        %v3536 = vmul.f32 %v3386, %v3386
        %v3537 = vmul.f32 %v3387, %v3387
        %v3538 = vmul.f32 %v3388, %v3388
        %v3539 = vmul.f32 %v3389, %v3389
        %v3540 = vmul.f32 %v3390, %v3390
        %v3541 = vmul.f32 %v3391, %v3391
        %v3542 = vmul.f32 %v3392, %v3392
        %v3543 = vmul.f32 %v3393, %v3393
        %v3544 = vmul.f32 %v3394, %v3394
        %v3545 = vmul.f32 %v3395, %v3395
        %v3546 = vmul.f32 %v3396, %v3396
        %v3547 = vmul.f32 %v3397, %v3397
        %v3548 = vmul.f32 %v3398, %v3398
        %v3549 = vmul.f32 %v3399, %v3399
        %v3550 = vmul.f32 %v3400, %v3400
        %v3551 = vmul.f32 %v3401, %v3401
        %v3552 = vmul.f32 %v3402, %v3402
        %v3553 = vmul.f32 %v3403, %v3403
        %v3554 = vmul.f32 %v3404, %v3404
        %v3555 = vmul.f32 %v3405, %v3405
        %v3556 = vmul.f32 %v3406, %v3406
        %v3557 = vmul.f32 %v3407, %v3407
        %v3558 = vmul.f32 %v3408, %v3408
        %v3559 = vmul.f32 %v3409, %v3409
        %v3560 = vmul.f32 %v3410, %v3410
        %v3561 = vmul.f32 %v3411, %v3411
        %v3562 = vmul.f32 %v3412, %v3412
        %v3563 = vmul.f32 %v3413, %v3413
        %v3564 = vmul.f32 %v3414, %v3414
        %v3565 = vadd.f32 %v3529, %v3530
        %v3566 = vadd.f32 %v3565, %v3531
        %v3567 = vadd.f32 %v3566, %v3532
        %v3568 = vadd.f32 %v3567, %v3533
        %v3569 = vadd.f32 %v3568, %v3534
        %v3570 = vadd.f32 %v3569, %v3535
        %v3571 = vadd.f32 %v3570, %v3536
        %v3572 = vadd.f32 %v3571, %v3537
        %v3573 = vadd.f32 %v3572, %v3538
        %v3574 = vadd.f32 %v3573, %v3539
        %v3575 = vadd.f32 %v3574, %v3540
        %v3576 = vadd.f32 %v3575, %v3541
        %v3577 = vadd.f32 %v3576, %v3542
        %v3578 = vadd.f32 %v3577, %v3543
        %v3579 = vadd.f32 %v3578, %v3544
        %v3580 = vadd.f32 %v3579, %v3545
        %v3581 = vadd.f32 %v3580, %v3546
        %v3582 = vadd.f32 %v3581, %v3547
        %v3583 = vadd.f32 %v3582, %v3548
        %v3584 = vadd.f32 %v3583, %v3549
        %v3585 = vadd.f32 %v3584, %v3550
        %v3586 = vadd.f32 %v3585, %v3551
        %v3587 = vadd.f32 %v3586, %v3552
        %v3588 = vadd.f32 %v3587, %v3553
        %v3589 = vadd.f32 %v3588, %v3554
        %v3590 = vadd.f32 %v3589, %v3555
        %v3591 = vadd.f32 %v3590, %v3556
        %v3592 = vadd.f32 %v3591, %v3557
        %v3593 = vadd.f32 %v3592, %v3558
        %v3594 = vadd.f32 %v3593, %v3559
        %v3595 = vadd.f32 %v3594, %v3560
        %v3596 = vadd.f32 %v3595, %v3561
        %v3597 = vadd.f32 %v3596, %v3562
        %v3598 = vadd.f32 %v3597, %v3563
        %v3599 = vadd.f32 %v3598, %v3564
        %v3600 = vrot.slane %v3599, 4
        %v3601 = vadd.f32 %v3599, %v3600
        %v3602 = vrot.slane %v3601, 2
        %v3603 = vadd.f32 %v3601, %v3602
        %v3604 = vrot.slane %v3603, 1
        %v3605 = vadd.f32 %v3603, %v3604
        %v3606 = vadd.f32 %v1936, %v3528
        %v3607 = vadd.f32 %v2013, %v3605
        %v3608 = vld [vmem:[%s254 + $0x8] sm:$0xe]
        %v3609 = vld [vmem:[%s254 + $0xc] sm:$0xf]
        %v3610 = vld [vmem:[%s254 + $0x10] sm:$0xf]
        %v3611 = vld [vmem:[%s254 + $0x14] sm:$0xf]
        %v3612 = vld [vmem:[%s254 + $0x18] sm:$0xf]
        %v3613 = vld [vmem:[%s254 + $0x1c] sm:$0xf]
        %v3614 = vld [vmem:[%s254 + $0x20] sm:$0xf]
        %v3615 = vld [vmem:[%s254 + $0x24] sm:$0xf]
        %v3616 = vld [vmem:[%s254 + $0x28] sm:$0xf]
        %v3617 = vld [vmem:[%s254 + $0x2c] sm:$0xf]
        %v3618 = vld [vmem:[%s254 + $0x30] sm:$0xf]
        %v3619 = vld [vmem:[%s254 + $0x34] sm:$0xf]
        %v3620 = vld [vmem:[%s254 + $0x38] sm:$0xf]
        %v3621 = vld [vmem:[%s254 + $0x3c] sm:$0xf]
        %v3622 = vld [vmem:[%s254 + $0x40] sm:$0xf]
        %v3623 = vld [vmem:[%s254 + $0x44] sm:$0xf]
        %v3624 = vld [vmem:[%s254 + $0x48] sm:$0xf]
        %v3625 = vld [vmem:[%s254 + $0x4c] sm:$0xf]
        %v3626 = vld [vmem:[%s254 + $0x50] sm:$0xf]
        %v3627 = vld [vmem:[%s254 + $0x54] sm:$0xf]
        %v3628 = vld [vmem:[%s254 + $0x58] sm:$0xf]
        %v3629 = vld [vmem:[%s254 + $0x5c] sm:$0xf]
        %v3630 = vld [vmem:[%s254 + $0x60] sm:$0xf]
        %v3631 = vld [vmem:[%s254 + $0x64] sm:$0xf]
        %v3632 = vld [vmem:[%s254 + $0x68] sm:$0xf]
        %v3633 = vld [vmem:[%s254 + $0x6c] sm:$0xf]
        %v3634 = vld [vmem:[%s254 + $0x70] sm:$0xf]
        %v3635 = vld [vmem:[%s254 + $0x74] sm:$0xf]
        %v3636 = vld [vmem:[%s254 + $0x78] sm:$0xf]
        %v3637 = vld [vmem:[%s254 + $0x7c] sm:$0xf]
        %v3638 = vld [vmem:[%s254 + $0x80] sm:$0xf]
        %v3639 = vld [vmem:[%s254 + $0x84] sm:$0xf]
        %v3640 = vld [vmem:[%s254 + $0x88] sm:$0xf]
        %v3641 = vld [vmem:[%s254 + $0x8c] sm:$0xf]
        %v3642 = vld [vmem:[%s254 + $0x90] sm:$0xf]
        %v3643 = vld [vmem:[%s254 + $0x94] sm:$0xf]
        %v3644 = vld [vmem:[%s254 + $0x98] sm:$0x1]
        %s3645 = scalar_lea.vmem %s1, 16
        %v3646 = vld [vmem:[%s3645] sm:$0x3]
        %v3647 = vld [vmem:[%s254 + $0x98] sm:$0x3]
        %s3648 = scalar_lea.vmem %s1, 18
        %v3649 = vld [vmem:[%s3648] sm:$0x3]
        %v3687 = vunpack.c.l.b16 %v3608
        %v3688 = vunpack.c.l.b16 %v3609
        %v3689 = vunpack.c.l.b16 %v3610
        %v3690 = vunpack.c.l.b16 %v3611
        %v3691 = vunpack.c.l.b16 %v3612
        %v3692 = vunpack.c.l.b16 %v3613
        %v3693 = vunpack.c.l.b16 %v3614
        %v3694 = vunpack.c.l.b16 %v3615
        %v3695 = vunpack.c.l.b16 %v3616
        %v3696 = vunpack.c.l.b16 %v3617
        %v3697 = vunpack.c.l.b16 %v3618
        %v3698 = vunpack.c.l.b16 %v3619
        %v3699 = vunpack.c.l.b16 %v3620
        %v3700 = vunpack.c.l.b16 %v3621
        %v3701 = vunpack.c.l.b16 %v3622
        %v3702 = vunpack.c.l.b16 %v3623
        %v3703 = vunpack.c.l.b16 %v3624
        %v3704 = vunpack.c.l.b16 %v3625
        %v3705 = vunpack.c.l.b16 %v3626
        %v3706 = vunpack.c.l.b16 %v3627
        %v3707 = vunpack.c.l.b16 %v3628
        %v3708 = vunpack.c.l.b16 %v3629
        %v3709 = vunpack.c.l.b16 %v3630
        %v3710 = vunpack.c.l.b16 %v3631
        %v3711 = vunpack.c.l.b16 %v3632
        %v3712 = vunpack.c.l.b16 %v3633
        %v3713 = vunpack.c.l.b16 %v3634
        %v3714 = vunpack.c.l.b16 %v3635
        %v3715 = vunpack.c.l.b16 %v3636
        %v3716 = vunpack.c.l.b16 %v3637
        %v3717 = vunpack.c.l.b16 %v3638
        %v3718 = vunpack.c.l.b16 %v3639
        %v3719 = vunpack.c.l.b16 %v3640
        %v3720 = vunpack.c.l.b16 %v3641
        %v3721 = vunpack.c.l.b16 %v3642
        %v3722 = vunpack.c.l.b16 %v3643
        %v3723 = vunpack.c.l.b16 %v3647
        %v3724 = vpack.c.b16 %v3688, %v3687
        %v3725 = vpack.c.b16 %v3690, %v3689
        %v3726 = vpack.c.b16 %v3692, %v3691
        %v3727 = vpack.c.b16 %v3694, %v3693
        %v3728 = vpack.c.b16 %v3696, %v3695
        %v3729 = vpack.c.b16 %v3698, %v3697
        %v3730 = vpack.c.b16 %v3700, %v3699
        %v3731 = vpack.c.b16 %v3702, %v3701
        %v3732 = vpack.c.b16 %v3704, %v3703
        %v3733 = vpack.c.b16 %v3706, %v3705
        %v3734 = vpack.c.b16 %v3708, %v3707
        %v3735 = vpack.c.b16 %v3710, %v3709
        %v3736 = vpack.c.b16 %v3712, %v3711
        %v3737 = vpack.c.b16 %v3714, %v3713
        %v3738 = vpack.c.b16 %v3716, %v3715
        %v3739 = vpack.c.b16 %v3718, %v3717
        %v3740 = vpack.c.b16 %v3720, %v3719
        %v3741 = vpack.c.b16 %v3722, %v3721
        %v3742 = vpack.c.b16 %v3723, %v3723
        %v3744 = vshrl.u32 %v3724, 16
        %v3746 = vrot.slane %v3744, 1
        %v3747 = vshll.u32 %v3724, 16
        %v3749 = vrot.slane %v3747, 2
        %v3750 = vor.u32 %v3746, %v3749
        %v3752 = vshrl.u32 %v3725, 16
        %v3754 = vrot.slane %v3752, 1
        %v3755 = vshll.u32 %v3725, 16
        %v3757 = vrot.slane %v3755, 2
        %v3758 = vor.u32 %v3754, %v3757
        %v3759 = vsel %vm1245, %v3750, %v3758
        %v3761 = vshrl.u32 %v3726, 16
        %v3763 = vrot.slane %v3761, 1
        %v3764 = vshll.u32 %v3726, 16
        %v3766 = vrot.slane %v3764, 2
        %v3767 = vor.u32 %v3763, %v3766
        %v3768 = vsel %vm1245, %v3758, %v3767
        %v3770 = vshrl.u32 %v3727, 16
        %v3772 = vrot.slane %v3770, 1
        %v3773 = vshll.u32 %v3727, 16
        %v3775 = vrot.slane %v3773, 2
        %v3776 = vor.u32 %v3772, %v3775
        %v3777 = vsel %vm1245, %v3767, %v3776
        %v3779 = vshrl.u32 %v3728, 16
        %v3781 = vrot.slane %v3779, 1
        %v3782 = vshll.u32 %v3728, 16
        %v3784 = vrot.slane %v3782, 2
        %v3785 = vor.u32 %v3781, %v3784
        %v3786 = vsel %vm1245, %v3776, %v3785
        %v3788 = vshrl.u32 %v3729, 16
        %v3790 = vrot.slane %v3788, 1
        %v3791 = vshll.u32 %v3729, 16
        %v3793 = vrot.slane %v3791, 2
        %v3794 = vor.u32 %v3790, %v3793
        %v3795 = vsel %vm1245, %v3785, %v3794
        %v3797 = vshrl.u32 %v3730, 16
        %v3799 = vrot.slane %v3797, 1
        %v3800 = vshll.u32 %v3730, 16
        %v3802 = vrot.slane %v3800, 2
        %v3803 = vor.u32 %v3799, %v3802
        %v3804 = vsel %vm1245, %v3794, %v3803
        %v3806 = vshrl.u32 %v3731, 16
        %v3808 = vrot.slane %v3806, 1
        %v3809 = vshll.u32 %v3731, 16
        %v3811 = vrot.slane %v3809, 2
        %v3812 = vor.u32 %v3808, %v3811
        %v3813 = vsel %vm1245, %v3803, %v3812
        %v3815 = vshrl.u32 %v3732, 16
        %v3817 = vrot.slane %v3815, 1
        %v3818 = vshll.u32 %v3732, 16
        %v3820 = vrot.slane %v3818, 2
        %v3821 = vor.u32 %v3817, %v3820
        %v3822 = vsel %vm1245, %v3812, %v3821
        %v3824 = vshrl.u32 %v3733, 16
        %v3826 = vrot.slane %v3824, 1
        %v3827 = vshll.u32 %v3733, 16
        %v3829 = vrot.slane %v3827, 2
        %v3830 = vor.u32 %v3826, %v3829
        %v3831 = vsel %vm1245, %v3821, %v3830
        %v3833 = vshrl.u32 %v3734, 16
        %v3835 = vrot.slane %v3833, 1
        %v3836 = vshll.u32 %v3734, 16
        %v3838 = vrot.slane %v3836, 2
        %v3839 = vor.u32 %v3835, %v3838
        %v3840 = vsel %vm1245, %v3830, %v3839
        %v3842 = vshrl.u32 %v3735, 16
        %v3844 = vrot.slane %v3842, 1
        %v3845 = vshll.u32 %v3735, 16
        %v3847 = vrot.slane %v3845, 2
        %v3848 = vor.u32 %v3844, %v3847
        %v3849 = vsel %vm1245, %v3839, %v3848
        %v3851 = vshrl.u32 %v3736, 16
        %v3853 = vrot.slane %v3851, 1
        %v3854 = vshll.u32 %v3736, 16
        %v3856 = vrot.slane %v3854, 2
        %v3857 = vor.u32 %v3853, %v3856
        %v3858 = vsel %vm1245, %v3848, %v3857
        %v3860 = vshrl.u32 %v3737, 16
        %v3862 = vrot.slane %v3860, 1
        %v3863 = vshll.u32 %v3737, 16
        %v3865 = vrot.slane %v3863, 2
        %v3866 = vor.u32 %v3862, %v3865
        %v3867 = vsel %vm1245, %v3857, %v3866
        %v3869 = vshrl.u32 %v3738, 16
        %v3871 = vrot.slane %v3869, 1
        %v3872 = vshll.u32 %v3738, 16
        %v3874 = vrot.slane %v3872, 2
        %v3875 = vor.u32 %v3871, %v3874
        %v3876 = vsel %vm1245, %v3866, %v3875
        %v3878 = vshrl.u32 %v3739, 16
        %v3880 = vrot.slane %v3878, 1
        %v3881 = vshll.u32 %v3739, 16
        %v3883 = vrot.slane %v3881, 2
        %v3884 = vor.u32 %v3880, %v3883
        %v3885 = vsel %vm1245, %v3875, %v3884
        %v3887 = vshrl.u32 %v3740, 16
        %v3889 = vrot.slane %v3887, 1
        %v3890 = vshll.u32 %v3740, 16
        %v3892 = vrot.slane %v3890, 2
        %v3893 = vor.u32 %v3889, %v3892
        %v3894 = vsel %vm1245, %v3884, %v3893
        %v3896 = vshrl.u32 %v3741, 16
        %v3898 = vrot.slane %v3896, 1
        %v3899 = vshll.u32 %v3741, 16
        %v3901 = vrot.slane %v3899, 2
        %v3902 = vor.u32 %v3898, %v3901
        %v3903 = vsel %vm1245, %v3893, %v3902
        %v3905 = vshrl.u32 %v3742, 16
        %v3907 = vrot.slane %v3905, 1
        %v3908 = vshll.u32 %v3742, 16
        %v3910 = vrot.slane %v3908, 2
        %v3911 = vor.u32 %v3907, %v3910
        %v3912 = vsel %vm1245, %v3902, %v3911
        %v3914 = vsel %vm581, %v3759, 0
        %v3917 = vsel %vm581, %v3768, 0
        %v3920 = vsel %vm581, %v3777, 0
        %v3923 = vsel %vm581, %v3786, 0
        %v3926 = vsel %vm581, %v3795, 0
        %v3929 = vsel %vm581, %v3804, 0
        %v3932 = vsel %vm581, %v3813, 0
        %v3935 = vsel %vm581, %v3822, 0
        %v3938 = vsel %vm581, %v3831, 0
        %v3941 = vsel %vm581, %v3840, 0
        %v3944 = vsel %vm581, %v3849, 0
        %v3947 = vsel %vm581, %v3858, 0
        %v3950 = vsel %vm581, %v3867, 0
        %v3953 = vsel %vm581, %v3876, 0
        %v3956 = vsel %vm581, %v3885, 0
        %v3959 = vsel %vm581, %v3894, 0
        %v3962 = vsel %vm581, %v3903, 0
        %v3965 = vsel %vm581, %v3912, 0
        %v3968 = vsel %vm636, %v3649, 0
        %3970 = vmatpush.bf16.msra.mxu0 0
        %3971 = vmatpush.bf16.msra.mxu0 0
        %3972 = vmatpush.bf16.msra.mxu0 0
        %3973 = vmatpush.bf16.msra.mxu0 0
        %3974 = vmatpush.bf16.msra.mxu0 0
        %3975 = vmatpush.bf16.msra.mxu0 0
        %3976 = vmatpush.bf16.msra.mxu0 0
        %3977 = vmatpush.bf16.msra.mxu0 %v3968
        %3978 = vmatmul.bf16.gmra.mxu0 %v3914
        %v3979 = vpop.f32.mrf.mxu0
        %v3980 = vadd.f32 0.0, %v3979
        %v3981 = vpop.f32.mrf.mxu0
        %v3982 = vadd.f32 0.0, %v3981
        %3983 = vmatmul.bf16.gmra.mxu0 %v3917
        %v3984 = vpop.f32.mrf.mxu0
        %v3985 = vadd.f32 0.0, %v3984
        %v3986 = vpop.f32.mrf.mxu0
        %v3987 = vadd.f32 0.0, %v3986
        %3988 = vmatmul.bf16.gmra.mxu0 %v3920
        %v3989 = vpop.f32.mrf.mxu0
        %v3990 = vadd.f32 0.0, %v3989
        %v3991 = vpop.f32.mrf.mxu0
        %v3992 = vadd.f32 0.0, %v3991
        %3993 = vmatmul.bf16.gmra.mxu0 %v3923
        %v3994 = vpop.f32.mrf.mxu0
        %v3995 = vadd.f32 0.0, %v3994
        %v3996 = vpop.f32.mrf.mxu0
        %v3997 = vadd.f32 0.0, %v3996
        %3998 = vmatmul.bf16.gmra.mxu0 %v3926
        %v3999 = vpop.f32.mrf.mxu0
        %v4000 = vadd.f32 0.0, %v3999
        %v4001 = vpop.f32.mrf.mxu0
        %v4002 = vadd.f32 0.0, %v4001
        %4003 = vmatmul.bf16.gmra.mxu0 %v3929
        %v4004 = vpop.f32.mrf.mxu0
        %v4005 = vadd.f32 0.0, %v4004
        %v4006 = vpop.f32.mrf.mxu0
        %v4007 = vadd.f32 0.0, %v4006
        %4008 = vmatmul.bf16.gmra.mxu0 %v3932
        %v4009 = vpop.f32.mrf.mxu0
        %v4010 = vadd.f32 0.0, %v4009
        %v4011 = vpop.f32.mrf.mxu0
        %v4012 = vadd.f32 0.0, %v4011
        %4013 = vmatmul.bf16.gmra.mxu0 %v3935
        %v4014 = vpop.f32.mrf.mxu0
        %v4015 = vadd.f32 0.0, %v4014
        %v4016 = vpop.f32.mrf.mxu0
        %v4017 = vadd.f32 0.0, %v4016
        %4018 = vmatmul.bf16.gmra.mxu0 %v3938
        %v4019 = vpop.f32.mrf.mxu0
        %v4020 = vadd.f32 0.0, %v4019
        %v4021 = vpop.f32.mrf.mxu0
        %v4022 = vadd.f32 0.0, %v4021
        %4023 = vmatmul.bf16.gmra.mxu0 %v3941
        %v4024 = vpop.f32.mrf.mxu0
        %v4025 = vadd.f32 0.0, %v4024
        %v4026 = vpop.f32.mrf.mxu0
        %v4027 = vadd.f32 0.0, %v4026
        %4028 = vmatmul.bf16.gmra.mxu0 %v3944
        %v4029 = vpop.f32.mrf.mxu0
        %v4030 = vadd.f32 0.0, %v4029
        %v4031 = vpop.f32.mrf.mxu0
        %v4032 = vadd.f32 0.0, %v4031
        %4033 = vmatmul.bf16.gmra.mxu0 %v3947
        %v4034 = vpop.f32.mrf.mxu0
        %v4035 = vadd.f32 0.0, %v4034
        %v4036 = vpop.f32.mrf.mxu0
        %v4037 = vadd.f32 0.0, %v4036
        %4038 = vmatmul.bf16.gmra.mxu0 %v3950
        %v4039 = vpop.f32.mrf.mxu0
        %v4040 = vadd.f32 0.0, %v4039
        %v4041 = vpop.f32.mrf.mxu0
        %v4042 = vadd.f32 0.0, %v4041
        %4043 = vmatmul.bf16.gmra.mxu0 %v3953
        %v4044 = vpop.f32.mrf.mxu0
        %v4045 = vadd.f32 0.0, %v4044
        %v4046 = vpop.f32.mrf.mxu0
        %v4047 = vadd.f32 0.0, %v4046
        %4048 = vmatmul.bf16.gmra.mxu0 %v3956
        %v4049 = vpop.f32.mrf.mxu0
        %v4050 = vadd.f32 0.0, %v4049
        %v4051 = vpop.f32.mrf.mxu0
        %v4052 = vadd.f32 0.0, %v4051
        %4053 = vmatmul.bf16.gmra.mxu0 %v3959
        %v4054 = vpop.f32.mrf.mxu0
        %v4055 = vadd.f32 0.0, %v4054
        %v4056 = vpop.f32.mrf.mxu0
        %v4057 = vadd.f32 0.0, %v4056
        %4058 = vmatmul.bf16.gmra.mxu0 %v3962
        %v4059 = vpop.f32.mrf.mxu0
        %v4060 = vadd.f32 0.0, %v4059
        %v4061 = vpop.f32.mrf.mxu0
        %v4062 = vadd.f32 0.0, %v4061
        %4063 = vmatmul.bf16.gmra.mxu0 %v3965
        %v4064 = vpop.f32.mrf.mxu0
        %v4065 = vadd.f32 0.0, %v4064
        %v4066 = vpop.f32.mrf.mxu0
        %v4067 = vadd.f32 0.0, %v4066
        %4068 = vdwg.mxu0
        %v4070 = vunpack.c.l.b16 %v3644
        %v4071 = vpack.c.b16 %v4070, %v4070
        %v4072 = vrot.slane %v3724, 1
        %v4073 = vrot.slane %v3725, 1
        %v4074 = vsel %vm1009, %v4072, %v4073
        %v4075 = vrot.slane %v3726, 1
        %v4076 = vsel %vm1009, %v4073, %v4075
        %v4077 = vrot.slane %v3727, 1
        %v4078 = vsel %vm1009, %v4075, %v4077
        %v4079 = vrot.slane %v3728, 1
        %v4080 = vsel %vm1009, %v4077, %v4079
        %v4081 = vrot.slane %v3729, 1
        %v4082 = vsel %vm1009, %v4079, %v4081
        %v4083 = vrot.slane %v3730, 1
        %v4084 = vsel %vm1009, %v4081, %v4083
        %v4085 = vrot.slane %v3731, 1
        %v4086 = vsel %vm1009, %v4083, %v4085
        %v4087 = vrot.slane %v3732, 1
        %v4088 = vsel %vm1009, %v4085, %v4087
        %v4089 = vrot.slane %v3733, 1
        %v4090 = vsel %vm1009, %v4087, %v4089
        %v4091 = vrot.slane %v3734, 1
        %v4092 = vsel %vm1009, %v4089, %v4091
        %v4093 = vrot.slane %v3735, 1
        %v4094 = vsel %vm1009, %v4091, %v4093
        %v4095 = vrot.slane %v3736, 1
        %v4096 = vsel %vm1009, %v4093, %v4095
        %v4097 = vrot.slane %v3737, 1
        %v4098 = vsel %vm1009, %v4095, %v4097
        %v4099 = vrot.slane %v3738, 1
        %v4100 = vsel %vm1009, %v4097, %v4099
        %v4101 = vrot.slane %v3739, 1
        %v4102 = vsel %vm1009, %v4099, %v4101
        %v4103 = vrot.slane %v3740, 1
        %v4104 = vsel %vm1009, %v4101, %v4103
        %v4105 = vrot.slane %v3741, 1
        %v4106 = vsel %vm1009, %v4103, %v4105
        %v4107 = vrot.slane %v4071, 1
        %v4108 = vsel %vm1009, %v4105, %v4107
        %v4110 = vsel %vm581, %v4074, 0
        %v4113 = vsel %vm581, %v4076, 0
        %v4116 = vsel %vm581, %v4078, 0
        %v4119 = vsel %vm581, %v4080, 0
        %v4122 = vsel %vm581, %v4082, 0
        %v4125 = vsel %vm581, %v4084, 0
        %v4128 = vsel %vm581, %v4086, 0
        %v4131 = vsel %vm581, %v4088, 0
        %v4134 = vsel %vm581, %v4090, 0
        %v4137 = vsel %vm581, %v4092, 0
        %v4140 = vsel %vm581, %v4094, 0
        %v4143 = vsel %vm581, %v4096, 0
        %v4146 = vsel %vm581, %v4098, 0
        %v4149 = vsel %vm581, %v4100, 0
        %v4152 = vsel %vm581, %v4102, 0
        %v4155 = vsel %vm581, %v4104, 0
        %v4158 = vsel %vm581, %v4106, 0
        %v4161 = vsel %vm581, %v4108, 0
        %v4164 = vsel %vm636, %v3646, 0
        %4166 = vmatpush.bf16.msra.mxu0 0
        %4167 = vmatpush.bf16.msra.mxu0 0
        %4168 = vmatpush.bf16.msra.mxu0 0
        %4169 = vmatpush.bf16.msra.mxu0 0
        %4170 = vmatpush.bf16.msra.mxu0 0
        %4171 = vmatpush.bf16.msra.mxu0 0
        %4172 = vmatpush.bf16.msra.mxu0 0
        %4173 = vmatpush.bf16.msra.mxu0 %v4164
        %4174 = vmatmul.bf16.gmra.mxu0 %v4110
        %v4175 = vpop.f32.mrf.mxu0
        %v4176 = vadd.f32 %v3980, %v4175
        %v4177 = vpop.f32.mrf.mxu0
        %v4178 = vadd.f32 %v3982, %v4177
        %4179 = vmatmul.bf16.gmra.mxu0 %v4113
        %v4180 = vpop.f32.mrf.mxu0
        %v4181 = vadd.f32 %v3985, %v4180
        %v4182 = vpop.f32.mrf.mxu0
        %v4183 = vadd.f32 %v3987, %v4182
        %4184 = vmatmul.bf16.gmra.mxu0 %v4116
        %v4185 = vpop.f32.mrf.mxu0
        %v4186 = vadd.f32 %v3990, %v4185
        %v4187 = vpop.f32.mrf.mxu0
        %v4188 = vadd.f32 %v3992, %v4187
        %4189 = vmatmul.bf16.gmra.mxu0 %v4119
        %v4190 = vpop.f32.mrf.mxu0
        %v4191 = vadd.f32 %v3995, %v4190
        %v4192 = vpop.f32.mrf.mxu0
        %v4193 = vadd.f32 %v3997, %v4192
        %4194 = vmatmul.bf16.gmra.mxu0 %v4122
        %v4195 = vpop.f32.mrf.mxu0
        %v4196 = vadd.f32 %v4000, %v4195
        %v4197 = vpop.f32.mrf.mxu0
        %v4198 = vadd.f32 %v4002, %v4197
        %4199 = vmatmul.bf16.gmra.mxu0 %v4125
        %v4200 = vpop.f32.mrf.mxu0
        %v4201 = vadd.f32 %v4005, %v4200
        %v4202 = vpop.f32.mrf.mxu0
        %v4203 = vadd.f32 %v4007, %v4202
        %4204 = vmatmul.bf16.gmra.mxu0 %v4128
        %v4205 = vpop.f32.mrf.mxu0
        %v4206 = vadd.f32 %v4010, %v4205
        %v4207 = vpop.f32.mrf.mxu0
        %v4208 = vadd.f32 %v4012, %v4207
        %4209 = vmatmul.bf16.gmra.mxu0 %v4131
        %v4210 = vpop.f32.mrf.mxu0
        %v4211 = vadd.f32 %v4015, %v4210
        %v4212 = vpop.f32.mrf.mxu0
        %v4213 = vadd.f32 %v4017, %v4212
        %4214 = vmatmul.bf16.gmra.mxu0 %v4134
        %v4215 = vpop.f32.mrf.mxu0
        %v4216 = vadd.f32 %v4020, %v4215
        %v4217 = vpop.f32.mrf.mxu0
        %v4218 = vadd.f32 %v4022, %v4217
        %4219 = vmatmul.bf16.gmra.mxu0 %v4137
        %v4220 = vpop.f32.mrf.mxu0
        %v4221 = vadd.f32 %v4025, %v4220
        %v4222 = vpop.f32.mrf.mxu0
        %v4223 = vadd.f32 %v4027, %v4222
        %4224 = vmatmul.bf16.gmra.mxu0 %v4140
        %v4225 = vpop.f32.mrf.mxu0
        %v4226 = vadd.f32 %v4030, %v4225
        %v4227 = vpop.f32.mrf.mxu0
        %v4228 = vadd.f32 %v4032, %v4227
        %4229 = vmatmul.bf16.gmra.mxu0 %v4143
        %v4230 = vpop.f32.mrf.mxu0
        %v4231 = vadd.f32 %v4035, %v4230
        %v4232 = vpop.f32.mrf.mxu0
        %v4233 = vadd.f32 %v4037, %v4232
        %4234 = vmatmul.bf16.gmra.mxu0 %v4146
        %v4235 = vpop.f32.mrf.mxu0
        %v4236 = vadd.f32 %v4040, %v4235
        %v4237 = vpop.f32.mrf.mxu0
        %v4238 = vadd.f32 %v4042, %v4237
        %4239 = vmatmul.bf16.gmra.mxu0 %v4149
        %v4240 = vpop.f32.mrf.mxu0
        %v4241 = vadd.f32 %v4045, %v4240
        %v4242 = vpop.f32.mrf.mxu0
        %v4243 = vadd.f32 %v4047, %v4242
        %4244 = vmatmul.bf16.gmra.mxu0 %v4152
        %v4245 = vpop.f32.mrf.mxu0
        %v4246 = vadd.f32 %v4050, %v4245
        %v4247 = vpop.f32.mrf.mxu0
        %v4248 = vadd.f32 %v4052, %v4247
        %4249 = vmatmul.bf16.gmra.mxu0 %v4155
        %v4250 = vpop.f32.mrf.mxu0
        %v4251 = vadd.f32 %v4055, %v4250
        %v4252 = vpop.f32.mrf.mxu0
        %v4253 = vadd.f32 %v4057, %v4252
        %4254 = vmatmul.bf16.gmra.mxu0 %v4158
        %v4255 = vpop.f32.mrf.mxu0
        %v4256 = vadd.f32 %v4060, %v4255
        %v4257 = vpop.f32.mrf.mxu0
        %v4258 = vadd.f32 %v4062, %v4257
        %4259 = vmatmul.bf16.gmra.mxu0 %v4161
        %v4260 = vpop.f32.mrf.mxu0
        %v4261 = vadd.f32 %v4065, %v4260
        %v4262 = vpop.f32.mrf.mxu0
        %v4263 = vadd.f32 %v4067, %v4262
        %4264 = vdwg.mxu0
        %v4265 = vld [vmem:[%s254 + $0x10] sm:$0xc]
        %v4266 = vld [vmem:[%s254 + $0x14] sm:$0xf]
        %v4267 = vld [vmem:[%s254 + $0x18] sm:$0xf]
        %v4268 = vld [vmem:[%s254 + $0x1c] sm:$0xf]
        %v4269 = vld [vmem:[%s254 + $0x20] sm:$0xf]
        %v4270 = vld [vmem:[%s254 + $0x24] sm:$0xf]
        %v4271 = vld [vmem:[%s254 + $0x28] sm:$0xf]
        %v4272 = vld [vmem:[%s254 + $0x2c] sm:$0xf]
        %v4273 = vld [vmem:[%s254 + $0x30] sm:$0xf]
        %v4274 = vld [vmem:[%s254 + $0x34] sm:$0xf]
        %v4275 = vld [vmem:[%s254 + $0x38] sm:$0xf]
        %v4276 = vld [vmem:[%s254 + $0x3c] sm:$0xf]
        %v4277 = vld [vmem:[%s254 + $0x40] sm:$0xf]
        %v4278 = vld [vmem:[%s254 + $0x44] sm:$0xf]
        %v4279 = vld [vmem:[%s254 + $0x48] sm:$0xf]
        %v4280 = vld [vmem:[%s254 + $0x4c] sm:$0xf]
        %v4281 = vld [vmem:[%s254 + $0x50] sm:$0xf]
        %v4282 = vld [vmem:[%s254 + $0x54] sm:$0xf]
        %v4283 = vld [vmem:[%s254 + $0x58] sm:$0xf]
        %v4284 = vld [vmem:[%s254 + $0x5c] sm:$0xf]
        %v4285 = vld [vmem:[%s254 + $0x60] sm:$0xf]
        %v4286 = vld [vmem:[%s254 + $0x64] sm:$0xf]
        %v4287 = vld [vmem:[%s254 + $0x68] sm:$0xf]
        %v4288 = vld [vmem:[%s254 + $0x6c] sm:$0xf]
        %v4289 = vld [vmem:[%s254 + $0x70] sm:$0xf]
        %v4290 = vld [vmem:[%s254 + $0x74] sm:$0xf]
        %v4291 = vld [vmem:[%s254 + $0x78] sm:$0xf]
        %v4292 = vld [vmem:[%s254 + $0x7c] sm:$0xf]
        %v4293 = vld [vmem:[%s254 + $0x80] sm:$0xf]
        %v4294 = vld [vmem:[%s254 + $0x84] sm:$0xf]
        %v4295 = vld [vmem:[%s254 + $0x88] sm:$0xf]
        %v4296 = vld [vmem:[%s254 + $0x8c] sm:$0xf]
        %v4297 = vld [vmem:[%s254 + $0x90] sm:$0xf]
        %v4298 = vld [vmem:[%s254 + $0x94] sm:$0xf]
        %v4299 = vld [vmem:[%s254 + $0x98] sm:$0xf]
        %v4300 = vld [vmem:[%s254 + $0x9c] sm:$0xf]
        %v4301 = vld [vmem:[%s254 + $0xa0] sm:$0x3]
        %s4302 = scalar_lea.vmem %s1, 20
        %v4303 = vld [vmem:[%s4302] sm:$0x3]
        %v4341 = vunpack.c.l.b16 %v4265
        %v4342 = vunpack.c.l.b16 %v4266
        %v4343 = vunpack.c.l.b16 %v4267
        %v4344 = vunpack.c.l.b16 %v4268
        %v4345 = vunpack.c.l.b16 %v4269
        %v4346 = vunpack.c.l.b16 %v4270
        %v4347 = vunpack.c.l.b16 %v4271
        %v4348 = vunpack.c.l.b16 %v4272
        %v4349 = vunpack.c.l.b16 %v4273
        %v4350 = vunpack.c.l.b16 %v4274
        %v4351 = vunpack.c.l.b16 %v4275
        %v4352 = vunpack.c.l.b16 %v4276
        %v4353 = vunpack.c.l.b16 %v4277
        %v4354 = vunpack.c.l.b16 %v4278
        %v4355 = vunpack.c.l.b16 %v4279
        %v4356 = vunpack.c.l.b16 %v4280
        %v4357 = vunpack.c.l.b16 %v4281
        %v4358 = vunpack.c.l.b16 %v4282
        %v4359 = vunpack.c.l.b16 %v4283
        %v4360 = vunpack.c.l.b16 %v4284
        %v4361 = vunpack.c.l.b16 %v4285
        %v4362 = vunpack.c.l.b16 %v4286
        %v4363 = vunpack.c.l.b16 %v4287
        %v4364 = vunpack.c.l.b16 %v4288
        %v4365 = vunpack.c.l.b16 %v4289
        %v4366 = vunpack.c.l.b16 %v4290
        %v4367 = vunpack.c.l.b16 %v4291
        %v4368 = vunpack.c.l.b16 %v4292
        %v4369 = vunpack.c.l.b16 %v4293
        %v4370 = vunpack.c.l.b16 %v4294
        %v4371 = vunpack.c.l.b16 %v4295
        %v4372 = vunpack.c.l.b16 %v4296
        %v4373 = vunpack.c.l.b16 %v4297
        %v4374 = vunpack.c.l.b16 %v4298
        %v4375 = vunpack.c.l.b16 %v4299
        %v4376 = vunpack.c.l.b16 %v4300
        %v4377 = vunpack.c.l.b16 %v4301
        %v4378 = vpack.c.b16 %v4342, %v4341
        %v4379 = vpack.c.b16 %v4344, %v4343
        %v4380 = vpack.c.b16 %v4346, %v4345
        %v4381 = vpack.c.b16 %v4348, %v4347
        %v4382 = vpack.c.b16 %v4350, %v4349
        %v4383 = vpack.c.b16 %v4352, %v4351
        %v4384 = vpack.c.b16 %v4354, %v4353
        %v4385 = vpack.c.b16 %v4356, %v4355
        %v4386 = vpack.c.b16 %v4358, %v4357
        %v4387 = vpack.c.b16 %v4360, %v4359
        %v4388 = vpack.c.b16 %v4362, %v4361
        %v4389 = vpack.c.b16 %v4364, %v4363
        %v4390 = vpack.c.b16 %v4366, %v4365
        %v4391 = vpack.c.b16 %v4368, %v4367
        %v4392 = vpack.c.b16 %v4370, %v4369
        %v4393 = vpack.c.b16 %v4372, %v4371
        %v4394 = vpack.c.b16 %v4374, %v4373
        %v4395 = vpack.c.b16 %v4376, %v4375
        %v4396 = vpack.c.b16 %v4377, %v4377
        %v4397 = vrot.slane %v4378, 2
        %v4398 = vrot.slane %v4379, 2
        %v4399 = vsel %vm3149, %v4397, %v4398
        %v4400 = vrot.slane %v4380, 2
        %v4401 = vsel %vm3149, %v4398, %v4400
        %v4402 = vrot.slane %v4381, 2
        %v4403 = vsel %vm3149, %v4400, %v4402
        %v4404 = vrot.slane %v4382, 2
        %v4405 = vsel %vm3149, %v4402, %v4404
        %v4406 = vrot.slane %v4383, 2
        %v4407 = vsel %vm3149, %v4404, %v4406
        %v4408 = vrot.slane %v4384, 2
        %v4409 = vsel %vm3149, %v4406, %v4408
        %v4410 = vrot.slane %v4385, 2
        %v4411 = vsel %vm3149, %v4408, %v4410
        %v4412 = vrot.slane %v4386, 2
        %v4413 = vsel %vm3149, %v4410, %v4412
        %v4414 = vrot.slane %v4387, 2
        %v4415 = vsel %vm3149, %v4412, %v4414
        %v4416 = vrot.slane %v4388, 2
        %v4417 = vsel %vm3149, %v4414, %v4416
        %v4418 = vrot.slane %v4389, 2
        %v4419 = vsel %vm3149, %v4416, %v4418
        %v4420 = vrot.slane %v4390, 2
        %v4421 = vsel %vm3149, %v4418, %v4420
        %v4422 = vrot.slane %v4391, 2
        %v4423 = vsel %vm3149, %v4420, %v4422
        %v4424 = vrot.slane %v4392, 2
        %v4425 = vsel %vm3149, %v4422, %v4424
        %v4426 = vrot.slane %v4393, 2
        %v4427 = vsel %vm3149, %v4424, %v4426
        %v4428 = vrot.slane %v4394, 2
        %v4429 = vsel %vm3149, %v4426, %v4428
        %v4430 = vrot.slane %v4395, 2
        %v4431 = vsel %vm3149, %v4428, %v4430
        %v4432 = vrot.slane %v4396, 2
        %v4433 = vsel %vm3149, %v4430, %v4432
        %v4435 = vsel %vm581, %v4399, 0
        %v4438 = vsel %vm581, %v4401, 0
        %v4441 = vsel %vm581, %v4403, 0
        %v4444 = vsel %vm581, %v4405, 0
        %v4447 = vsel %vm581, %v4407, 0
        %v4450 = vsel %vm581, %v4409, 0
        %v4453 = vsel %vm581, %v4411, 0
        %v4456 = vsel %vm581, %v4413, 0
        %v4459 = vsel %vm581, %v4415, 0
        %v4462 = vsel %vm581, %v4417, 0
        %v4465 = vsel %vm581, %v4419, 0
        %v4468 = vsel %vm581, %v4421, 0
        %v4471 = vsel %vm581, %v4423, 0
        %v4474 = vsel %vm581, %v4425, 0
        %v4477 = vsel %vm581, %v4427, 0
        %v4480 = vsel %vm581, %v4429, 0
        %v4483 = vsel %vm581, %v4431, 0
        %v4486 = vsel %vm581, %v4433, 0
        %v4489 = vsel %vm636, %v4303, 0
        %4491 = vmatpush.bf16.msra.mxu0 0
        %4492 = vmatpush.bf16.msra.mxu0 0
        %4493 = vmatpush.bf16.msra.mxu0 0
        %4494 = vmatpush.bf16.msra.mxu0 0
        %4495 = vmatpush.bf16.msra.mxu0 0
        %4496 = vmatpush.bf16.msra.mxu0 0
        %4497 = vmatpush.bf16.msra.mxu0 0
        %4498 = vmatpush.bf16.msra.mxu0 %v4489
        %4499 = vmatmul.bf16.gmra.mxu0 %v4435
        %v4500 = vpop.f32.mrf.mxu0
        %v4501 = vadd.f32 0.0, %v4500
        %v4502 = vpop.f32.mrf.mxu0
        %v4503 = vadd.f32 0.0, %v4502
        %4504 = vmatmul.bf16.gmra.mxu0 %v4438
        %v4505 = vpop.f32.mrf.mxu0
        %v4506 = vadd.f32 0.0, %v4505
        %v4507 = vpop.f32.mrf.mxu0
        %v4508 = vadd.f32 0.0, %v4507
        %4509 = vmatmul.bf16.gmra.mxu0 %v4441
        %v4510 = vpop.f32.mrf.mxu0
        %v4511 = vadd.f32 0.0, %v4510
        %v4512 = vpop.f32.mrf.mxu0
        %v4513 = vadd.f32 0.0, %v4512
        %4514 = vmatmul.bf16.gmra.mxu0 %v4444
        %v4515 = vpop.f32.mrf.mxu0
        %v4516 = vadd.f32 0.0, %v4515
        %v4517 = vpop.f32.mrf.mxu0
        %v4518 = vadd.f32 0.0, %v4517
        %4519 = vmatmul.bf16.gmra.mxu0 %v4447
        %v4520 = vpop.f32.mrf.mxu0
        %v4521 = vadd.f32 0.0, %v4520
        %v4522 = vpop.f32.mrf.mxu0
        %v4523 = vadd.f32 0.0, %v4522
        %4524 = vmatmul.bf16.gmra.mxu0 %v4450
        %v4525 = vpop.f32.mrf.mxu0
        %v4526 = vadd.f32 0.0, %v4525
        %v4527 = vpop.f32.mrf.mxu0
        %v4528 = vadd.f32 0.0, %v4527
        %4529 = vmatmul.bf16.gmra.mxu0 %v4453
        %v4530 = vpop.f32.mrf.mxu0
        %v4531 = vadd.f32 0.0, %v4530
        %v4532 = vpop.f32.mrf.mxu0
        %v4533 = vadd.f32 0.0, %v4532
        %4534 = vmatmul.bf16.gmra.mxu0 %v4456
        %v4535 = vpop.f32.mrf.mxu0
        %v4536 = vadd.f32 0.0, %v4535
        %v4537 = vpop.f32.mrf.mxu0
        %v4538 = vadd.f32 0.0, %v4537
        %4539 = vmatmul.bf16.gmra.mxu0 %v4459
        %v4540 = vpop.f32.mrf.mxu0
        %v4541 = vadd.f32 0.0, %v4540
        %v4542 = vpop.f32.mrf.mxu0
        %v4543 = vadd.f32 0.0, %v4542
        %4544 = vmatmul.bf16.gmra.mxu0 %v4462
        %v4545 = vpop.f32.mrf.mxu0
        %v4546 = vadd.f32 0.0, %v4545
        %v4547 = vpop.f32.mrf.mxu0
        %v4548 = vadd.f32 0.0, %v4547
        %4549 = vmatmul.bf16.gmra.mxu0 %v4465
        %v4550 = vpop.f32.mrf.mxu0
        %v4551 = vadd.f32 0.0, %v4550
        %v4552 = vpop.f32.mrf.mxu0
        %v4553 = vadd.f32 0.0, %v4552
        %4554 = vmatmul.bf16.gmra.mxu0 %v4468
        %v4555 = vpop.f32.mrf.mxu0
        %v4556 = vadd.f32 0.0, %v4555
        %v4557 = vpop.f32.mrf.mxu0
        %v4558 = vadd.f32 0.0, %v4557
        %4559 = vmatmul.bf16.gmra.mxu0 %v4471
        %v4560 = vpop.f32.mrf.mxu0
        %v4561 = vadd.f32 0.0, %v4560
        %v4562 = vpop.f32.mrf.mxu0
        %v4563 = vadd.f32 0.0, %v4562
        %4564 = vmatmul.bf16.gmra.mxu0 %v4474
        %v4565 = vpop.f32.mrf.mxu0
        %v4566 = vadd.f32 0.0, %v4565
        %v4567 = vpop.f32.mrf.mxu0
        %v4568 = vadd.f32 0.0, %v4567
        %4569 = vmatmul.bf16.gmra.mxu0 %v4477
        %v4570 = vpop.f32.mrf.mxu0
        %v4571 = vadd.f32 0.0, %v4570
        %v4572 = vpop.f32.mrf.mxu0
        %v4573 = vadd.f32 0.0, %v4572
        %4574 = vmatmul.bf16.gmra.mxu0 %v4480
        %v4575 = vpop.f32.mrf.mxu0
        %v4576 = vadd.f32 0.0, %v4575
        %v4577 = vpop.f32.mrf.mxu0
        %v4578 = vadd.f32 0.0, %v4577
        %4579 = vmatmul.bf16.gmra.mxu0 %v4483
        %v4580 = vpop.f32.mrf.mxu0
        %v4581 = vadd.f32 0.0, %v4580
        %v4582 = vpop.f32.mrf.mxu0
        %v4583 = vadd.f32 0.0, %v4582
        %4584 = vmatmul.bf16.gmra.mxu0 %v4486
        %v4585 = vpop.f32.mrf.mxu0
        %v4586 = vadd.f32 0.0, %v4585
        %v4587 = vpop.f32.mrf.mxu0
        %v4588 = vadd.f32 0.0, %v4587
        %4589 = vdwg.mxu0
        %v4590 = vadd.f32 %v4176, %v4501
        %v4591 = vadd.f32 %v4178, %v4503
        %v4592 = vadd.f32 %v4181, %v4506
        %v4593 = vadd.f32 %v4183, %v4508
        %v4594 = vadd.f32 %v4186, %v4511
        %v4595 = vadd.f32 %v4188, %v4513
        %v4596 = vadd.f32 %v4191, %v4516
        %v4597 = vadd.f32 %v4193, %v4518
        %v4598 = vadd.f32 %v4196, %v4521
        %v4599 = vadd.f32 %v4198, %v4523
        %v4600 = vadd.f32 %v4201, %v4526
        %v4601 = vadd.f32 %v4203, %v4528
        %v4602 = vadd.f32 %v4206, %v4531
        %v4603 = vadd.f32 %v4208, %v4533
        %v4604 = vadd.f32 %v4211, %v4536
        %v4605 = vadd.f32 %v4213, %v4538
        %v4606 = vadd.f32 %v4216, %v4541
        %v4607 = vadd.f32 %v4218, %v4543
        %v4608 = vadd.f32 %v4221, %v4546
        %v4609 = vadd.f32 %v4223, %v4548
        %v4610 = vadd.f32 %v4226, %v4551
        %v4611 = vadd.f32 %v4228, %v4553
        %v4612 = vadd.f32 %v4231, %v4556
        %v4613 = vadd.f32 %v4233, %v4558
        %v4614 = vadd.f32 %v4236, %v4561
        %v4615 = vadd.f32 %v4238, %v4563
        %v4616 = vadd.f32 %v4241, %v4566
        %v4617 = vadd.f32 %v4243, %v4568
        %v4618 = vadd.f32 %v4246, %v4571
        %v4619 = vadd.f32 %v4248, %v4573
        %v4620 = vadd.f32 %v4251, %v4576
        %v4621 = vadd.f32 %v4253, %v4578
        %v4622 = vadd.f32 %v4256, %v4581
        %v4623 = vadd.f32 %v4258, %v4583
        %v4624 = vadd.f32 %v4261, %v4586
        %v4625 = vadd.f32 %v4263, %v4588
        %v4626 = vld [vmem:[%s254 + $0xa0] sm:$0x7]
        %s4627 = scalar_lea.vmem %s1, 22
        %v4628 = vld [vmem:[%s4627] sm:$0x3]
        %v4630 = vunpack.c.l.b16 %v4626
        %v4631 = vpack.c.b16 %v4630, %v4630
        %vm4632 = vsmask.f32 5376
        %v4634 = vshrl.u32 %v4378, 16
        %v4636 = vrot.slane %v4634, 2
        %v4637 = vshll.u32 %v4378, 16
        %v4639 = vrot.slane %v4637, 3
        %v4640 = vor.u32 %v4636, %v4639
        %v4642 = vshrl.u32 %v4379, 16
        %v4644 = vrot.slane %v4642, 2
        %v4645 = vshll.u32 %v4379, 16
        %v4647 = vrot.slane %v4645, 3
        %v4648 = vor.u32 %v4644, %v4647
        %v4649 = vsel %vm4632, %v4640, %v4648
        %v4651 = vshrl.u32 %v4380, 16
        %v4653 = vrot.slane %v4651, 2
        %v4654 = vshll.u32 %v4380, 16
        %v4656 = vrot.slane %v4654, 3
        %v4657 = vor.u32 %v4653, %v4656
        %v4658 = vsel %vm4632, %v4648, %v4657
        %v4660 = vshrl.u32 %v4381, 16
        %v4662 = vrot.slane %v4660, 2
        %v4663 = vshll.u32 %v4381, 16
        %v4665 = vrot.slane %v4663, 3
        %v4666 = vor.u32 %v4662, %v4665
        %v4667 = vsel %vm4632, %v4657, %v4666
        %v4669 = vshrl.u32 %v4382, 16
        %v4671 = vrot.slane %v4669, 2
        %v4672 = vshll.u32 %v4382, 16
        %v4674 = vrot.slane %v4672, 3
        %v4675 = vor.u32 %v4671, %v4674
        %v4676 = vsel %vm4632, %v4666, %v4675
        %v4678 = vshrl.u32 %v4383, 16
        %v4680 = vrot.slane %v4678, 2
        %v4681 = vshll.u32 %v4383, 16
        %v4683 = vrot.slane %v4681, 3
        %v4684 = vor.u32 %v4680, %v4683
        %v4685 = vsel %vm4632, %v4675, %v4684
        %v4687 = vshrl.u32 %v4384, 16
        %v4689 = vrot.slane %v4687, 2
        %v4690 = vshll.u32 %v4384, 16
        %v4692 = vrot.slane %v4690, 3
        %v4693 = vor.u32 %v4689, %v4692
        %v4694 = vsel %vm4632, %v4684, %v4693
        %v4696 = vshrl.u32 %v4385, 16
        %v4698 = vrot.slane %v4696, 2
        %v4699 = vshll.u32 %v4385, 16
        %v4701 = vrot.slane %v4699, 3
        %v4702 = vor.u32 %v4698, %v4701
        %v4703 = vsel %vm4632, %v4693, %v4702
        %v4705 = vshrl.u32 %v4386, 16
        %v4707 = vrot.slane %v4705, 2
        %v4708 = vshll.u32 %v4386, 16
        %v4710 = vrot.slane %v4708, 3
        %v4711 = vor.u32 %v4707, %v4710
        %v4712 = vsel %vm4632, %v4702, %v4711
        %v4714 = vshrl.u32 %v4387, 16
        %v4716 = vrot.slane %v4714, 2
        %v4717 = vshll.u32 %v4387, 16
        %v4719 = vrot.slane %v4717, 3
        %v4720 = vor.u32 %v4716, %v4719
        %v4721 = vsel %vm4632, %v4711, %v4720
        %v4723 = vshrl.u32 %v4388, 16
        %v4725 = vrot.slane %v4723, 2
        %v4726 = vshll.u32 %v4388, 16
        %v4728 = vrot.slane %v4726, 3
        %v4729 = vor.u32 %v4725, %v4728
        %v4730 = vsel %vm4632, %v4720, %v4729
        %v4732 = vshrl.u32 %v4389, 16
        %v4734 = vrot.slane %v4732, 2
        %v4735 = vshll.u32 %v4389, 16
        %v4737 = vrot.slane %v4735, 3
        %v4738 = vor.u32 %v4734, %v4737
        %v4739 = vsel %vm4632, %v4729, %v4738
        %v4741 = vshrl.u32 %v4390, 16
        %v4743 = vrot.slane %v4741, 2
        %v4744 = vshll.u32 %v4390, 16
        %v4746 = vrot.slane %v4744, 3
        %v4747 = vor.u32 %v4743, %v4746
        %v4748 = vsel %vm4632, %v4738, %v4747
        %v4750 = vshrl.u32 %v4391, 16
        %v4752 = vrot.slane %v4750, 2
        %v4753 = vshll.u32 %v4391, 16
        %v4755 = vrot.slane %v4753, 3
        %v4756 = vor.u32 %v4752, %v4755
        %v4757 = vsel %vm4632, %v4747, %v4756
        %v4759 = vshrl.u32 %v4392, 16
        %v4761 = vrot.slane %v4759, 2
        %v4762 = vshll.u32 %v4392, 16
        %v4764 = vrot.slane %v4762, 3
        %v4765 = vor.u32 %v4761, %v4764
        %v4766 = vsel %vm4632, %v4756, %v4765
        %v4768 = vshrl.u32 %v4393, 16
        %v4770 = vrot.slane %v4768, 2
        %v4771 = vshll.u32 %v4393, 16
        %v4773 = vrot.slane %v4771, 3
        %v4774 = vor.u32 %v4770, %v4773
        %v4775 = vsel %vm4632, %v4765, %v4774
        %v4777 = vshrl.u32 %v4394, 16
        %v4779 = vrot.slane %v4777, 2
        %v4780 = vshll.u32 %v4394, 16
        %v4782 = vrot.slane %v4780, 3
        %v4783 = vor.u32 %v4779, %v4782
        %v4784 = vsel %vm4632, %v4774, %v4783
        %v4786 = vshrl.u32 %v4395, 16
        %v4788 = vrot.slane %v4786, 2
        %v4789 = vshll.u32 %v4395, 16
        %v4791 = vrot.slane %v4789, 3
        %v4792 = vor.u32 %v4788, %v4791
        %v4793 = vsel %vm4632, %v4783, %v4792
        %v4795 = vshrl.u32 %v4631, 16
        %v4797 = vrot.slane %v4795, 2
        %v4798 = vshll.u32 %v4631, 16
        %v4800 = vrot.slane %v4798, 3
        %v4801 = vor.u32 %v4797, %v4800
        %v4802 = vsel %vm4632, %v4792, %v4801
        %v4804 = vsel %vm581, %v4649, 0
        %v4807 = vsel %vm581, %v4658, 0
        %v4810 = vsel %vm581, %v4667, 0
        %v4813 = vsel %vm581, %v4676, 0
        %v4816 = vsel %vm581, %v4685, 0
        %v4819 = vsel %vm581, %v4694, 0
        %v4822 = vsel %vm581, %v4703, 0
        %v4825 = vsel %vm581, %v4712, 0
        %v4828 = vsel %vm581, %v4721, 0
        %v4831 = vsel %vm581, %v4730, 0
        %v4834 = vsel %vm581, %v4739, 0
        %v4837 = vsel %vm581, %v4748, 0
        %v4840 = vsel %vm581, %v4757, 0
        %v4843 = vsel %vm581, %v4766, 0
        %v4846 = vsel %vm581, %v4775, 0
        %v4849 = vsel %vm581, %v4784, 0
        %v4852 = vsel %vm581, %v4793, 0
        %v4855 = vsel %vm581, %v4802, 0
        %v4858 = vsel %vm636, %v4628, 0
        %4860 = vmatpush.bf16.msra.mxu0 0
        %4861 = vmatpush.bf16.msra.mxu0 0
        %4862 = vmatpush.bf16.msra.mxu0 0
        %4863 = vmatpush.bf16.msra.mxu0 0
        %4864 = vmatpush.bf16.msra.mxu0 0
        %4865 = vmatpush.bf16.msra.mxu0 0
        %4866 = vmatpush.bf16.msra.mxu0 0
        %4867 = vmatpush.bf16.msra.mxu0 %v4858
        %4868 = vmatmul.bf16.gmra.mxu0 %v4804
        %v4869 = vpop.f32.mrf.mxu0
        %v4870 = vadd.f32 0.0, %v4869
        %v4871 = vpop.f32.mrf.mxu0
        %v4872 = vadd.f32 0.0, %v4871
        %4873 = vmatmul.bf16.gmra.mxu0 %v4807
        %v4874 = vpop.f32.mrf.mxu0
        %v4875 = vadd.f32 0.0, %v4874
        %v4876 = vpop.f32.mrf.mxu0
        %v4877 = vadd.f32 0.0, %v4876
        %4878 = vmatmul.bf16.gmra.mxu0 %v4810
        %v4879 = vpop.f32.mrf.mxu0
        %v4880 = vadd.f32 0.0, %v4879
        %v4881 = vpop.f32.mrf.mxu0
        %v4882 = vadd.f32 0.0, %v4881
        %4883 = vmatmul.bf16.gmra.mxu0 %v4813
        %v4884 = vpop.f32.mrf.mxu0
        %v4885 = vadd.f32 0.0, %v4884
        %v4886 = vpop.f32.mrf.mxu0
        %v4887 = vadd.f32 0.0, %v4886
        %4888 = vmatmul.bf16.gmra.mxu0 %v4816
        %v4889 = vpop.f32.mrf.mxu0
        %v4890 = vadd.f32 0.0, %v4889
        %v4891 = vpop.f32.mrf.mxu0
        %v4892 = vadd.f32 0.0, %v4891
        %4893 = vmatmul.bf16.gmra.mxu0 %v4819
        %v4894 = vpop.f32.mrf.mxu0
        %v4895 = vadd.f32 0.0, %v4894
        %v4896 = vpop.f32.mrf.mxu0
        %v4897 = vadd.f32 0.0, %v4896
        %4898 = vmatmul.bf16.gmra.mxu0 %v4822
        %v4899 = vpop.f32.mrf.mxu0
        %v4900 = vadd.f32 0.0, %v4899
        %v4901 = vpop.f32.mrf.mxu0
        %v4902 = vadd.f32 0.0, %v4901
        %4903 = vmatmul.bf16.gmra.mxu0 %v4825
        %v4904 = vpop.f32.mrf.mxu0
        %v4905 = vadd.f32 0.0, %v4904
        %v4906 = vpop.f32.mrf.mxu0
        %v4907 = vadd.f32 0.0, %v4906
        %4908 = vmatmul.bf16.gmra.mxu0 %v4828
        %v4909 = vpop.f32.mrf.mxu0
        %v4910 = vadd.f32 0.0, %v4909
        %v4911 = vpop.f32.mrf.mxu0
        %v4912 = vadd.f32 0.0, %v4911
        %4913 = vmatmul.bf16.gmra.mxu0 %v4831
        %v4914 = vpop.f32.mrf.mxu0
        %v4915 = vadd.f32 0.0, %v4914
        %v4916 = vpop.f32.mrf.mxu0
        %v4917 = vadd.f32 0.0, %v4916
        %4918 = vmatmul.bf16.gmra.mxu0 %v4834
        %v4919 = vpop.f32.mrf.mxu0
        %v4920 = vadd.f32 0.0, %v4919
        %v4921 = vpop.f32.mrf.mxu0
        %v4922 = vadd.f32 0.0, %v4921
        %4923 = vmatmul.bf16.gmra.mxu0 %v4837
        %v4924 = vpop.f32.mrf.mxu0
        %v4925 = vadd.f32 0.0, %v4924
        %v4926 = vpop.f32.mrf.mxu0
        %v4927 = vadd.f32 0.0, %v4926
        %4928 = vmatmul.bf16.gmra.mxu0 %v4840
        %v4929 = vpop.f32.mrf.mxu0
        %v4930 = vadd.f32 0.0, %v4929
        %v4931 = vpop.f32.mrf.mxu0
        %v4932 = vadd.f32 0.0, %v4931
        %4933 = vmatmul.bf16.gmra.mxu0 %v4843
        %v4934 = vpop.f32.mrf.mxu0
        %v4935 = vadd.f32 0.0, %v4934
        %v4936 = vpop.f32.mrf.mxu0
        %v4937 = vadd.f32 0.0, %v4936
        %4938 = vmatmul.bf16.gmra.mxu0 %v4846
        %v4939 = vpop.f32.mrf.mxu0
        %v4940 = vadd.f32 0.0, %v4939
        %v4941 = vpop.f32.mrf.mxu0
        %v4942 = vadd.f32 0.0, %v4941
        %4943 = vmatmul.bf16.gmra.mxu0 %v4849
        %v4944 = vpop.f32.mrf.mxu0
        %v4945 = vadd.f32 0.0, %v4944
        %v4946 = vpop.f32.mrf.mxu0
        %v4947 = vadd.f32 0.0, %v4946
        %4948 = vmatmul.bf16.gmra.mxu0 %v4852
        %v4949 = vpop.f32.mrf.mxu0
        %v4950 = vadd.f32 0.0, %v4949
        %v4951 = vpop.f32.mrf.mxu0
        %v4952 = vadd.f32 0.0, %v4951
        %4953 = vmatmul.bf16.gmra.mxu0 %v4855
        %v4954 = vpop.f32.mrf.mxu0
        %v4955 = vadd.f32 0.0, %v4954
        %v4956 = vpop.f32.mrf.mxu0
        %v4957 = vadd.f32 0.0, %v4956
        %4958 = vdwg.mxu0
        %v4959 = vadd.f32 %v4590, %v4870
        %v4960 = vadd.f32 %v4591, %v4872
        %v4961 = vadd.f32 %v4592, %v4875
        %v4962 = vadd.f32 %v4593, %v4877
        %v4963 = vadd.f32 %v4594, %v4880
        %v4964 = vadd.f32 %v4595, %v4882
        %v4965 = vadd.f32 %v4596, %v4885
        %v4966 = vadd.f32 %v4597, %v4887
        %v4967 = vadd.f32 %v4598, %v4890
        %v4968 = vadd.f32 %v4599, %v4892
        %v4969 = vadd.f32 %v4600, %v4895
        %v4970 = vadd.f32 %v4601, %v4897
        %v4971 = vadd.f32 %v4602, %v4900
        %v4972 = vadd.f32 %v4603, %v4902
        %v4973 = vadd.f32 %v4604, %v4905
        %v4974 = vadd.f32 %v4605, %v4907
        %v4975 = vadd.f32 %v4606, %v4910
        %v4976 = vadd.f32 %v4607, %v4912
        %v4977 = vadd.f32 %v4608, %v4915
        %v4978 = vadd.f32 %v4609, %v4917
        %v4979 = vadd.f32 %v4610, %v4920
        %v4980 = vadd.f32 %v4611, %v4922
        %v4981 = vadd.f32 %v4612, %v4925
        %v4982 = vadd.f32 %v4613, %v4927
        %v4983 = vadd.f32 %v4614, %v4930
        %v4984 = vadd.f32 %v4615, %v4932
        %v4985 = vadd.f32 %v4616, %v4935
        %v4986 = vadd.f32 %v4617, %v4937
        %v4987 = vadd.f32 %v4618, %v4940
        %v4988 = vadd.f32 %v4619, %v4942
        %v4989 = vadd.f32 %v4620, %v4945
        %v4990 = vadd.f32 %v4621, %v4947
        %v4991 = vadd.f32 %v4622, %v4950
        %v4992 = vadd.f32 %v4623, %v4952
        %v4993 = vadd.f32 %v4624, %v4955
        %v4994 = vadd.f32 %v4625, %v4957
        %v4995 = vmul.f32 %v4959, %v1611
        %v4996 = vmul.f32 %v4960, %v1616
        %v4997 = vmul.f32 %v4961, %v1621
        %v4998 = vmul.f32 %v4962, %v1626
        %v4999 = vmul.f32 %v4963, %v1631
        %v5000 = vmul.f32 %v4964, %v1636
        %v5001 = vmul.f32 %v4965, %v1641
        %v5002 = vmul.f32 %v4966, %v1646
        %v5003 = vmul.f32 %v4967, %v1651
        %v5004 = vmul.f32 %v4968, %v1656
        %v5005 = vmul.f32 %v4969, %v1661
        %v5006 = vmul.f32 %v4970, %v1666
        %v5007 = vmul.f32 %v4971, %v1671
        %v5008 = vmul.f32 %v4972, %v1676
        %v5009 = vmul.f32 %v4973, %v1681
        %v5010 = vmul.f32 %v4974, %v1686
        %v5011 = vmul.f32 %v4975, %v1691
        %v5012 = vmul.f32 %v4976, %v1696
        %v5013 = vmul.f32 %v4977, %v1701
        %v5014 = vmul.f32 %v4978, %v1706
        %v5015 = vmul.f32 %v4979, %v1711
        %v5016 = vmul.f32 %v4980, %v1716
        %v5017 = vmul.f32 %v4981, %v1721
        %v5018 = vmul.f32 %v4982, %v1726
        %v5019 = vmul.f32 %v4983, %v1731
        %v5020 = vmul.f32 %v4984, %v1736
        %v5021 = vmul.f32 %v4985, %v1741
        %v5022 = vmul.f32 %v4986, %v1746
        %v5023 = vmul.f32 %v4987, %v1751
        %v5024 = vmul.f32 %v4988, %v1756
        %v5025 = vmul.f32 %v4989, %v1761
        %v5026 = vmul.f32 %v4990, %v1766
        %v5027 = vmul.f32 %v4991, %v1771
        %v5028 = vmul.f32 %v4992, %v1776
        %v5029 = vmul.f32 %v4993, %v1781
        %v5030 = vmul.f32 %v4994, %v1786
        %v5031 = vpack.c.bf16 %v4995, %v4995
        %v5032 = vpack.c.bf16 %v4996, %v4996
        %v5033 = vpack.c.bf16 %v4997, %v4997
        %v5034 = vpack.c.bf16 %v4998, %v4998
        %v5035 = vpack.c.bf16 %v4999, %v4999
        %v5036 = vpack.c.bf16 %v5000, %v5000
        %v5037 = vpack.c.bf16 %v5001, %v5001
        %v5038 = vpack.c.bf16 %v5002, %v5002
        %v5039 = vpack.c.bf16 %v5003, %v5003
        %v5040 = vpack.c.bf16 %v5004, %v5004
        %v5041 = vpack.c.bf16 %v5005, %v5005
        %v5042 = vpack.c.bf16 %v5006, %v5006
        %v5043 = vpack.c.bf16 %v5007, %v5007
        %v5044 = vpack.c.bf16 %v5008, %v5008
        %v5045 = vpack.c.bf16 %v5009, %v5009
        %v5046 = vpack.c.bf16 %v5010, %v5010
        %v5047 = vpack.c.bf16 %v5011, %v5011
        %v5048 = vpack.c.bf16 %v5012, %v5012
        %v5049 = vpack.c.bf16 %v5013, %v5013
        %v5050 = vpack.c.bf16 %v5014, %v5014
        %v5051 = vpack.c.bf16 %v5015, %v5015
        %v5052 = vpack.c.bf16 %v5016, %v5016
        %v5053 = vpack.c.bf16 %v5017, %v5017
        %v5054 = vpack.c.bf16 %v5018, %v5018
        %v5055 = vpack.c.bf16 %v5019, %v5019
        %v5056 = vpack.c.bf16 %v5020, %v5020
        %v5057 = vpack.c.bf16 %v5021, %v5021
        %v5058 = vpack.c.bf16 %v5022, %v5022
        %v5059 = vpack.c.bf16 %v5023, %v5023
        %v5060 = vpack.c.bf16 %v5024, %v5024
        %v5061 = vpack.c.bf16 %v5025, %v5025
        %v5062 = vpack.c.bf16 %v5026, %v5026
        %v5063 = vpack.c.bf16 %v5027, %v5027
        %v5064 = vpack.c.bf16 %v5028, %v5028
        %v5065 = vpack.c.bf16 %v5029, %v5029
        %v5066 = vpack.c.bf16 %v5030, %v5030
        %s5067 = scalar_lea.vmem %s237, 288 [#allocation2]
        %5068 = vst [vmem:[%s5067] sm:$0xf] %v5031
        %5069 = vst [vmem:[%s5067 + $0x4] sm:$0xf] %v5032
        %5070 = vst [vmem:[%s5067 + $0x8] sm:$0xf] %v5033
        %5071 = vst [vmem:[%s5067 + $0xc] sm:$0xf] %v5034
        %5072 = vst [vmem:[%s5067 + $0x10] sm:$0xf] %v5035
        %5073 = vst [vmem:[%s5067 + $0x14] sm:$0xf] %v5036
        %5074 = vst [vmem:[%s5067 + $0x18] sm:$0xf] %v5037
        %5075 = vst [vmem:[%s5067 + $0x1c] sm:$0xf] %v5038
        %5076 = vst [vmem:[%s5067 + $0x20] sm:$0xf] %v5039
        %5077 = vst [vmem:[%s5067 + $0x24] sm:$0xf] %v5040
        %5078 = vst [vmem:[%s5067 + $0x28] sm:$0xf] %v5041
        %5079 = vst [vmem:[%s5067 + $0x2c] sm:$0xf] %v5042
        %5080 = vst [vmem:[%s5067 + $0x30] sm:$0xf] %v5043
        %5081 = vst [vmem:[%s5067 + $0x34] sm:$0xf] %v5044
        %5082 = vst [vmem:[%s5067 + $0x38] sm:$0xf] %v5045
        %5083 = vst [vmem:[%s5067 + $0x3c] sm:$0xf] %v5046
        %5084 = vst [vmem:[%s5067 + $0x40] sm:$0xf] %v5047
        %5085 = vst [vmem:[%s5067 + $0x44] sm:$0xf] %v5048
        %5086 = vst [vmem:[%s5067 + $0x48] sm:$0xf] %v5049
        %5087 = vst [vmem:[%s5067 + $0x4c] sm:$0xf] %v5050
        %5088 = vst [vmem:[%s5067 + $0x50] sm:$0xf] %v5051
        %5089 = vst [vmem:[%s5067 + $0x54] sm:$0xf] %v5052
        %5090 = vst [vmem:[%s5067 + $0x58] sm:$0xf] %v5053
        %5091 = vst [vmem:[%s5067 + $0x5c] sm:$0xf] %v5054
        %5092 = vst [vmem:[%s5067 + $0x60] sm:$0xf] %v5055
        %5093 = vst [vmem:[%s5067 + $0x64] sm:$0xf] %v5056
        %5094 = vst [vmem:[%s5067 + $0x68] sm:$0xf] %v5057
        %5095 = vst [vmem:[%s5067 + $0x6c] sm:$0xf] %v5058
        %5096 = vst [vmem:[%s5067 + $0x70] sm:$0xf] %v5059
        %5097 = vst [vmem:[%s5067 + $0x74] sm:$0xf] %v5060
        %5098 = vst [vmem:[%s5067 + $0x78] sm:$0xf] %v5061
        %5099 = vst [vmem:[%s5067 + $0x7c] sm:$0xf] %v5062
        %5100 = vst [vmem:[%s5067 + $0x80] sm:$0xf] %v5063
        %5101 = vst [vmem:[%s5067 + $0x84] sm:$0xf] %v5064
        %5102 = vst [vmem:[%s5067 + $0x88] sm:$0xf] %v5065
        %5103 = vst [vmem:[%s5067 + $0x8c] sm:$0xf] %v5066
        %v5104 = vadd.f32 %v4995, %v4996
        %v5105 = vadd.f32 %v5104, %v4997
        %v5106 = vadd.f32 %v5105, %v4998
        %v5107 = vadd.f32 %v5106, %v4999
        %v5108 = vadd.f32 %v5107, %v5000
        %v5109 = vadd.f32 %v5108, %v5001
        %v5110 = vadd.f32 %v5109, %v5002
        %v5111 = vadd.f32 %v5110, %v5003
        %v5112 = vadd.f32 %v5111, %v5004
        %v5113 = vadd.f32 %v5112, %v5005
        %v5114 = vadd.f32 %v5113, %v5006
        %v5115 = vadd.f32 %v5114, %v5007
        %v5116 = vadd.f32 %v5115, %v5008
        %v5117 = vadd.f32 %v5116, %v5009
        %v5118 = vadd.f32 %v5117, %v5010
        %v5119 = vadd.f32 %v5118, %v5011
        %v5120 = vadd.f32 %v5119, %v5012
        %v5121 = vadd.f32 %v5120, %v5013
        %v5122 = vadd.f32 %v5121, %v5014
        %v5123 = vadd.f32 %v5122, %v5015
        %v5124 = vadd.f32 %v5123, %v5016
        %v5125 = vadd.f32 %v5124, %v5017
        %v5126 = vadd.f32 %v5125, %v5018
        %v5127 = vadd.f32 %v5126, %v5019
        %v5128 = vadd.f32 %v5127, %v5020
        %v5129 = vadd.f32 %v5128, %v5021
        %v5130 = vadd.f32 %v5129, %v5022
        %v5131 = vadd.f32 %v5130, %v5023
        %v5132 = vadd.f32 %v5131, %v5024
        %v5133 = vadd.f32 %v5132, %v5025
        %v5134 = vadd.f32 %v5133, %v5026
        %v5135 = vadd.f32 %v5134, %v5027
        %v5136 = vadd.f32 %v5135, %v5028
        %v5137 = vadd.f32 %v5136, %v5029
        %v5138 = vadd.f32 %v5137, %v5030
        %v5139 = vrot.slane %v5138, 4
        %v5140 = vadd.f32 %v5138, %v5139
        %v5141 = vrot.slane %v5140, 2
        %v5142 = vadd.f32 %v5140, %v5141
        %v5143 = vrot.slane %v5142, 1
        %v5144 = vadd.f32 %v5142, %v5143
        %v5145 = vmul.f32 %v4995, %v4995
        %v5146 = vmul.f32 %v4996, %v4996
        %v5147 = vmul.f32 %v4997, %v4997
        %v5148 = vmul.f32 %v4998, %v4998
        %v5149 = vmul.f32 %v4999, %v4999
        %v5150 = vmul.f32 %v5000, %v5000
        %v5151 = vmul.f32 %v5001, %v5001
        %v5152 = vmul.f32 %v5002, %v5002
        %v5153 = vmul.f32 %v5003, %v5003
        %v5154 = vmul.f32 %v5004, %v5004
        %v5155 = vmul.f32 %v5005, %v5005
        %v5156 = vmul.f32 %v5006, %v5006
        %v5157 = vmul.f32 %v5007, %v5007
        %v5158 = vmul.f32 %v5008, %v5008
        %v5159 = vmul.f32 %v5009, %v5009
        %v5160 = vmul.f32 %v5010, %v5010
        %v5161 = vmul.f32 %v5011, %v5011
        %v5162 = vmul.f32 %v5012, %v5012
        %v5163 = vmul.f32 %v5013, %v5013
        %v5164 = vmul.f32 %v5014, %v5014
        %v5165 = vmul.f32 %v5015, %v5015
        %v5166 = vmul.f32 %v5016, %v5016
        %v5167 = vmul.f32 %v5017, %v5017
        %v5168 = vmul.f32 %v5018, %v5018
        %v5169 = vmul.f32 %v5019, %v5019
        %v5170 = vmul.f32 %v5020, %v5020
        %v5171 = vmul.f32 %v5021, %v5021
        %v5172 = vmul.f32 %v5022, %v5022
        %v5173 = vmul.f32 %v5023, %v5023
        %v5174 = vmul.f32 %v5024, %v5024
        %v5175 = vmul.f32 %v5025, %v5025
        %v5176 = vmul.f32 %v5026, %v5026
        %v5177 = vmul.f32 %v5027, %v5027
        %v5178 = vmul.f32 %v5028, %v5028
        %v5179 = vmul.f32 %v5029, %v5029
        %v5180 = vmul.f32 %v5030, %v5030
        %v5181 = vadd.f32 %v5145, %v5146
        %v5182 = vadd.f32 %v5181, %v5147
        %v5183 = vadd.f32 %v5182, %v5148
        %v5184 = vadd.f32 %v5183, %v5149
        %v5185 = vadd.f32 %v5184, %v5150
        %v5186 = vadd.f32 %v5185, %v5151
        %v5187 = vadd.f32 %v5186, %v5152
        %v5188 = vadd.f32 %v5187, %v5153
        %v5189 = vadd.f32 %v5188, %v5154
        %v5190 = vadd.f32 %v5189, %v5155
        %v5191 = vadd.f32 %v5190, %v5156
        %v5192 = vadd.f32 %v5191, %v5157
        %v5193 = vadd.f32 %v5192, %v5158
        %v5194 = vadd.f32 %v5193, %v5159
        %v5195 = vadd.f32 %v5194, %v5160
        %v5196 = vadd.f32 %v5195, %v5161
        %v5197 = vadd.f32 %v5196, %v5162
        %v5198 = vadd.f32 %v5197, %v5163
        %v5199 = vadd.f32 %v5198, %v5164
        %v5200 = vadd.f32 %v5199, %v5165
        %v5201 = vadd.f32 %v5200, %v5166
        %v5202 = vadd.f32 %v5201, %v5167
        %v5203 = vadd.f32 %v5202, %v5168
        %v5204 = vadd.f32 %v5203, %v5169
        %v5205 = vadd.f32 %v5204, %v5170
        %v5206 = vadd.f32 %v5205, %v5171
        %v5207 = vadd.f32 %v5206, %v5172
        %v5208 = vadd.f32 %v5207, %v5173
        %v5209 = vadd.f32 %v5208, %v5174
        %v5210 = vadd.f32 %v5209, %v5175
        %v5211 = vadd.f32 %v5210, %v5176
        %v5212 = vadd.f32 %v5211, %v5177
        %v5213 = vadd.f32 %v5212, %v5178
        %v5214 = vadd.f32 %v5213, %v5179
        %v5215 = vadd.f32 %v5214, %v5180
        %v5216 = vrot.slane %v5215, 4
        %v5217 = vadd.f32 %v5215, %v5216
        %v5218 = vrot.slane %v5217, 2
        %v5219 = vadd.f32 %v5217, %v5218
        %v5220 = vrot.slane %v5219, 1
        %v5221 = vadd.f32 %v5219, %v5220
        %v5222 = vadd.f32 %v3606, %v5144
        %v5223 = vadd.f32 %v3607, %v5221
        %v5224 = vld [vmem:[%s254 + $0x8] sm:$0xe]
        %v5225 = vld [vmem:[%s254 + $0xc] sm:$0xf]
        %v5226 = vld [vmem:[%s254 + $0x10] sm:$0xf]
        %v5227 = vld [vmem:[%s254 + $0x14] sm:$0xf]
        %v5228 = vld [vmem:[%s254 + $0x18] sm:$0xf]
        %v5229 = vld [vmem:[%s254 + $0x1c] sm:$0xf]
        %v5230 = vld [vmem:[%s254 + $0x20] sm:$0xf]
        %v5231 = vld [vmem:[%s254 + $0x24] sm:$0xf]
        %v5232 = vld [vmem:[%s254 + $0x28] sm:$0xf]
        %v5233 = vld [vmem:[%s254 + $0x2c] sm:$0xf]
        %v5234 = vld [vmem:[%s254 + $0x30] sm:$0xf]
        %v5235 = vld [vmem:[%s254 + $0x34] sm:$0xf]
        %v5236 = vld [vmem:[%s254 + $0x38] sm:$0xf]
        %v5237 = vld [vmem:[%s254 + $0x3c] sm:$0xf]
        %v5238 = vld [vmem:[%s254 + $0x40] sm:$0xf]
        %v5239 = vld [vmem:[%s254 + $0x44] sm:$0xf]
        %v5240 = vld [vmem:[%s254 + $0x48] sm:$0xf]
        %v5241 = vld [vmem:[%s254 + $0x4c] sm:$0xf]
        %v5242 = vld [vmem:[%s254 + $0x50] sm:$0xf]
        %v5243 = vld [vmem:[%s254 + $0x54] sm:$0xf]
        %v5244 = vld [vmem:[%s254 + $0x58] sm:$0xf]
        %v5245 = vld [vmem:[%s254 + $0x5c] sm:$0xf]
        %v5246 = vld [vmem:[%s254 + $0x60] sm:$0xf]
        %v5247 = vld [vmem:[%s254 + $0x64] sm:$0xf]
        %v5248 = vld [vmem:[%s254 + $0x68] sm:$0xf]
        %v5249 = vld [vmem:[%s254 + $0x6c] sm:$0xf]
        %v5250 = vld [vmem:[%s254 + $0x70] sm:$0xf]
        %v5251 = vld [vmem:[%s254 + $0x74] sm:$0xf]
        %v5252 = vld [vmem:[%s254 + $0x78] sm:$0xf]
        %v5253 = vld [vmem:[%s254 + $0x7c] sm:$0xf]
        %v5254 = vld [vmem:[%s254 + $0x80] sm:$0xf]
        %v5255 = vld [vmem:[%s254 + $0x84] sm:$0xf]
        %v5256 = vld [vmem:[%s254 + $0x88] sm:$0xf]
        %v5257 = vld [vmem:[%s254 + $0x8c] sm:$0xf]
        %v5258 = vld [vmem:[%s254 + $0x90] sm:$0xf]
        %v5259 = vld [vmem:[%s254 + $0x94] sm:$0xf]
        %v5260 = vld [vmem:[%s254 + $0x98] sm:$0x3]
        %s5261 = scalar_lea.vmem %s1, 24
        %v5262 = vld [vmem:[%s5261] sm:$0x3]
        %v5263 = vld [vmem:[%s254 + $0x8] sm:$0xc]
        %s5264 = scalar_lea.vmem %s1, 26
        %v5265 = vld [vmem:[%s5264] sm:$0x3]
        %v5303 = vunpack.c.l.b16 %v5263
        %v5304 = vunpack.c.l.b16 %v5225
        %v5305 = vunpack.c.l.b16 %v5226
        %v5306 = vunpack.c.l.b16 %v5227
        %v5307 = vunpack.c.l.b16 %v5228
        %v5308 = vunpack.c.l.b16 %v5229
        %v5309 = vunpack.c.l.b16 %v5230
        %v5310 = vunpack.c.l.b16 %v5231
        %v5311 = vunpack.c.l.b16 %v5232
        %v5312 = vunpack.c.l.b16 %v5233
        %v5313 = vunpack.c.l.b16 %v5234
        %v5314 = vunpack.c.l.b16 %v5235
        %v5315 = vunpack.c.l.b16 %v5236
        %v5316 = vunpack.c.l.b16 %v5237
        %v5317 = vunpack.c.l.b16 %v5238
        %v5318 = vunpack.c.l.b16 %v5239
        %v5319 = vunpack.c.l.b16 %v5240
        %v5320 = vunpack.c.l.b16 %v5241
        %v5321 = vunpack.c.l.b16 %v5242
        %v5322 = vunpack.c.l.b16 %v5243
        %v5323 = vunpack.c.l.b16 %v5244
        %v5324 = vunpack.c.l.b16 %v5245
        %v5325 = vunpack.c.l.b16 %v5246
        %v5326 = vunpack.c.l.b16 %v5247
        %v5327 = vunpack.c.l.b16 %v5248
        %v5328 = vunpack.c.l.b16 %v5249
        %v5329 = vunpack.c.l.b16 %v5250
        %v5330 = vunpack.c.l.b16 %v5251
        %v5331 = vunpack.c.l.b16 %v5252
        %v5332 = vunpack.c.l.b16 %v5253
        %v5333 = vunpack.c.l.b16 %v5254
        %v5334 = vunpack.c.l.b16 %v5255
        %v5335 = vunpack.c.l.b16 %v5256
        %v5336 = vunpack.c.l.b16 %v5257
        %v5337 = vunpack.c.l.b16 %v5258
        %v5338 = vunpack.c.l.b16 %v5259
        %v5339 = vunpack.c.l.b16 %v5260
        %v5340 = vpack.c.b16 %v5304, %v5303
        %v5341 = vpack.c.b16 %v5306, %v5305
        %v5342 = vpack.c.b16 %v5308, %v5307
        %v5343 = vpack.c.b16 %v5310, %v5309
        %v5344 = vpack.c.b16 %v5312, %v5311
        %v5345 = vpack.c.b16 %v5314, %v5313
        %v5346 = vpack.c.b16 %v5316, %v5315
        %v5347 = vpack.c.b16 %v5318, %v5317
        %v5348 = vpack.c.b16 %v5320, %v5319
        %v5349 = vpack.c.b16 %v5322, %v5321
        %v5350 = vpack.c.b16 %v5324, %v5323
        %v5351 = vpack.c.b16 %v5326, %v5325
        %v5352 = vpack.c.b16 %v5328, %v5327
        %v5353 = vpack.c.b16 %v5330, %v5329
        %v5354 = vpack.c.b16 %v5332, %v5331
        %v5355 = vpack.c.b16 %v5334, %v5333
        %v5356 = vpack.c.b16 %v5336, %v5335
        %v5357 = vpack.c.b16 %v5338, %v5337
        %v5358 = vpack.c.b16 %v5339, %v5339
        %v5359 = vrot.slane %v5340, 2
        %v5360 = vrot.slane %v5341, 2
        %v5361 = vsel %vm3149, %v5359, %v5360
        %v5362 = vrot.slane %v5342, 2
        %v5363 = vsel %vm3149, %v5360, %v5362
        %v5364 = vrot.slane %v5343, 2
        %v5365 = vsel %vm3149, %v5362, %v5364
        %v5366 = vrot.slane %v5344, 2
        %v5367 = vsel %vm3149, %v5364, %v5366
        %v5368 = vrot.slane %v5345, 2
        %v5369 = vsel %vm3149, %v5366, %v5368
        %v5370 = vrot.slane %v5346, 2
        %v5371 = vsel %vm3149, %v5368, %v5370
        %v5372 = vrot.slane %v5347, 2
        %v5373 = vsel %vm3149, %v5370, %v5372
        %v5374 = vrot.slane %v5348, 2
        %v5375 = vsel %vm3149, %v5372, %v5374
        %v5376 = vrot.slane %v5349, 2
        %v5377 = vsel %vm3149, %v5374, %v5376
        %v5378 = vrot.slane %v5350, 2
        %v5379 = vsel %vm3149, %v5376, %v5378
        %v5380 = vrot.slane %v5351, 2
        %v5381 = vsel %vm3149, %v5378, %v5380
        %v5382 = vrot.slane %v5352, 2
        %v5383 = vsel %vm3149, %v5380, %v5382
        %v5384 = vrot.slane %v5353, 2
        %v5385 = vsel %vm3149, %v5382, %v5384
        %v5386 = vrot.slane %v5354, 2
        %v5387 = vsel %vm3149, %v5384, %v5386
        %v5388 = vrot.slane %v5355, 2
        %v5389 = vsel %vm3149, %v5386, %v5388
        %v5390 = vrot.slane %v5356, 2
        %v5391 = vsel %vm3149, %v5388, %v5390
        %v5392 = vrot.slane %v5357, 2
        %v5393 = vsel %vm3149, %v5390, %v5392
        %v5394 = vrot.slane %v5358, 2
        %v5395 = vsel %vm3149, %v5392, %v5394
        %v5397 = vsel %vm581, %v5361, 0
        %v5400 = vsel %vm581, %v5363, 0
        %v5403 = vsel %vm581, %v5365, 0
        %v5406 = vsel %vm581, %v5367, 0
        %v5409 = vsel %vm581, %v5369, 0
        %v5412 = vsel %vm581, %v5371, 0
        %v5415 = vsel %vm581, %v5373, 0
        %v5418 = vsel %vm581, %v5375, 0
        %v5421 = vsel %vm581, %v5377, 0
        %v5424 = vsel %vm581, %v5379, 0
        %v5427 = vsel %vm581, %v5381, 0
        %v5430 = vsel %vm581, %v5383, 0
        %v5433 = vsel %vm581, %v5385, 0
        %v5436 = vsel %vm581, %v5387, 0
        %v5439 = vsel %vm581, %v5389, 0
        %v5442 = vsel %vm581, %v5391, 0
        %v5445 = vsel %vm581, %v5393, 0
        %v5448 = vsel %vm581, %v5395, 0
        %v5451 = vsel %vm636, %v5265, 0
        %5453 = vmatpush.bf16.msra.mxu0 0
        %5454 = vmatpush.bf16.msra.mxu0 0
        %5455 = vmatpush.bf16.msra.mxu0 0
        %5456 = vmatpush.bf16.msra.mxu0 0
        %5457 = vmatpush.bf16.msra.mxu0 0
        %5458 = vmatpush.bf16.msra.mxu0 0
        %5459 = vmatpush.bf16.msra.mxu0 0
        %5460 = vmatpush.bf16.msra.mxu0 %v5451
        %5461 = vmatmul.bf16.gmra.mxu0 %v5397
        %v5462 = vpop.f32.mrf.mxu0
        %v5463 = vadd.f32 0.0, %v5462
        %v5464 = vpop.f32.mrf.mxu0
        %v5465 = vadd.f32 0.0, %v5464
        %5466 = vmatmul.bf16.gmra.mxu0 %v5400
        %v5467 = vpop.f32.mrf.mxu0
        %v5468 = vadd.f32 0.0, %v5467
        %v5469 = vpop.f32.mrf.mxu0
        %v5470 = vadd.f32 0.0, %v5469
        %5471 = vmatmul.bf16.gmra.mxu0 %v5403
        %v5472 = vpop.f32.mrf.mxu0
        %v5473 = vadd.f32 0.0, %v5472
        %v5474 = vpop.f32.mrf.mxu0
        %v5475 = vadd.f32 0.0, %v5474
        %5476 = vmatmul.bf16.gmra.mxu0 %v5406
        %v5477 = vpop.f32.mrf.mxu0
        %v5478 = vadd.f32 0.0, %v5477
        %v5479 = vpop.f32.mrf.mxu0
        %v5480 = vadd.f32 0.0, %v5479
        %5481 = vmatmul.bf16.gmra.mxu0 %v5409
        %v5482 = vpop.f32.mrf.mxu0
        %v5483 = vadd.f32 0.0, %v5482
        %v5484 = vpop.f32.mrf.mxu0
        %v5485 = vadd.f32 0.0, %v5484
        %5486 = vmatmul.bf16.gmra.mxu0 %v5412
        %v5487 = vpop.f32.mrf.mxu0
        %v5488 = vadd.f32 0.0, %v5487
        %v5489 = vpop.f32.mrf.mxu0
        %v5490 = vadd.f32 0.0, %v5489
        %5491 = vmatmul.bf16.gmra.mxu0 %v5415
        %v5492 = vpop.f32.mrf.mxu0
        %v5493 = vadd.f32 0.0, %v5492
        %v5494 = vpop.f32.mrf.mxu0
        %v5495 = vadd.f32 0.0, %v5494
        %5496 = vmatmul.bf16.gmra.mxu0 %v5418
        %v5497 = vpop.f32.mrf.mxu0
        %v5498 = vadd.f32 0.0, %v5497
        %v5499 = vpop.f32.mrf.mxu0
        %v5500 = vadd.f32 0.0, %v5499
        %5501 = vmatmul.bf16.gmra.mxu0 %v5421
        %v5502 = vpop.f32.mrf.mxu0
        %v5503 = vadd.f32 0.0, %v5502
        %v5504 = vpop.f32.mrf.mxu0
        %v5505 = vadd.f32 0.0, %v5504
        %5506 = vmatmul.bf16.gmra.mxu0 %v5424
        %v5507 = vpop.f32.mrf.mxu0
        %v5508 = vadd.f32 0.0, %v5507
        %v5509 = vpop.f32.mrf.mxu0
        %v5510 = vadd.f32 0.0, %v5509
        %5511 = vmatmul.bf16.gmra.mxu0 %v5427
        %v5512 = vpop.f32.mrf.mxu0
        %v5513 = vadd.f32 0.0, %v5512
        %v5514 = vpop.f32.mrf.mxu0
        %v5515 = vadd.f32 0.0, %v5514
        %5516 = vmatmul.bf16.gmra.mxu0 %v5430
        %v5517 = vpop.f32.mrf.mxu0
        %v5518 = vadd.f32 0.0, %v5517
        %v5519 = vpop.f32.mrf.mxu0
        %v5520 = vadd.f32 0.0, %v5519
        %5521 = vmatmul.bf16.gmra.mxu0 %v5433
        %v5522 = vpop.f32.mrf.mxu0
        %v5523 = vadd.f32 0.0, %v5522
        %v5524 = vpop.f32.mrf.mxu0
        %v5525 = vadd.f32 0.0, %v5524
        %5526 = vmatmul.bf16.gmra.mxu0 %v5436
        %v5527 = vpop.f32.mrf.mxu0
        %v5528 = vadd.f32 0.0, %v5527
        %v5529 = vpop.f32.mrf.mxu0
        %v5530 = vadd.f32 0.0, %v5529
        %5531 = vmatmul.bf16.gmra.mxu0 %v5439
        %v5532 = vpop.f32.mrf.mxu0
        %v5533 = vadd.f32 0.0, %v5532
        %v5534 = vpop.f32.mrf.mxu0
        %v5535 = vadd.f32 0.0, %v5534
        %5536 = vmatmul.bf16.gmra.mxu0 %v5442
        %v5537 = vpop.f32.mrf.mxu0
        %v5538 = vadd.f32 0.0, %v5537
        %v5539 = vpop.f32.mrf.mxu0
        %v5540 = vadd.f32 0.0, %v5539
        %5541 = vmatmul.bf16.gmra.mxu0 %v5445
        %v5542 = vpop.f32.mrf.mxu0
        %v5543 = vadd.f32 0.0, %v5542
        %v5544 = vpop.f32.mrf.mxu0
        %v5545 = vadd.f32 0.0, %v5544
        %5546 = vmatmul.bf16.gmra.mxu0 %v5448
        %v5547 = vpop.f32.mrf.mxu0
        %v5548 = vadd.f32 0.0, %v5547
        %v5549 = vpop.f32.mrf.mxu0
        %v5550 = vadd.f32 0.0, %v5549
        %5551 = vdwg.mxu0
        %v5553 = vunpack.c.l.b16 %v5224
        %v5554 = vpack.c.b16 %v5304, %v5553
        %v5556 = vshrl.u32 %v5554, 16
        %v5558 = vrot.slane %v5556, 1
        %v5559 = vshll.u32 %v5554, 16
        %v5561 = vrot.slane %v5559, 2
        %v5562 = vor.u32 %v5558, %v5561
        %v5564 = vshrl.u32 %v5341, 16
        %v5566 = vrot.slane %v5564, 1
        %v5567 = vshll.u32 %v5341, 16
        %v5569 = vrot.slane %v5567, 2
        %v5570 = vor.u32 %v5566, %v5569
        %v5571 = vsel %vm1245, %v5562, %v5570
        %v5573 = vshrl.u32 %v5342, 16
        %v5575 = vrot.slane %v5573, 1
        %v5576 = vshll.u32 %v5342, 16
        %v5578 = vrot.slane %v5576, 2
        %v5579 = vor.u32 %v5575, %v5578
        %v5580 = vsel %vm1245, %v5570, %v5579
        %v5582 = vshrl.u32 %v5343, 16
        %v5584 = vrot.slane %v5582, 1
        %v5585 = vshll.u32 %v5343, 16
        %v5587 = vrot.slane %v5585, 2
        %v5588 = vor.u32 %v5584, %v5587
        %v5589 = vsel %vm1245, %v5579, %v5588
        %v5591 = vshrl.u32 %v5344, 16
        %v5593 = vrot.slane %v5591, 1
        %v5594 = vshll.u32 %v5344, 16
        %v5596 = vrot.slane %v5594, 2
        %v5597 = vor.u32 %v5593, %v5596
        %v5598 = vsel %vm1245, %v5588, %v5597
        %v5600 = vshrl.u32 %v5345, 16
        %v5602 = vrot.slane %v5600, 1
        %v5603 = vshll.u32 %v5345, 16
        %v5605 = vrot.slane %v5603, 2
        %v5606 = vor.u32 %v5602, %v5605
        %v5607 = vsel %vm1245, %v5597, %v5606
        %v5609 = vshrl.u32 %v5346, 16
        %v5611 = vrot.slane %v5609, 1
        %v5612 = vshll.u32 %v5346, 16
        %v5614 = vrot.slane %v5612, 2
        %v5615 = vor.u32 %v5611, %v5614
        %v5616 = vsel %vm1245, %v5606, %v5615
        %v5618 = vshrl.u32 %v5347, 16
        %v5620 = vrot.slane %v5618, 1
        %v5621 = vshll.u32 %v5347, 16
        %v5623 = vrot.slane %v5621, 2
        %v5624 = vor.u32 %v5620, %v5623
        %v5625 = vsel %vm1245, %v5615, %v5624
        %v5627 = vshrl.u32 %v5348, 16
        %v5629 = vrot.slane %v5627, 1
        %v5630 = vshll.u32 %v5348, 16
        %v5632 = vrot.slane %v5630, 2
        %v5633 = vor.u32 %v5629, %v5632
        %v5634 = vsel %vm1245, %v5624, %v5633
        %v5636 = vshrl.u32 %v5349, 16
        %v5638 = vrot.slane %v5636, 1
        %v5639 = vshll.u32 %v5349, 16
        %v5641 = vrot.slane %v5639, 2
        %v5642 = vor.u32 %v5638, %v5641
        %v5643 = vsel %vm1245, %v5633, %v5642
        %v5645 = vshrl.u32 %v5350, 16
        %v5647 = vrot.slane %v5645, 1
        %v5648 = vshll.u32 %v5350, 16
        %v5650 = vrot.slane %v5648, 2
        %v5651 = vor.u32 %v5647, %v5650
        %v5652 = vsel %vm1245, %v5642, %v5651
        %v5654 = vshrl.u32 %v5351, 16
        %v5656 = vrot.slane %v5654, 1
        %v5657 = vshll.u32 %v5351, 16
        %v5659 = vrot.slane %v5657, 2
        %v5660 = vor.u32 %v5656, %v5659
        %v5661 = vsel %vm1245, %v5651, %v5660
        %v5663 = vshrl.u32 %v5352, 16
        %v5665 = vrot.slane %v5663, 1
        %v5666 = vshll.u32 %v5352, 16
        %v5668 = vrot.slane %v5666, 2
        %v5669 = vor.u32 %v5665, %v5668
        %v5670 = vsel %vm1245, %v5660, %v5669
        %v5672 = vshrl.u32 %v5353, 16
        %v5674 = vrot.slane %v5672, 1
        %v5675 = vshll.u32 %v5353, 16
        %v5677 = vrot.slane %v5675, 2
        %v5678 = vor.u32 %v5674, %v5677
        %v5679 = vsel %vm1245, %v5669, %v5678
        %v5681 = vshrl.u32 %v5354, 16
        %v5683 = vrot.slane %v5681, 1
        %v5684 = vshll.u32 %v5354, 16
        %v5686 = vrot.slane %v5684, 2
        %v5687 = vor.u32 %v5683, %v5686
        %v5688 = vsel %vm1245, %v5678, %v5687
        %v5690 = vshrl.u32 %v5355, 16
        %v5692 = vrot.slane %v5690, 1
        %v5693 = vshll.u32 %v5355, 16
        %v5695 = vrot.slane %v5693, 2
        %v5696 = vor.u32 %v5692, %v5695
        %v5697 = vsel %vm1245, %v5687, %v5696
        %v5699 = vshrl.u32 %v5356, 16
        %v5701 = vrot.slane %v5699, 1
        %v5702 = vshll.u32 %v5356, 16
        %v5704 = vrot.slane %v5702, 2
        %v5705 = vor.u32 %v5701, %v5704
        %v5706 = vsel %vm1245, %v5696, %v5705
        %v5708 = vshrl.u32 %v5357, 16
        %v5710 = vrot.slane %v5708, 1
        %v5711 = vshll.u32 %v5357, 16
        %v5713 = vrot.slane %v5711, 2
        %v5714 = vor.u32 %v5710, %v5713
        %v5715 = vsel %vm1245, %v5705, %v5714
        %v5717 = vshrl.u32 %v5358, 16
        %v5719 = vrot.slane %v5717, 1
        %v5720 = vshll.u32 %v5358, 16
        %v5722 = vrot.slane %v5720, 2
        %v5723 = vor.u32 %v5719, %v5722
        %v5724 = vsel %vm1245, %v5714, %v5723
        %v5726 = vsel %vm581, %v5571, 0
        %v5729 = vsel %vm581, %v5580, 0
        %v5732 = vsel %vm581, %v5589, 0
        %v5735 = vsel %vm581, %v5598, 0
        %v5738 = vsel %vm581, %v5607, 0
        %v5741 = vsel %vm581, %v5616, 0
        %v5744 = vsel %vm581, %v5625, 0
        %v5747 = vsel %vm581, %v5634, 0
        %v5750 = vsel %vm581, %v5643, 0
        %v5753 = vsel %vm581, %v5652, 0
        %v5756 = vsel %vm581, %v5661, 0
        %v5759 = vsel %vm581, %v5670, 0
        %v5762 = vsel %vm581, %v5679, 0
        %v5765 = vsel %vm581, %v5688, 0
        %v5768 = vsel %vm581, %v5697, 0
        %v5771 = vsel %vm581, %v5706, 0
        %v5774 = vsel %vm581, %v5715, 0
        %v5777 = vsel %vm581, %v5724, 0
        %v5780 = vsel %vm636, %v5262, 0
        %5782 = vmatpush.bf16.msra.mxu0 0
        %5783 = vmatpush.bf16.msra.mxu0 0
        %5784 = vmatpush.bf16.msra.mxu0 0
        %5785 = vmatpush.bf16.msra.mxu0 0
        %5786 = vmatpush.bf16.msra.mxu0 0
        %5787 = vmatpush.bf16.msra.mxu0 0
        %5788 = vmatpush.bf16.msra.mxu0 0
        %5789 = vmatpush.bf16.msra.mxu0 %v5780
        %5790 = vmatmul.bf16.gmra.mxu0 %v5726
        %v5791 = vpop.f32.mrf.mxu0
        %v5792 = vadd.f32 %v5463, %v5791
        %v5793 = vpop.f32.mrf.mxu0
        %v5794 = vadd.f32 %v5465, %v5793
        %5795 = vmatmul.bf16.gmra.mxu0 %v5729
        %v5796 = vpop.f32.mrf.mxu0
        %v5797 = vadd.f32 %v5468, %v5796
        %v5798 = vpop.f32.mrf.mxu0
        %v5799 = vadd.f32 %v5470, %v5798
        %5800 = vmatmul.bf16.gmra.mxu0 %v5732
        %v5801 = vpop.f32.mrf.mxu0
        %v5802 = vadd.f32 %v5473, %v5801
        %v5803 = vpop.f32.mrf.mxu0
        %v5804 = vadd.f32 %v5475, %v5803
        %5805 = vmatmul.bf16.gmra.mxu0 %v5735
        %v5806 = vpop.f32.mrf.mxu0
        %v5807 = vadd.f32 %v5478, %v5806
        %v5808 = vpop.f32.mrf.mxu0
        %v5809 = vadd.f32 %v5480, %v5808
        %5810 = vmatmul.bf16.gmra.mxu0 %v5738
        %v5811 = vpop.f32.mrf.mxu0
        %v5812 = vadd.f32 %v5483, %v5811
        %v5813 = vpop.f32.mrf.mxu0
        %v5814 = vadd.f32 %v5485, %v5813
        %5815 = vmatmul.bf16.gmra.mxu0 %v5741
        %v5816 = vpop.f32.mrf.mxu0
        %v5817 = vadd.f32 %v5488, %v5816
        %v5818 = vpop.f32.mrf.mxu0
        %v5819 = vadd.f32 %v5490, %v5818
        %5820 = vmatmul.bf16.gmra.mxu0 %v5744
        %v5821 = vpop.f32.mrf.mxu0
        %v5822 = vadd.f32 %v5493, %v5821
        %v5823 = vpop.f32.mrf.mxu0
        %v5824 = vadd.f32 %v5495, %v5823
        %5825 = vmatmul.bf16.gmra.mxu0 %v5747
        %v5826 = vpop.f32.mrf.mxu0
        %v5827 = vadd.f32 %v5498, %v5826
        %v5828 = vpop.f32.mrf.mxu0
        %v5829 = vadd.f32 %v5500, %v5828
        %5830 = vmatmul.bf16.gmra.mxu0 %v5750
        %v5831 = vpop.f32.mrf.mxu0
        %v5832 = vadd.f32 %v5503, %v5831
        %v5833 = vpop.f32.mrf.mxu0
        %v5834 = vadd.f32 %v5505, %v5833
        %5835 = vmatmul.bf16.gmra.mxu0 %v5753
        %v5836 = vpop.f32.mrf.mxu0
        %v5837 = vadd.f32 %v5508, %v5836
        %v5838 = vpop.f32.mrf.mxu0
        %v5839 = vadd.f32 %v5510, %v5838
        %5840 = vmatmul.bf16.gmra.mxu0 %v5756
        %v5841 = vpop.f32.mrf.mxu0
        %v5842 = vadd.f32 %v5513, %v5841
        %v5843 = vpop.f32.mrf.mxu0
        %v5844 = vadd.f32 %v5515, %v5843
        %5845 = vmatmul.bf16.gmra.mxu0 %v5759
        %v5846 = vpop.f32.mrf.mxu0
        %v5847 = vadd.f32 %v5518, %v5846
        %v5848 = vpop.f32.mrf.mxu0
        %v5849 = vadd.f32 %v5520, %v5848
        %5850 = vmatmul.bf16.gmra.mxu0 %v5762
        %v5851 = vpop.f32.mrf.mxu0
        %v5852 = vadd.f32 %v5523, %v5851
        %v5853 = vpop.f32.mrf.mxu0
        %v5854 = vadd.f32 %v5525, %v5853
        %5855 = vmatmul.bf16.gmra.mxu0 %v5765
        %v5856 = vpop.f32.mrf.mxu0
        %v5857 = vadd.f32 %v5528, %v5856
        %v5858 = vpop.f32.mrf.mxu0
        %v5859 = vadd.f32 %v5530, %v5858
        %5860 = vmatmul.bf16.gmra.mxu0 %v5768
        %v5861 = vpop.f32.mrf.mxu0
        %v5862 = vadd.f32 %v5533, %v5861
        %v5863 = vpop.f32.mrf.mxu0
        %v5864 = vadd.f32 %v5535, %v5863
        %5865 = vmatmul.bf16.gmra.mxu0 %v5771
        %v5866 = vpop.f32.mrf.mxu0
        %v5867 = vadd.f32 %v5538, %v5866
        %v5868 = vpop.f32.mrf.mxu0
        %v5869 = vadd.f32 %v5540, %v5868
        %5870 = vmatmul.bf16.gmra.mxu0 %v5774
        %v5871 = vpop.f32.mrf.mxu0
        %v5872 = vadd.f32 %v5543, %v5871
        %v5873 = vpop.f32.mrf.mxu0
        %v5874 = vadd.f32 %v5545, %v5873
        %5875 = vmatmul.bf16.gmra.mxu0 %v5777
        %v5876 = vpop.f32.mrf.mxu0
        %v5877 = vadd.f32 %v5548, %v5876
        %v5878 = vpop.f32.mrf.mxu0
        %v5879 = vadd.f32 %v5550, %v5878
        %5880 = vdwg.mxu0
        %v5881 = vld [vmem:[%s254 + $0x10] sm:$0xc]
        %v5882 = vld [vmem:[%s254 + $0x14] sm:$0xf]
        %v5883 = vld [vmem:[%s254 + $0x18] sm:$0xf]
        %v5884 = vld [vmem:[%s254 + $0x1c] sm:$0xf]
        %v5885 = vld [vmem:[%s254 + $0x20] sm:$0xf]
        %v5886 = vld [vmem:[%s254 + $0x24] sm:$0xf]
        %v5887 = vld [vmem:[%s254 + $0x28] sm:$0xf]
        %v5888 = vld [vmem:[%s254 + $0x2c] sm:$0xf]
        %v5889 = vld [vmem:[%s254 + $0x30] sm:$0xf]
        %v5890 = vld [vmem:[%s254 + $0x34] sm:$0xf]
        %v5891 = vld [vmem:[%s254 + $0x38] sm:$0xf]
        %v5892 = vld [vmem:[%s254 + $0x3c] sm:$0xf]
        %v5893 = vld [vmem:[%s254 + $0x40] sm:$0xf]
        %v5894 = vld [vmem:[%s254 + $0x44] sm:$0xf]
        %v5895 = vld [vmem:[%s254 + $0x48] sm:$0xf]
        %v5896 = vld [vmem:[%s254 + $0x4c] sm:$0xf]
        %v5897 = vld [vmem:[%s254 + $0x50] sm:$0xf]
        %v5898 = vld [vmem:[%s254 + $0x54] sm:$0xf]
        %v5899 = vld [vmem:[%s254 + $0x58] sm:$0xf]
        %v5900 = vld [vmem:[%s254 + $0x5c] sm:$0xf]
        %v5901 = vld [vmem:[%s254 + $0x60] sm:$0xf]
        %v5902 = vld [vmem:[%s254 + $0x64] sm:$0xf]
        %v5903 = vld [vmem:[%s254 + $0x68] sm:$0xf]
        %v5904 = vld [vmem:[%s254 + $0x6c] sm:$0xf]
        %v5905 = vld [vmem:[%s254 + $0x70] sm:$0xf]
        %v5906 = vld [vmem:[%s254 + $0x74] sm:$0xf]
        %v5907 = vld [vmem:[%s254 + $0x78] sm:$0xf]
        %v5908 = vld [vmem:[%s254 + $0x7c] sm:$0xf]
        %v5909 = vld [vmem:[%s254 + $0x80] sm:$0xf]
        %v5910 = vld [vmem:[%s254 + $0x84] sm:$0xf]
        %v5911 = vld [vmem:[%s254 + $0x88] sm:$0xf]
        %v5912 = vld [vmem:[%s254 + $0x8c] sm:$0xf]
        %v5913 = vld [vmem:[%s254 + $0x90] sm:$0xf]
        %v5914 = vld [vmem:[%s254 + $0x94] sm:$0xf]
        %v5915 = vld [vmem:[%s254 + $0x98] sm:$0xf]
        %v5916 = vld [vmem:[%s254 + $0x9c] sm:$0xf]
        %v5917 = vld [vmem:[%s254 + $0xa0] sm:$0x7]
        %s5918 = scalar_lea.vmem %s1, 28
        %v5919 = vld [vmem:[%s5918] sm:$0x3]
        %v5957 = vunpack.c.l.b16 %v5881
        %v5958 = vunpack.c.l.b16 %v5882
        %v5959 = vunpack.c.l.b16 %v5883
        %v5960 = vunpack.c.l.b16 %v5884
        %v5961 = vunpack.c.l.b16 %v5885
        %v5962 = vunpack.c.l.b16 %v5886
        %v5963 = vunpack.c.l.b16 %v5887
        %v5964 = vunpack.c.l.b16 %v5888
        %v5965 = vunpack.c.l.b16 %v5889
        %v5966 = vunpack.c.l.b16 %v5890
        %v5967 = vunpack.c.l.b16 %v5891
        %v5968 = vunpack.c.l.b16 %v5892
        %v5969 = vunpack.c.l.b16 %v5893
        %v5970 = vunpack.c.l.b16 %v5894
        %v5971 = vunpack.c.l.b16 %v5895
        %v5972 = vunpack.c.l.b16 %v5896
        %v5973 = vunpack.c.l.b16 %v5897
        %v5974 = vunpack.c.l.b16 %v5898
        %v5975 = vunpack.c.l.b16 %v5899
        %v5976 = vunpack.c.l.b16 %v5900
        %v5977 = vunpack.c.l.b16 %v5901
        %v5978 = vunpack.c.l.b16 %v5902
        %v5979 = vunpack.c.l.b16 %v5903
        %v5980 = vunpack.c.l.b16 %v5904
        %v5981 = vunpack.c.l.b16 %v5905
        %v5982 = vunpack.c.l.b16 %v5906
        %v5983 = vunpack.c.l.b16 %v5907
        %v5984 = vunpack.c.l.b16 %v5908
        %v5985 = vunpack.c.l.b16 %v5909
        %v5986 = vunpack.c.l.b16 %v5910
        %v5987 = vunpack.c.l.b16 %v5911
        %v5988 = vunpack.c.l.b16 %v5912
        %v5989 = vunpack.c.l.b16 %v5913
        %v5990 = vunpack.c.l.b16 %v5914
        %v5991 = vunpack.c.l.b16 %v5915
        %v5992 = vunpack.c.l.b16 %v5916
        %v5993 = vunpack.c.l.b16 %v5917
        %v5994 = vpack.c.b16 %v5958, %v5957
        %v5995 = vpack.c.b16 %v5960, %v5959
        %v5996 = vpack.c.b16 %v5962, %v5961
        %v5997 = vpack.c.b16 %v5964, %v5963
        %v5998 = vpack.c.b16 %v5966, %v5965
        %v5999 = vpack.c.b16 %v5968, %v5967
        %v6000 = vpack.c.b16 %v5970, %v5969
        %v6001 = vpack.c.b16 %v5972, %v5971
        %v6002 = vpack.c.b16 %v5974, %v5973
        %v6003 = vpack.c.b16 %v5976, %v5975
        %v6004 = vpack.c.b16 %v5978, %v5977
        %v6005 = vpack.c.b16 %v5980, %v5979
        %v6006 = vpack.c.b16 %v5982, %v5981
        %v6007 = vpack.c.b16 %v5984, %v5983
        %v6008 = vpack.c.b16 %v5986, %v5985
        %v6009 = vpack.c.b16 %v5988, %v5987
        %v6010 = vpack.c.b16 %v5990, %v5989
        %v6011 = vpack.c.b16 %v5992, %v5991
        %v6012 = vpack.c.b16 %v5993, %v5993
        %v6014 = vshrl.u32 %v5994, 16
        %v6016 = vrot.slane %v6014, 2
        %v6017 = vshll.u32 %v5994, 16
        %v6019 = vrot.slane %v6017, 3
        %v6020 = vor.u32 %v6016, %v6019
        %v6022 = vshrl.u32 %v5995, 16
        %v6024 = vrot.slane %v6022, 2
        %v6025 = vshll.u32 %v5995, 16
        %v6027 = vrot.slane %v6025, 3
        %v6028 = vor.u32 %v6024, %v6027
        %v6029 = vsel %vm4632, %v6020, %v6028
        %v6031 = vshrl.u32 %v5996, 16
        %v6033 = vrot.slane %v6031, 2
        %v6034 = vshll.u32 %v5996, 16
        %v6036 = vrot.slane %v6034, 3
        %v6037 = vor.u32 %v6033, %v6036
        %v6038 = vsel %vm4632, %v6028, %v6037
        %v6040 = vshrl.u32 %v5997, 16
        %v6042 = vrot.slane %v6040, 2
        %v6043 = vshll.u32 %v5997, 16
        %v6045 = vrot.slane %v6043, 3
        %v6046 = vor.u32 %v6042, %v6045
        %v6047 = vsel %vm4632, %v6037, %v6046
        %v6049 = vshrl.u32 %v5998, 16
        %v6051 = vrot.slane %v6049, 2
        %v6052 = vshll.u32 %v5998, 16
        %v6054 = vrot.slane %v6052, 3
        %v6055 = vor.u32 %v6051, %v6054
        %v6056 = vsel %vm4632, %v6046, %v6055
        %v6058 = vshrl.u32 %v5999, 16
        %v6060 = vrot.slane %v6058, 2
        %v6061 = vshll.u32 %v5999, 16
        %v6063 = vrot.slane %v6061, 3
        %v6064 = vor.u32 %v6060, %v6063
        %v6065 = vsel %vm4632, %v6055, %v6064
        %v6067 = vshrl.u32 %v6000, 16
        %v6069 = vrot.slane %v6067, 2
        %v6070 = vshll.u32 %v6000, 16
        %v6072 = vrot.slane %v6070, 3
        %v6073 = vor.u32 %v6069, %v6072
        %v6074 = vsel %vm4632, %v6064, %v6073
        %v6076 = vshrl.u32 %v6001, 16
        %v6078 = vrot.slane %v6076, 2
        %v6079 = vshll.u32 %v6001, 16
        %v6081 = vrot.slane %v6079, 3
        %v6082 = vor.u32 %v6078, %v6081
        %v6083 = vsel %vm4632, %v6073, %v6082
        %v6085 = vshrl.u32 %v6002, 16
        %v6087 = vrot.slane %v6085, 2
        %v6088 = vshll.u32 %v6002, 16
        %v6090 = vrot.slane %v6088, 3
        %v6091 = vor.u32 %v6087, %v6090
        %v6092 = vsel %vm4632, %v6082, %v6091
        %v6094 = vshrl.u32 %v6003, 16
        %v6096 = vrot.slane %v6094, 2
        %v6097 = vshll.u32 %v6003, 16
        %v6099 = vrot.slane %v6097, 3
        %v6100 = vor.u32 %v6096, %v6099
        %v6101 = vsel %vm4632, %v6091, %v6100
        %v6103 = vshrl.u32 %v6004, 16
        %v6105 = vrot.slane %v6103, 2
        %v6106 = vshll.u32 %v6004, 16
        %v6108 = vrot.slane %v6106, 3
        %v6109 = vor.u32 %v6105, %v6108
        %v6110 = vsel %vm4632, %v6100, %v6109
        %v6112 = vshrl.u32 %v6005, 16
        %v6114 = vrot.slane %v6112, 2
        %v6115 = vshll.u32 %v6005, 16
        %v6117 = vrot.slane %v6115, 3
        %v6118 = vor.u32 %v6114, %v6117
        %v6119 = vsel %vm4632, %v6109, %v6118
        %v6121 = vshrl.u32 %v6006, 16
        %v6123 = vrot.slane %v6121, 2
        %v6124 = vshll.u32 %v6006, 16
        %v6126 = vrot.slane %v6124, 3
        %v6127 = vor.u32 %v6123, %v6126
        %v6128 = vsel %vm4632, %v6118, %v6127
        %v6130 = vshrl.u32 %v6007, 16
        %v6132 = vrot.slane %v6130, 2
        %v6133 = vshll.u32 %v6007, 16
        %v6135 = vrot.slane %v6133, 3
        %v6136 = vor.u32 %v6132, %v6135
        %v6137 = vsel %vm4632, %v6127, %v6136
        %v6139 = vshrl.u32 %v6008, 16
        %v6141 = vrot.slane %v6139, 2
        %v6142 = vshll.u32 %v6008, 16
        %v6144 = vrot.slane %v6142, 3
        %v6145 = vor.u32 %v6141, %v6144
        %v6146 = vsel %vm4632, %v6136, %v6145
        %v6148 = vshrl.u32 %v6009, 16
        %v6150 = vrot.slane %v6148, 2
        %v6151 = vshll.u32 %v6009, 16
        %v6153 = vrot.slane %v6151, 3
        %v6154 = vor.u32 %v6150, %v6153
        %v6155 = vsel %vm4632, %v6145, %v6154
        %v6157 = vshrl.u32 %v6010, 16
        %v6159 = vrot.slane %v6157, 2
        %v6160 = vshll.u32 %v6010, 16
        %v6162 = vrot.slane %v6160, 3
        %v6163 = vor.u32 %v6159, %v6162
        %v6164 = vsel %vm4632, %v6154, %v6163
        %v6166 = vshrl.u32 %v6011, 16
        %v6168 = vrot.slane %v6166, 2
        %v6169 = vshll.u32 %v6011, 16
        %v6171 = vrot.slane %v6169, 3
        %v6172 = vor.u32 %v6168, %v6171
        %v6173 = vsel %vm4632, %v6163, %v6172
        %v6175 = vshrl.u32 %v6012, 16
        %v6177 = vrot.slane %v6175, 2
        %v6178 = vshll.u32 %v6012, 16
        %v6180 = vrot.slane %v6178, 3
        %v6181 = vor.u32 %v6177, %v6180
        %v6182 = vsel %vm4632, %v6172, %v6181
        %v6184 = vsel %vm581, %v6029, 0
        %v6187 = vsel %vm581, %v6038, 0
        %v6190 = vsel %vm581, %v6047, 0
        %v6193 = vsel %vm581, %v6056, 0
        %v6196 = vsel %vm581, %v6065, 0
        %v6199 = vsel %vm581, %v6074, 0
        %v6202 = vsel %vm581, %v6083, 0
        %v6205 = vsel %vm581, %v6092, 0
        %v6208 = vsel %vm581, %v6101, 0
        %v6211 = vsel %vm581, %v6110, 0
        %v6214 = vsel %vm581, %v6119, 0
        %v6217 = vsel %vm581, %v6128, 0
        %v6220 = vsel %vm581, %v6137, 0
        %v6223 = vsel %vm581, %v6146, 0
        %v6226 = vsel %vm581, %v6155, 0
        %v6229 = vsel %vm581, %v6164, 0
        %v6232 = vsel %vm581, %v6173, 0
        %v6235 = vsel %vm581, %v6182, 0
        %v6238 = vsel %vm636, %v5919, 0
        %6240 = vmatpush.bf16.msra.mxu0 0
        %6241 = vmatpush.bf16.msra.mxu0 0
        %6242 = vmatpush.bf16.msra.mxu0 0
        %6243 = vmatpush.bf16.msra.mxu0 0
        %6244 = vmatpush.bf16.msra.mxu0 0
        %6245 = vmatpush.bf16.msra.mxu0 0
        %6246 = vmatpush.bf16.msra.mxu0 0
        %6247 = vmatpush.bf16.msra.mxu0 %v6238
        %6248 = vmatmul.bf16.gmra.mxu0 %v6184
        %v6249 = vpop.f32.mrf.mxu0
        %v6250 = vadd.f32 0.0, %v6249
        %v6251 = vpop.f32.mrf.mxu0
        %v6252 = vadd.f32 0.0, %v6251
        %6253 = vmatmul.bf16.gmra.mxu0 %v6187
        %v6254 = vpop.f32.mrf.mxu0
        %v6255 = vadd.f32 0.0, %v6254
        %v6256 = vpop.f32.mrf.mxu0
        %v6257 = vadd.f32 0.0, %v6256
        %6258 = vmatmul.bf16.gmra.mxu0 %v6190
        %v6259 = vpop.f32.mrf.mxu0
        %v6260 = vadd.f32 0.0, %v6259
        %v6261 = vpop.f32.mrf.mxu0
        %v6262 = vadd.f32 0.0, %v6261
        %6263 = vmatmul.bf16.gmra.mxu0 %v6193
        %v6264 = vpop.f32.mrf.mxu0
        %v6265 = vadd.f32 0.0, %v6264
        %v6266 = vpop.f32.mrf.mxu0
        %v6267 = vadd.f32 0.0, %v6266
        %6268 = vmatmul.bf16.gmra.mxu0 %v6196
        %v6269 = vpop.f32.mrf.mxu0
        %v6270 = vadd.f32 0.0, %v6269
        %v6271 = vpop.f32.mrf.mxu0
        %v6272 = vadd.f32 0.0, %v6271
        %6273 = vmatmul.bf16.gmra.mxu0 %v6199
        %v6274 = vpop.f32.mrf.mxu0
        %v6275 = vadd.f32 0.0, %v6274
        %v6276 = vpop.f32.mrf.mxu0
        %v6277 = vadd.f32 0.0, %v6276
        %6278 = vmatmul.bf16.gmra.mxu0 %v6202
        %v6279 = vpop.f32.mrf.mxu0
        %v6280 = vadd.f32 0.0, %v6279
        %v6281 = vpop.f32.mrf.mxu0
        %v6282 = vadd.f32 0.0, %v6281
        %6283 = vmatmul.bf16.gmra.mxu0 %v6205
        %v6284 = vpop.f32.mrf.mxu0
        %v6285 = vadd.f32 0.0, %v6284
        %v6286 = vpop.f32.mrf.mxu0
        %v6287 = vadd.f32 0.0, %v6286
        %6288 = vmatmul.bf16.gmra.mxu0 %v6208
        %v6289 = vpop.f32.mrf.mxu0
        %v6290 = vadd.f32 0.0, %v6289
        %v6291 = vpop.f32.mrf.mxu0
        %v6292 = vadd.f32 0.0, %v6291
        %6293 = vmatmul.bf16.gmra.mxu0 %v6211
        %v6294 = vpop.f32.mrf.mxu0
        %v6295 = vadd.f32 0.0, %v6294
        %v6296 = vpop.f32.mrf.mxu0
        %v6297 = vadd.f32 0.0, %v6296
        %6298 = vmatmul.bf16.gmra.mxu0 %v6214
        %v6299 = vpop.f32.mrf.mxu0
        %v6300 = vadd.f32 0.0, %v6299
        %v6301 = vpop.f32.mrf.mxu0
        %v6302 = vadd.f32 0.0, %v6301
        %6303 = vmatmul.bf16.gmra.mxu0 %v6217
        %v6304 = vpop.f32.mrf.mxu0
        %v6305 = vadd.f32 0.0, %v6304
        %v6306 = vpop.f32.mrf.mxu0
        %v6307 = vadd.f32 0.0, %v6306
        %6308 = vmatmul.bf16.gmra.mxu0 %v6220
        %v6309 = vpop.f32.mrf.mxu0
        %v6310 = vadd.f32 0.0, %v6309
        %v6311 = vpop.f32.mrf.mxu0
        %v6312 = vadd.f32 0.0, %v6311
        %6313 = vmatmul.bf16.gmra.mxu0 %v6223
        %v6314 = vpop.f32.mrf.mxu0
        %v6315 = vadd.f32 0.0, %v6314
        %v6316 = vpop.f32.mrf.mxu0
        %v6317 = vadd.f32 0.0, %v6316
        %6318 = vmatmul.bf16.gmra.mxu0 %v6226
        %v6319 = vpop.f32.mrf.mxu0
        %v6320 = vadd.f32 0.0, %v6319
        %v6321 = vpop.f32.mrf.mxu0
        %v6322 = vadd.f32 0.0, %v6321
        %6323 = vmatmul.bf16.gmra.mxu0 %v6229
        %v6324 = vpop.f32.mrf.mxu0
        %v6325 = vadd.f32 0.0, %v6324
        %v6326 = vpop.f32.mrf.mxu0
        %v6327 = vadd.f32 0.0, %v6326
        %6328 = vmatmul.bf16.gmra.mxu0 %v6232
        %v6329 = vpop.f32.mrf.mxu0
        %v6330 = vadd.f32 0.0, %v6329
        %v6331 = vpop.f32.mrf.mxu0
        %v6332 = vadd.f32 0.0, %v6331
        %6333 = vmatmul.bf16.gmra.mxu0 %v6235
        %v6334 = vpop.f32.mrf.mxu0
        %v6335 = vadd.f32 0.0, %v6334
        %v6336 = vpop.f32.mrf.mxu0
        %v6337 = vadd.f32 0.0, %v6336
        %6338 = vdwg.mxu0
        %v6339 = vadd.f32 %v5792, %v6250
        %v6340 = vadd.f32 %v5794, %v6252
        %v6341 = vadd.f32 %v5797, %v6255
        %v6342 = vadd.f32 %v5799, %v6257
        %v6343 = vadd.f32 %v5802, %v6260
        %v6344 = vadd.f32 %v5804, %v6262
        %v6345 = vadd.f32 %v5807, %v6265
        %v6346 = vadd.f32 %v5809, %v6267
        %v6347 = vadd.f32 %v5812, %v6270
        %v6348 = vadd.f32 %v5814, %v6272
        %v6349 = vadd.f32 %v5817, %v6275
        %v6350 = vadd.f32 %v5819, %v6277
        %v6351 = vadd.f32 %v5822, %v6280
        %v6352 = vadd.f32 %v5824, %v6282
        %v6353 = vadd.f32 %v5827, %v6285
        %v6354 = vadd.f32 %v5829, %v6287
        %v6355 = vadd.f32 %v5832, %v6290
        %v6356 = vadd.f32 %v5834, %v6292
        %v6357 = vadd.f32 %v5837, %v6295
        %v6358 = vadd.f32 %v5839, %v6297
        %v6359 = vadd.f32 %v5842, %v6300
        %v6360 = vadd.f32 %v5844, %v6302
        %v6361 = vadd.f32 %v5847, %v6305
        %v6362 = vadd.f32 %v5849, %v6307
        %v6363 = vadd.f32 %v5852, %v6310
        %v6364 = vadd.f32 %v5854, %v6312
        %v6365 = vadd.f32 %v5857, %v6315
        %v6366 = vadd.f32 %v5859, %v6317
        %v6367 = vadd.f32 %v5862, %v6320
        %v6368 = vadd.f32 %v5864, %v6322
        %v6369 = vadd.f32 %v5867, %v6325
        %v6370 = vadd.f32 %v5869, %v6327
        %v6371 = vadd.f32 %v5872, %v6330
        %v6372 = vadd.f32 %v5874, %v6332
        %v6373 = vadd.f32 %v5877, %v6335
        %v6374 = vadd.f32 %v5879, %v6337
        %v6375 = vld [vmem:[%s254 + $0x10] sm:$0x8]
        %s6376 = scalar_lea.vmem %s1, 30
        %v6377 = vld [vmem:[%s6376] sm:$0x3]
        %v6379 = vunpack.c.l.b16 %v6375
        %v6380 = vpack.c.b16 %v5958, %v6379
        %vm6381 = vcmask 1044480
        %v6382 = vrot.slane %v6380, 3
        %v6383 = vrot.slane %v5995, 3
        %v6384 = vsel %vm6381, %v6382, %v6383
        %v6385 = vrot.slane %v5996, 3
        %v6386 = vsel %vm6381, %v6383, %v6385
        %v6387 = vrot.slane %v5997, 3
        %v6388 = vsel %vm6381, %v6385, %v6387
        %v6389 = vrot.slane %v5998, 3
        %v6390 = vsel %vm6381, %v6387, %v6389
        %v6391 = vrot.slane %v5999, 3
        %v6392 = vsel %vm6381, %v6389, %v6391
        %v6393 = vrot.slane %v6000, 3
        %v6394 = vsel %vm6381, %v6391, %v6393
        %v6395 = vrot.slane %v6001, 3
        %v6396 = vsel %vm6381, %v6393, %v6395
        %v6397 = vrot.slane %v6002, 3
        %v6398 = vsel %vm6381, %v6395, %v6397
        %v6399 = vrot.slane %v6003, 3
        %v6400 = vsel %vm6381, %v6397, %v6399
        %v6401 = vrot.slane %v6004, 3
        %v6402 = vsel %vm6381, %v6399, %v6401
        %v6403 = vrot.slane %v6005, 3
        %v6404 = vsel %vm6381, %v6401, %v6403
        %v6405 = vrot.slane %v6006, 3
        %v6406 = vsel %vm6381, %v6403, %v6405
        %v6407 = vrot.slane %v6007, 3
        %v6408 = vsel %vm6381, %v6405, %v6407
        %v6409 = vrot.slane %v6008, 3
        %v6410 = vsel %vm6381, %v6407, %v6409
        %v6411 = vrot.slane %v6009, 3
        %v6412 = vsel %vm6381, %v6409, %v6411
        %v6413 = vrot.slane %v6010, 3
        %v6414 = vsel %vm6381, %v6411, %v6413
        %v6415 = vrot.slane %v6011, 3
        %v6416 = vsel %vm6381, %v6413, %v6415
        %v6417 = vrot.slane %v6012, 3
        %v6418 = vsel %vm6381, %v6415, %v6417
        %v6420 = vsel %vm581, %v6384, 0
        %v6423 = vsel %vm581, %v6386, 0
        %v6426 = vsel %vm581, %v6388, 0
        %v6429 = vsel %vm581, %v6390, 0
        %v6432 = vsel %vm581, %v6392, 0
        %v6435 = vsel %vm581, %v6394, 0
        %v6438 = vsel %vm581, %v6396, 0
        %v6441 = vsel %vm581, %v6398, 0
        %v6444 = vsel %vm581, %v6400, 0
        %v6447 = vsel %vm581, %v6402, 0
        %v6450 = vsel %vm581, %v6404, 0
        %v6453 = vsel %vm581, %v6406, 0
        %v6456 = vsel %vm581, %v6408, 0
        %v6459 = vsel %vm581, %v6410, 0
        %v6462 = vsel %vm581, %v6412, 0
        %v6465 = vsel %vm581, %v6414, 0
        %v6468 = vsel %vm581, %v6416, 0
        %v6471 = vsel %vm581, %v6418, 0
        %v6474 = vsel %vm636, %v6377, 0
        %6476 = vmatpush.bf16.msra.mxu0 0
        %6477 = vmatpush.bf16.msra.mxu0 0
        %6478 = vmatpush.bf16.msra.mxu0 0
        %6479 = vmatpush.bf16.msra.mxu0 0
        %6480 = vmatpush.bf16.msra.mxu0 0
        %6481 = vmatpush.bf16.msra.mxu0 0
        %6482 = vmatpush.bf16.msra.mxu0 0
        %6483 = vmatpush.bf16.msra.mxu0 %v6474
        %6484 = vmatmul.bf16.gmra.mxu0 %v6420
        %v6485 = vpop.f32.mrf.mxu0
        %v6486 = vadd.f32 0.0, %v6485
        %v6487 = vpop.f32.mrf.mxu0
        %v6488 = vadd.f32 0.0, %v6487
        %6489 = vmatmul.bf16.gmra.mxu0 %v6423
        %v6490 = vpop.f32.mrf.mxu0
        %v6491 = vadd.f32 0.0, %v6490
        %v6492 = vpop.f32.mrf.mxu0
        %v6493 = vadd.f32 0.0, %v6492
        %6494 = vmatmul.bf16.gmra.mxu0 %v6426
        %v6495 = vpop.f32.mrf.mxu0
        %v6496 = vadd.f32 0.0, %v6495
        %v6497 = vpop.f32.mrf.mxu0
        %v6498 = vadd.f32 0.0, %v6497
        %6499 = vmatmul.bf16.gmra.mxu0 %v6429
        %v6500 = vpop.f32.mrf.mxu0
        %v6501 = vadd.f32 0.0, %v6500
        %v6502 = vpop.f32.mrf.mxu0
        %v6503 = vadd.f32 0.0, %v6502
        %6504 = vmatmul.bf16.gmra.mxu0 %v6432
        %v6505 = vpop.f32.mrf.mxu0
        %v6506 = vadd.f32 0.0, %v6505
        %v6507 = vpop.f32.mrf.mxu0
        %v6508 = vadd.f32 0.0, %v6507
        %6509 = vmatmul.bf16.gmra.mxu0 %v6435
        %v6510 = vpop.f32.mrf.mxu0
        %v6511 = vadd.f32 0.0, %v6510
        %v6512 = vpop.f32.mrf.mxu0
        %v6513 = vadd.f32 0.0, %v6512
        %6514 = vmatmul.bf16.gmra.mxu0 %v6438
        %v6515 = vpop.f32.mrf.mxu0
        %v6516 = vadd.f32 0.0, %v6515
        %v6517 = vpop.f32.mrf.mxu0
        %v6518 = vadd.f32 0.0, %v6517
        %6519 = vmatmul.bf16.gmra.mxu0 %v6441
        %v6520 = vpop.f32.mrf.mxu0
        %v6521 = vadd.f32 0.0, %v6520
        %v6522 = vpop.f32.mrf.mxu0
        %v6523 = vadd.f32 0.0, %v6522
        %6524 = vmatmul.bf16.gmra.mxu0 %v6444
        %v6525 = vpop.f32.mrf.mxu0
        %v6526 = vadd.f32 0.0, %v6525
        %v6527 = vpop.f32.mrf.mxu0
        %v6528 = vadd.f32 0.0, %v6527
        %6529 = vmatmul.bf16.gmra.mxu0 %v6447
        %v6530 = vpop.f32.mrf.mxu0
        %v6531 = vadd.f32 0.0, %v6530
        %v6532 = vpop.f32.mrf.mxu0
        %v6533 = vadd.f32 0.0, %v6532
        %6534 = vmatmul.bf16.gmra.mxu0 %v6450
        %v6535 = vpop.f32.mrf.mxu0
        %v6536 = vadd.f32 0.0, %v6535
        %v6537 = vpop.f32.mrf.mxu0
        %v6538 = vadd.f32 0.0, %v6537
        %6539 = vmatmul.bf16.gmra.mxu0 %v6453
        %v6540 = vpop.f32.mrf.mxu0
        %v6541 = vadd.f32 0.0, %v6540
        %v6542 = vpop.f32.mrf.mxu0
        %v6543 = vadd.f32 0.0, %v6542
        %6544 = vmatmul.bf16.gmra.mxu0 %v6456
        %v6545 = vpop.f32.mrf.mxu0
        %v6546 = vadd.f32 0.0, %v6545
        %v6547 = vpop.f32.mrf.mxu0
        %v6548 = vadd.f32 0.0, %v6547
        %6549 = vmatmul.bf16.gmra.mxu0 %v6459
        %v6550 = vpop.f32.mrf.mxu0
        %v6551 = vadd.f32 0.0, %v6550
        %v6552 = vpop.f32.mrf.mxu0
        %v6553 = vadd.f32 0.0, %v6552
        %6554 = vmatmul.bf16.gmra.mxu0 %v6462
        %v6555 = vpop.f32.mrf.mxu0
        %v6556 = vadd.f32 0.0, %v6555
        %v6557 = vpop.f32.mrf.mxu0
        %v6558 = vadd.f32 0.0, %v6557
        %6559 = vmatmul.bf16.gmra.mxu0 %v6465
        %v6560 = vpop.f32.mrf.mxu0
        %v6561 = vadd.f32 0.0, %v6560
        %v6562 = vpop.f32.mrf.mxu0
        %v6563 = vadd.f32 0.0, %v6562
        %6564 = vmatmul.bf16.gmra.mxu0 %v6468
        %v6565 = vpop.f32.mrf.mxu0
        %v6566 = vadd.f32 0.0, %v6565
        %v6567 = vpop.f32.mrf.mxu0
        %v6568 = vadd.f32 0.0, %v6567
        %6569 = vmatmul.bf16.gmra.mxu0 %v6471
        %v6570 = vpop.f32.mrf.mxu0
        %v6571 = vadd.f32 0.0, %v6570
        %v6572 = vpop.f32.mrf.mxu0
        %v6573 = vadd.f32 0.0, %v6572
        %6574 = vdwg.mxu0
        %v6575 = vadd.f32 %v6339, %v6486
        %v6576 = vadd.f32 %v6340, %v6488
        %v6577 = vadd.f32 %v6341, %v6491
        %v6578 = vadd.f32 %v6342, %v6493
        %v6579 = vadd.f32 %v6343, %v6496
        %v6580 = vadd.f32 %v6344, %v6498
        %v6581 = vadd.f32 %v6345, %v6501
        %v6582 = vadd.f32 %v6346, %v6503
        %v6583 = vadd.f32 %v6347, %v6506
        %v6584 = vadd.f32 %v6348, %v6508
        %v6585 = vadd.f32 %v6349, %v6511
        %v6586 = vadd.f32 %v6350, %v6513
        %v6587 = vadd.f32 %v6351, %v6516
        %v6588 = vadd.f32 %v6352, %v6518
        %v6589 = vadd.f32 %v6353, %v6521
        %v6590 = vadd.f32 %v6354, %v6523
        %v6591 = vadd.f32 %v6355, %v6526
        %v6592 = vadd.f32 %v6356, %v6528
        %v6593 = vadd.f32 %v6357, %v6531
        %v6594 = vadd.f32 %v6358, %v6533
        %v6595 = vadd.f32 %v6359, %v6536
        %v6596 = vadd.f32 %v6360, %v6538
        %v6597 = vadd.f32 %v6361, %v6541
        %v6598 = vadd.f32 %v6362, %v6543
        %v6599 = vadd.f32 %v6363, %v6546
        %v6600 = vadd.f32 %v6364, %v6548
        %v6601 = vadd.f32 %v6365, %v6551
        %v6602 = vadd.f32 %v6366, %v6553
        %v6603 = vadd.f32 %v6367, %v6556
        %v6604 = vadd.f32 %v6368, %v6558
        %v6605 = vadd.f32 %v6369, %v6561
        %v6606 = vadd.f32 %v6370, %v6563
        %v6607 = vadd.f32 %v6371, %v6566
        %v6608 = vadd.f32 %v6372, %v6568
        %v6609 = vadd.f32 %v6373, %v6571
        %v6610 = vadd.f32 %v6374, %v6573
        %v6611 = vmul.f32 %v6575, %v1611
        %v6612 = vmul.f32 %v6576, %v1616
        %v6613 = vmul.f32 %v6577, %v1621
        %v6614 = vmul.f32 %v6578, %v1626
        %v6615 = vmul.f32 %v6579, %v1631
        %v6616 = vmul.f32 %v6580, %v1636
        %v6617 = vmul.f32 %v6581, %v1641
        %v6618 = vmul.f32 %v6582, %v1646
        %v6619 = vmul.f32 %v6583, %v1651
        %v6620 = vmul.f32 %v6584, %v1656
        %v6621 = vmul.f32 %v6585, %v1661
        %v6622 = vmul.f32 %v6586, %v1666
        %v6623 = vmul.f32 %v6587, %v1671
        %v6624 = vmul.f32 %v6588, %v1676
        %v6625 = vmul.f32 %v6589, %v1681
        %v6626 = vmul.f32 %v6590, %v1686
        %v6627 = vmul.f32 %v6591, %v1691
        %v6628 = vmul.f32 %v6592, %v1696
        %v6629 = vmul.f32 %v6593, %v1701
        %v6630 = vmul.f32 %v6594, %v1706
        %v6631 = vmul.f32 %v6595, %v1711
        %v6632 = vmul.f32 %v6596, %v1716
        %v6633 = vmul.f32 %v6597, %v1721
        %v6634 = vmul.f32 %v6598, %v1726
        %v6635 = vmul.f32 %v6599, %v1731
        %v6636 = vmul.f32 %v6600, %v1736
        %v6637 = vmul.f32 %v6601, %v1741
        %v6638 = vmul.f32 %v6602, %v1746
        %v6639 = vmul.f32 %v6603, %v1751
        %v6640 = vmul.f32 %v6604, %v1756
        %v6641 = vmul.f32 %v6605, %v1761
        %v6642 = vmul.f32 %v6606, %v1766
        %v6643 = vmul.f32 %v6607, %v1771
        %v6644 = vmul.f32 %v6608, %v1776
        %v6645 = vmul.f32 %v6609, %v1781
        %v6646 = vmul.f32 %v6610, %v1786
        %v6647 = vpack.c.bf16 %v6611, %v6611
        %v6648 = vpack.c.bf16 %v6612, %v6612
        %v6649 = vpack.c.bf16 %v6613, %v6613
        %v6650 = vpack.c.bf16 %v6614, %v6614
        %v6651 = vpack.c.bf16 %v6615, %v6615
        %v6652 = vpack.c.bf16 %v6616, %v6616
        %v6653 = vpack.c.bf16 %v6617, %v6617
        %v6654 = vpack.c.bf16 %v6618, %v6618
        %v6655 = vpack.c.bf16 %v6619, %v6619
        %v6656 = vpack.c.bf16 %v6620, %v6620
        %v6657 = vpack.c.bf16 %v6621, %v6621
        %v6658 = vpack.c.bf16 %v6622, %v6622
        %v6659 = vpack.c.bf16 %v6623, %v6623
        %v6660 = vpack.c.bf16 %v6624, %v6624
        %v6661 = vpack.c.bf16 %v6625, %v6625
        %v6662 = vpack.c.bf16 %v6626, %v6626
        %v6663 = vpack.c.bf16 %v6627, %v6627
        %v6664 = vpack.c.bf16 %v6628, %v6628
        %v6665 = vpack.c.bf16 %v6629, %v6629
        %v6666 = vpack.c.bf16 %v6630, %v6630
        %v6667 = vpack.c.bf16 %v6631, %v6631
        %v6668 = vpack.c.bf16 %v6632, %v6632
        %v6669 = vpack.c.bf16 %v6633, %v6633
        %v6670 = vpack.c.bf16 %v6634, %v6634
        %v6671 = vpack.c.bf16 %v6635, %v6635
        %v6672 = vpack.c.bf16 %v6636, %v6636
        %v6673 = vpack.c.bf16 %v6637, %v6637
        %v6674 = vpack.c.bf16 %v6638, %v6638
        %v6675 = vpack.c.bf16 %v6639, %v6639
        %v6676 = vpack.c.bf16 %v6640, %v6640
        %v6677 = vpack.c.bf16 %v6641, %v6641
        %v6678 = vpack.c.bf16 %v6642, %v6642
        %v6679 = vpack.c.bf16 %v6643, %v6643
        %v6680 = vpack.c.bf16 %v6644, %v6644
        %v6681 = vpack.c.bf16 %v6645, %v6645
        %v6682 = vpack.c.bf16 %v6646, %v6646
        %s6683 = scalar_lea.vmem %s237, 432 [#allocation2]
        %6684 = vst [vmem:[%s6683] sm:$0xf] %v6647
        %6685 = vst [vmem:[%s6683 + $0x4] sm:$0xf] %v6648
        %6686 = vst [vmem:[%s6683 + $0x8] sm:$0xf] %v6649
        %6687 = vst [vmem:[%s6683 + $0xc] sm:$0xf] %v6650
        %6688 = vst [vmem:[%s6683 + $0x10] sm:$0xf] %v6651
        %6689 = vst [vmem:[%s6683 + $0x14] sm:$0xf] %v6652
        %6690 = vst [vmem:[%s6683 + $0x18] sm:$0xf] %v6653
        %6691 = vst [vmem:[%s6683 + $0x1c] sm:$0xf] %v6654
        %6692 = vst [vmem:[%s6683 + $0x20] sm:$0xf] %v6655
        %6693 = vst [vmem:[%s6683 + $0x24] sm:$0xf] %v6656
        %6694 = vst [vmem:[%s6683 + $0x28] sm:$0xf] %v6657
        %6695 = vst [vmem:[%s6683 + $0x2c] sm:$0xf] %v6658
        %6696 = vst [vmem:[%s6683 + $0x30] sm:$0xf] %v6659
        %6697 = vst [vmem:[%s6683 + $0x34] sm:$0xf] %v6660
        %6698 = vst [vmem:[%s6683 + $0x38] sm:$0xf] %v6661
        %6699 = vst [vmem:[%s6683 + $0x3c] sm:$0xf] %v6662
        %6700 = vst [vmem:[%s6683 + $0x40] sm:$0xf] %v6663
        %6701 = vst [vmem:[%s6683 + $0x44] sm:$0xf] %v6664
        %6702 = vst [vmem:[%s6683 + $0x48] sm:$0xf] %v6665
        %6703 = vst [vmem:[%s6683 + $0x4c] sm:$0xf] %v6666
        %6704 = vst [vmem:[%s6683 + $0x50] sm:$0xf] %v6667
        %6705 = vst [vmem:[%s6683 + $0x54] sm:$0xf] %v6668
        %6706 = vst [vmem:[%s6683 + $0x58] sm:$0xf] %v6669
        %6707 = vst [vmem:[%s6683 + $0x5c] sm:$0xf] %v6670
        %6708 = vst [vmem:[%s6683 + $0x60] sm:$0xf] %v6671
        %6709 = vst [vmem:[%s6683 + $0x64] sm:$0xf] %v6672
        %6710 = vst [vmem:[%s6683 + $0x68] sm:$0xf] %v6673
        %6711 = vst [vmem:[%s6683 + $0x6c] sm:$0xf] %v6674
        %6712 = vst [vmem:[%s6683 + $0x70] sm:$0xf] %v6675
        %6713 = vst [vmem:[%s6683 + $0x74] sm:$0xf] %v6676
        %6714 = vst [vmem:[%s6683 + $0x78] sm:$0xf] %v6677
        %6715 = vst [vmem:[%s6683 + $0x7c] sm:$0xf] %v6678
        %6716 = vst [vmem:[%s6683 + $0x80] sm:$0xf] %v6679
        %6717 = vst [vmem:[%s6683 + $0x84] sm:$0xf] %v6680
        %6718 = vst [vmem:[%s6683 + $0x88] sm:$0xf] %v6681
        %6719 = vst [vmem:[%s6683 + $0x8c] sm:$0xf] %v6682
        %v6720 = vadd.f32 %v6611, %v6612
        %v6721 = vadd.f32 %v6720, %v6613
        %v6722 = vadd.f32 %v6721, %v6614
        %v6723 = vadd.f32 %v6722, %v6615
        %v6724 = vadd.f32 %v6723, %v6616
        %v6725 = vadd.f32 %v6724, %v6617
        %v6726 = vadd.f32 %v6725, %v6618
        %v6727 = vadd.f32 %v6726, %v6619
        %v6728 = vadd.f32 %v6727, %v6620
        %v6729 = vadd.f32 %v6728, %v6621
        %v6730 = vadd.f32 %v6729, %v6622
        %v6731 = vadd.f32 %v6730, %v6623
        %v6732 = vadd.f32 %v6731, %v6624
        %v6733 = vadd.f32 %v6732, %v6625
        %v6734 = vadd.f32 %v6733, %v6626
        %v6735 = vadd.f32 %v6734, %v6627
        %v6736 = vadd.f32 %v6735, %v6628
        %v6737 = vadd.f32 %v6736, %v6629
        %v6738 = vadd.f32 %v6737, %v6630
        %v6739 = vadd.f32 %v6738, %v6631
        %v6740 = vadd.f32 %v6739, %v6632
        %v6741 = vadd.f32 %v6740, %v6633
        %v6742 = vadd.f32 %v6741, %v6634
        %v6743 = vadd.f32 %v6742, %v6635
        %v6744 = vadd.f32 %v6743, %v6636
        %v6745 = vadd.f32 %v6744, %v6637
        %v6746 = vadd.f32 %v6745, %v6638
        %v6747 = vadd.f32 %v6746, %v6639
        %v6748 = vadd.f32 %v6747, %v6640
        %v6749 = vadd.f32 %v6748, %v6641
        %v6750 = vadd.f32 %v6749, %v6642
        %v6751 = vadd.f32 %v6750, %v6643
        %v6752 = vadd.f32 %v6751, %v6644
        %v6753 = vadd.f32 %v6752, %v6645
        %v6754 = vadd.f32 %v6753, %v6646
        %v6755 = vrot.slane %v6754, 4
        %v6756 = vadd.f32 %v6754, %v6755
        %v6757 = vrot.slane %v6756, 2
        %v6758 = vadd.f32 %v6756, %v6757
        %v6759 = vrot.slane %v6758, 1
        %v6760 = vadd.f32 %v6758, %v6759
        %v6761 = vmul.f32 %v6611, %v6611
        %v6762 = vmul.f32 %v6612, %v6612
        %v6763 = vmul.f32 %v6613, %v6613
        %v6764 = vmul.f32 %v6614, %v6614
        %v6765 = vmul.f32 %v6615, %v6615
        %v6766 = vmul.f32 %v6616, %v6616
        %v6767 = vmul.f32 %v6617, %v6617
        %v6768 = vmul.f32 %v6618, %v6618
        %v6769 = vmul.f32 %v6619, %v6619
        %v6770 = vmul.f32 %v6620, %v6620
        %v6771 = vmul.f32 %v6621, %v6621
        %v6772 = vmul.f32 %v6622, %v6622
        %v6773 = vmul.f32 %v6623, %v6623
        %v6774 = vmul.f32 %v6624, %v6624
        %v6775 = vmul.f32 %v6625, %v6625
        %v6776 = vmul.f32 %v6626, %v6626
        %v6777 = vmul.f32 %v6627, %v6627
        %v6778 = vmul.f32 %v6628, %v6628
        %v6779 = vmul.f32 %v6629, %v6629
        %v6780 = vmul.f32 %v6630, %v6630
        %v6781 = vmul.f32 %v6631, %v6631
        %v6782 = vmul.f32 %v6632, %v6632
        %v6783 = vmul.f32 %v6633, %v6633
        %v6784 = vmul.f32 %v6634, %v6634
        %v6785 = vmul.f32 %v6635, %v6635
        %v6786 = vmul.f32 %v6636, %v6636
        %v6787 = vmul.f32 %v6637, %v6637
        %v6788 = vmul.f32 %v6638, %v6638
        %v6789 = vmul.f32 %v6639, %v6639
        %v6790 = vmul.f32 %v6640, %v6640
        %v6791 = vmul.f32 %v6641, %v6641
        %v6792 = vmul.f32 %v6642, %v6642
        %v6793 = vmul.f32 %v6643, %v6643
        %v6794 = vmul.f32 %v6644, %v6644
        %v6795 = vmul.f32 %v6645, %v6645
        %v6796 = vmul.f32 %v6646, %v6646
        %v6797 = vadd.f32 %v6761, %v6762
        %v6798 = vadd.f32 %v6797, %v6763
        %v6799 = vadd.f32 %v6798, %v6764
        %v6800 = vadd.f32 %v6799, %v6765
        %v6801 = vadd.f32 %v6800, %v6766
        %v6802 = vadd.f32 %v6801, %v6767
        %v6803 = vadd.f32 %v6802, %v6768
        %v6804 = vadd.f32 %v6803, %v6769
        %v6805 = vadd.f32 %v6804, %v6770
        %v6806 = vadd.f32 %v6805, %v6771
        %v6807 = vadd.f32 %v6806, %v6772
        %v6808 = vadd.f32 %v6807, %v6773
        %v6809 = vadd.f32 %v6808, %v6774
        %v6810 = vadd.f32 %v6809, %v6775
        %v6811 = vadd.f32 %v6810, %v6776
        %v6812 = vadd.f32 %v6811, %v6777
        %v6813 = vadd.f32 %v6812, %v6778
        %v6814 = vadd.f32 %v6813, %v6779
        %v6815 = vadd.f32 %v6814, %v6780
        %v6816 = vadd.f32 %v6815, %v6781
        %v6817 = vadd.f32 %v6816, %v6782
        %v6818 = vadd.f32 %v6817, %v6783
        %v6819 = vadd.f32 %v6818, %v6784
        %v6820 = vadd.f32 %v6819, %v6785
        %v6821 = vadd.f32 %v6820, %v6786
        %v6822 = vadd.f32 %v6821, %v6787
        %v6823 = vadd.f32 %v6822, %v6788
        %v6824 = vadd.f32 %v6823, %v6789
        %v6825 = vadd.f32 %v6824, %v6790
        %v6826 = vadd.f32 %v6825, %v6791
        %v6827 = vadd.f32 %v6826, %v6792
        %v6828 = vadd.f32 %v6827, %v6793
        %v6829 = vadd.f32 %v6828, %v6794
        %v6830 = vadd.f32 %v6829, %v6795
        %v6831 = vadd.f32 %v6830, %v6796
        %v6832 = vrot.slane %v6831, 4
        %v6833 = vadd.f32 %v6831, %v6832
        %v6834 = vrot.slane %v6833, 2
        %v6835 = vadd.f32 %v6833, %v6834
        %v6836 = vrot.slane %v6835, 1
        %v6837 = vadd.f32 %v6835, %v6836
        %v6838 = vadd.f32 %v5222, %v6760
        %v6839 = vadd.f32 %v5223, %v6837
        %6840 = vst [vmem:[%s243] sm:$0x1] %v6838
        %6841 = vst [vmem:[%s249] sm:$0x1] %v6839
        %s6842 = sand.u32 %s104, 1
        %s6843 = scalar_lea.sflag [#allocation3], %s6842
        %s6844 = sand.u32 %s104, 1
        %s6845 = smul.addr %s6844, 576
        %s6846 = scalar_lea.vmem [#allocation2], %s6845
        %s6847 = sand.u32 %s23, 1
        %s6848 = scalar_lea.sflag [#allocation5], %s6847
        %s6849 = sand.u32 %s130, 1
        %s6850 = scalar_lea.vmem [#allocation4], %s6849
        %s6851 = sand.u32 %s23, 1
        %s6852 = scalar_lea.sflag [#allocation5], %s6851
        %s6853 = sand.u32 %s156, 1
        %s6854 = scalar_lea.vmem [#allocation6], %s6853
        // Predicated region
        $region33: #{tpu_custom_call.1} parent=31 // pred_check
          %p6855 = pneg %p114
        $region34: #{tpu_custom_call.1} parent=31 // pred_check_branch
          %6857 = sbr.rel (%p6855) target = $region36
        $region35: #{tpu_custom_call.1} parent=31 // pred_region
          #allocation8 [shape = 'u32[6]{0}', space=smem, size = 0x18, scoped, tag = 'DMA stride descriptor']
          %s6858 = smul.u32 36, %s23
          %6860 = vsyncadd %s6843, 0
          %s6861 = smul.addr %s6858, 4
          %s6862 = scalar_lea.hbm %s3, %s6861
          %s6864 = sshll.u32 1, 14
          %s6865 = sxor.u32 4294967295, %s6864
          %s6868 = sshll.u32 7, 18
          %s6869 = sxor.u32 4294967295, %s6868
          %s6870 = sand.u32 0, %s6869
          %s6872 = sor.u32 %s6870, 0
          %s6873 = sshll.u32 %s6846, 4
          %s6874 = int_to_ptr.vmem [resolvable:$true] %s6873
          %s6875 = sshll.u32 %s6862, 4
          %s6876 = int_to_ptr.hbm [resolvable:$true] %s6875
          %6882 = sst [smem:[#allocation8]] 2304
          %s6883 = scalar_lea.smem [#allocation8], 1
          %6884 = sst [smem:[%s6883]] 4608
          %s6885 = scalar_lea.smem [#allocation8], 2
          %6886 = sst [smem:[%s6885]] 36
          %s6887 = scalar_lea.smem [#allocation8], 3
          %6888 = sst [smem:[%s6887]] 64
          %s6889 = scalar_lea.smem [#allocation8], 4
          %6890 = sst [smem:[%s6889]] 64
          %s6891 = scalar_lea.smem [#allocation8], 5
          %6892 = sst [smem:[%s6891]] 4
          %6894 = dma.general %s6874, 9216, %s6876, %s6843, [#allocation7], [#allocation8], %s6872, 0
        $region36: #{tpu_custom_call.1} parent=31 // pred_fallthru
          _
        // Predicated region
        $region37: #{tpu_custom_call.1} parent=31 // pred_check
          %p6895 = pneg %p140
        $region38: #{tpu_custom_call.1} parent=31 // pred_check_branch
          %6897 = sbr.rel (%p6895) target = $region40
        $region39: #{tpu_custom_call.1} parent=31 // pred_region
          %6899 = vsyncadd %s6848, 0
          %s6900 = scalar_lea.hbm %s4, %s23
          %s6902 = sshll.u32 %s6850, 4
          %s6903 = int_to_ptr.vmem [resolvable:$true] %s6902
          %s6904 = sshll.u32 %s6900, 4
          %s6905 = int_to_ptr.hbm [resolvable:$true] %s6904
          %6907 = dma.vmem_to_hbm [thread:$0]  %s6903, 16, %s6905, %s6848
        $region40: #{tpu_custom_call.1} parent=31 // pred_fallthru
          _
        // Predicated region
        $region41: #{tpu_custom_call.1} parent=31 // pred_check
          %p6908 = pneg %p166
        $region42: #{tpu_custom_call.1} parent=31 // pred_check_branch
          %6910 = sbr.rel (%p6908) target = $region44
        $region43: #{tpu_custom_call.1} parent=31 // pred_region
          %6912 = vsyncadd %s6852, 0
          %s6913 = scalar_lea.hbm %s5, %s23
          %s6915 = sshll.u32 %s6854, 4
          %s6916 = int_to_ptr.vmem [resolvable:$true] %s6915
          %s6917 = sshll.u32 %s6913, 4
          %s6918 = int_to_ptr.hbm [resolvable:$true] %s6917
          %6920 = dma.vmem_to_hbm [thread:$0]  %s6916, 16, %s6918, %s6852
        $region44: #{tpu_custom_call.1} parent=31 // pred_fallthru
          _
      $region32: #{tpu_custom_call.1} parent=5 // pred_fallthru
        _
      %p6921 = scmp.le.s32.totalorder 2, %s18
      // Predicated region
      $region45: #{tpu_custom_call.1} parent=5 // pred_check
        %p6922 = pneg %p6921
      $region46: #{tpu_custom_call.1} parent=5 // pred_check_branch
        %6924 = sbr.rel (%p6922) target = $region48
      $region47: #{tpu_custom_call.1} parent=5 // pred_region
        %s6925 = ssub.s32 %s18, 2
        // Predicated region
        $region49: #{tpu_custom_call.1} parent=47 // pred_check
          %p6926 = pneg %p120
        $region50: #{tpu_custom_call.1} parent=47 // pred_check_branch
          %6928 = sbr.rel (%p6926) target = $region52
        $region51: #{tpu_custom_call.1} parent=47 // pred_region
          %s6929 = sand.u32 %s105, 1
          %s6930 = scalar_lea.sflag [#allocation3], %s6929
          %s6931 = sand.u32 %s105, 1
          %s6932 = smul.addr %s6931, 576
          %s6933 = scalar_lea.vmem [#allocation2], %s6932
          %6935 = dma.done %s6930, 9216
        $region52: #{tpu_custom_call.1} parent=47 // pred_fallthru
          _
        // Predicated region
        $region53: #{tpu_custom_call.1} parent=47 // pred_check
          %p6936 = pneg %p146
        $region54: #{tpu_custom_call.1} parent=47 // pred_check_branch
          %6938 = sbr.rel (%p6936) target = $region56
        $region55: #{tpu_custom_call.1} parent=47 // pred_region
          %s6939 = sand.u32 %s24, 1
          %s6940 = scalar_lea.sflag [#allocation5], %s6939
          %s6941 = sand.u32 %s131, 1
          %s6942 = scalar_lea.vmem [#allocation4], %s6941
          %6944 = dma.done %s6940, 16
        $region56: #{tpu_custom_call.1} parent=47 // pred_fallthru
          _
        // Predicated region
        $region57: #{tpu_custom_call.1} parent=47 // pred_check
          %p6945 = pneg %p172
        $region58: #{tpu_custom_call.1} parent=47 // pred_check_branch
          %6947 = sbr.rel (%p6945) target = $region60
        $region59: #{tpu_custom_call.1} parent=47 // pred_region
          %s6948 = sand.u32 %s24, 1
          %s6949 = scalar_lea.sflag [#allocation5], %s6948
          %s6950 = sand.u32 %s157, 1
          %s6951 = scalar_lea.vmem [#allocation6], %s6950
          %6953 = dma.done %s6949, 16
        $region60: #{tpu_custom_call.1} parent=47 // pred_fallthru
          _
      $region48: #{tpu_custom_call.1} parent=5 // pred_fallthru
        _
    $region6: #{tpu_custom_call.1} parent=1 // loop_footer
      %s22 = sadd.s32 1, %s18
    $region7: #{tpu_custom_call.1} parent=1 // loop_footer_branch
      %17 = sbr.rel target = $region3
    $region8: #{tpu_custom_call.1} parent=1 // loop_exit
      _
    %6954 = vsyncpa [#allocation3], 1
    %s6955 = scalar_lea.sflag [#allocation3], 1
    %6956 = vsyncpa %s6955, 1
    %6957 = vsyncpa [#allocation5], 1
    %s6958 = scalar_lea.sflag [#allocation5], 1
    %6959 = vsyncpa %s6958, 1

</llo_original>
